<compile_context>
chip_gen: v6e
topology: v6e:2x2x1
jax: 0.10.0
libtpu: 0.0.40
codegen_flags: <defaults>
</compile_context>

<pallas_src>
import numpy as np
import jax
import jax.numpy as jnp
from jax.experimental import pallas as pl
from jax.experimental.pallas import tpu as pltpu

N = 2                       # batch
C_OUT = 6                   # conv output channels
K = 3                       # conv kernel size
H = W = 28                  # input spatial size (implied by Linear(6*13*13, 10))
HC = WC = H - K + 1         # 26  (conv output)
HP = WP = HC // 2           # 13  (after 2x2 maxpool)
FEAT = C_OUT * HP * WP      # 1014
N_CLASSES = 10

RB_IN = 32                  # padded row-block per sample in the conv scratch
RB_OUT = 16                 # padded row-block per sample after row pooling
CONV_ROWS = N * RB_IN       # 64
CONV_COLS = C_OUT * WC      # 156  (channels along lanes)
POOL_ROWS = N * RB_OUT      # 32
POOL_COLS = C_OUT * WP      # 78


# ----------------------- constant 0/1 selection matrices -----------------------
def _selection_constants():
    # Row-pool selectors (LEFT matmul): (POOL_ROWS, CONV_ROWS).
    # Output row p = n*RB_OUT + ip picks conv row n*RB_IN + 2*ip (+1).
    p = np.arange(POOL_ROWS)
    q = np.arange(CONV_ROWS)
    n_p, ip = p // RB_OUT, p % RB_OUT
    valid = ip < HP
    tgt = n_p * RB_IN + 2 * ip
    l0 = ((q[None, :] == tgt[:, None]) & valid[:, None]).astype(np.float32)
    l1 = ((q[None, :] == (tgt + 1)[:, None]) & valid[:, None]).astype(np.float32)

    # Col-pool selectors (RIGHT matmul): (CONV_COLS, POOL_COLS), block-diagonal
    # per channel.  Output col c*WP + jp picks conv col c*WC + 2*jp (+1).
    r = np.arange(CONV_COLS)
    c = np.arange(POOL_COLS)
    c_r, j = r // WC, r % WC
    c_c, jp = c // WP, c % WP
    same_c = c_r[:, None] == c_c[None, :]
    pc0 = (same_c & (j[:, None] == 2 * jp[None, :])).astype(np.float32)
    pc1 = (same_c & (j[:, None] == 2 * jp[None, :] + 1)).astype(np.float32)

    # Pack each selector pair along a leading axis: ONE input DMA per pair
    # instead of two; the kernel slices them with free leading-axis indexing.
    return jnp.asarray(np.stack([l0, l1])), jnp.asarray(np.stack([pc0, pc1]))


_LSEL, _PCSEL = _selection_constants()     # (2,32,64) and (2,156,78)


# --------------------------------- kernel --------------------------------------
def cnn_kernel(x_ref, cwb_ref, lsel_ref, pcsel_ref, wt_ref, lb_ref,
               out_ref, conv_scr, feat_scr):
    # x_ref    : (N, 1, 28, 28) VMEM
    # cwb_ref  : (60,)  SMEM  [conv weights (c,ki,kj) order | conv bias]
    # lsel_ref : (2, 32, 64)   VMEM  row-pool selectors (stacked)
    # pcsel_ref: (2, 156, 78)  VMEM  col-pool selectors (stacked, block-diag)
    # wt_ref   : (1014, 10)    VMEM  permuted+transposed linear weight
    # lb_ref   : (1, 10)       VMEM  linear bias
    # conv_scr : (64, 156)     VMEM  relu(conv), row = n*32 + i, col = c*26 + j
    # feat_scr : (N, 1014)     VMEM  flattened features, f = ip*78 + c*13 + jp

    # Only the sublane pad rows (i = 26..31 of each sample block) need zeroing:
    # they are multiplied by the 0-coefficients of the selection matmuls
    # (0 * garbage could be NaN).  All other rows are overwritten below.
    for n in range(N):
        conv_scr[pl.ds(n * RB_IN + HC, RB_IN - HC), :] = jnp.zeros(
            (RB_IN - HC, CONV_COLS), jnp.float32)

    x = x_ref[...]                                     # (N, 1, 28, 28)

    # ---- conv + relu: 9 hoisted window slices, all channels per tap ----------
    accs = [None] * C_OUT
    for t in range(K * K):
        ki, kj = divmod(t, K)
        win = x[:, 0, ki:ki + HC, kj:kj + WC]          # (N, 26, 26), hoisted
        for c in range(C_OUT):
            contrib = win * cwb_ref[c * K * K + t]
            accs[c] = contrib if accs[c] is None else accs[c] + contrib
    for c in range(C_OUT):
        bias_c = cwb_ref[C_OUT * K * K + c]
        r_c = jnp.maximum(accs[c] + bias_c, 0.0)        # (N, 26, 26)
        for n in range(N):
            conv_scr[pl.ds(n * RB_IN, HC), pl.ds(c * WC, WC)] = r_c[n]

    # ---- 2x2 maxpool: 2 row-select + 2 col-select matmuls, batched over (n,c)
    a = conv_scr[...]                                   # (64, 156)
    rp = jnp.maximum(
        jnp.dot(lsel_ref[0], a, preferred_element_type=jnp.float32),
        jnp.dot(lsel_ref[1], a, preferred_element_type=jnp.float32))      # (32, 156)
    p2 = jnp.maximum(
        jnp.dot(rp, pcsel_ref[0], preferred_element_type=jnp.float32),
        jnp.dot(rp, pcsel_ref[1], preferred_element_type=jnp.float32))    # (32, 78)
    # p2[n*16 + ip, c*13 + jp] = pooled[n, c, ip, jp]   (rows ip>=13 are zero pad)

    # ---- flatten into a lane-dense (N, 1014) VMEM scratch ---------------------
    for n in range(N):
        for ip in range(HP):
            feat_scr[pl.ds(n, 1), pl.ds(ip * POOL_COLS, POOL_COLS)] = (
                p2[n * RB_OUT + ip:n * RB_OUT + ip + 1, :])

    # ---- classifier: single (N,1014)@(1014,10) matmul + bias ------------------
    out_ref[...] = (jnp.dot(feat_scr[...], wt_ref[...],
                            preferred_element_type=jnp.float32) + lb_ref[...])


# ------------------------------- pallas_call ------------------------------------
def _vmem():
    return pl.BlockSpec(memory_space=pltpu.MemorySpace.VMEM)


def _smem():
    return pl.BlockSpec(memory_space=pltpu.MemorySpace.SMEM)


_cnn_call = pl.pallas_call(
    cnn_kernel,
    out_shape=jax.ShapeDtypeStruct((N, N_CLASSES), jnp.float32),
    in_specs=[_vmem(), _smem(), _vmem(), _vmem(), _vmem(), _vmem()],
    out_specs=_vmem(),
    scratch_shapes=[pltpu.VMEM((CONV_ROWS, CONV_COLS), jnp.float32),
                    pltpu.VMEM((N, FEAT), jnp.float32)],
)
# TODO(synk): if the batch grows, add a grid over N with
# dimension_semantics=("parallel",) so v7x's two TensorCores split the batch;
# at N=2 the per-grid-step overhead outweighs the gain.


# --------------------------------- wrappers -------------------------------------
def prepare_params(conv_w, conv_b, lin_w, lin_b):
    """One-time parameter repacking (call once at setup, OUTSIDE the jit)."""
    # Conv weight (c, ki, kj order) and conv bias packed into one SMEM vector.
    cwb = jnp.concatenate([conv_w.reshape(-1), conv_b])          # (60,)
    # Kernel flatten order is f = ip*78 + c*13 + jp; permute PyTorch's
    # (o, c, ip, jp) weight to match and pre-transpose to (1014, 10).
    wt = (lin_w.reshape(N_CLASSES, C_OUT, HP, WP)
               .transpose(2, 1, 3, 0)
               .reshape(FEAT, N_CLASSES))
    return cwb, wt, lin_b.reshape(1, N_CLASSES)


@jax.jit
def cnn_forward(x, cwb, wt, lin_b2):
    return _cnn_call(x, cwb, _LSEL, _PCSEL, wt, lin_b2)


# ----------------------------- plain-JAX reference -------------------------------
def ref_forward(x, conv_w, conv_b, lin_w, lin_b):
    acc = jnp.zeros((N, C_OUT, HC, WC), jnp.float32)
    for ki in range(K):
        for kj in range(K):
            win = x[:, 0, ki:ki + HC, kj:kj + WC]       # (N, 26, 26)
            wv = conv_w[:, 0, ki, kj]                   # (6,)
            acc = acc + win[:, None, :, :] * wv[None, :, None, None]
    acc = acc + conv_b[None, :, None, None]
    r = jnp.maximum(acc, 0.0)
    pooled = r.reshape(N, C_OUT, HP, 2, WP, 2).max(axis=(3, 5))
    feats = pooled.reshape(N, FEAT)                     # PyTorch (c,h,w) flatten
    return feats @ lin_w.T + lin_b


if __name__ == "__main__":
    key = jax.random.PRNGKey(0)
    k_x, k_cw, k_cb, k_lw, k_lb = jax.random.split(key, 5)

    x = jax.random.normal(k_x, (N, 1, H, W), dtype=jnp.float32)
    conv_w = 0.1 * jax.random.normal(k_cw, (C_OUT, 1, K, K), dtype=jnp.float32)
    conv_b = 0.1 * jax.random.normal(k_cb, (C_OUT,), dtype=jnp.float32)
    lin_w = 0.05 * jax.random.normal(k_lw, (N_CLASSES, FEAT), dtype=jnp.float32)
    lin_b = 0.05 * jax.random.normal(k_lb, (N_CLASSES,), dtype=jnp.float32)

    # one-time setup (outside jit): pack conv params, permute/transpose lin_w
    cwb, wt, lb2 = prepare_params(conv_w, conv_b, lin_w, lin_b)

    logits = cnn_forward(x, cwb, wt, lb2)
    logits = jax.block_until_ready(logits)

    expected = ref_forward(x, conv_w, conv_b, lin_w, lin_b)
    assert logits.shape == (N, N_CLASSES), logits.shape
    assert jnp.allclose(logits, expected, rtol=1e-4, atol=1e-4), (
        "mismatch vs reference")
    print("KERNEL_OK")
</pallas_src>

<mosaic_0001>
module attributes {stable_mosaic.version = 11 : i64} {
  func.func @cnn_kernel(%arg0: memref<2x1x28x28xf32, #tpu.memory_space<vmem>>, %arg1: memref<60xf32, #tpu.memory_space<smem>>, %arg2: memref<2x32x64xf32, #tpu.memory_space<vmem>>, %arg3: memref<2x156x78xf32, #tpu.memory_space<vmem>>, %arg4: memref<1014x10xf32, #tpu.memory_space<vmem>>, %arg5: memref<1x10xf32, #tpu.memory_space<vmem>>, %arg6: memref<2x10xf32, #tpu.memory_space<vmem>>, %arg7: memref<64x156xf32, #tpu.memory_space<vmem>>, %arg8: memref<2x1014xf32, #tpu.memory_space<vmem>>) attributes {dimension_semantics = [], scalar_prefetch = 0 : i64, scratch_operands = 2 : i64, tpu.core_type = #tpu.core_type<tc>} {
    %cst = arith.constant 0.000000e+00 : f32
    %0 = vector.broadcast %cst : f32 to vector<6x156xf32>
    %c26 = arith.constant 26 : index
    %c0 = arith.constant 0 : index
    %1 = vector.load %arg7[%c26, %c0] : memref<64x156xf32, #tpu.memory_space<vmem>>, vector<6x156xf32>
    tpu.vector_store %arg7[%c26, %c0], %0 {strides = array<i32>} : memref<64x156xf32, #tpu.memory_space<vmem>>, vector<6x156xf32>,
    %cst_0 = arith.constant 0.000000e+00 : f32
    %2 = vector.broadcast %cst_0 : f32 to vector<6x156xf32>
    %c58 = arith.constant 58 : index
    %c0_1 = arith.constant 0 : index
    %3 = vector.load %arg7[%c58, %c0_1] : memref<64x156xf32, #tpu.memory_space<vmem>>, vector<6x156xf32>
    tpu.vector_store %arg7[%c58, %c0_1], %2 {strides = array<i32>} : memref<64x156xf32, #tpu.memory_space<vmem>>, vector<6x156xf32>,
    %c0_2 = arith.constant 0 : index
    %c0_3 = arith.constant 0 : index
    %c0_4 = arith.constant 0 : index
    %c0_5 = arith.constant 0 : index
    %4 = vector.load %arg0[%c0_2, %c0_3, %c0_4, %c0_5] : memref<2x1x28x28xf32, #tpu.memory_space<vmem>>, vector<2x1x28x28xf32>
    %5 = vector.extract_strided_slice %4 {offsets = [0, 0, 0, 0], sizes = [2, 1, 26, 26], strides = [1, 1, 1, 1]} : vector<2x1x28x28xf32> to vector<2x1x26x26xf32>
    %6 = vector.shape_cast %5 : vector<2x1x26x26xf32> to vector<2x26x26xf32>
    %c0_6 = arith.constant 0 : index
    %7 = memref.load %arg1[%c0_6] : memref<60xf32, #tpu.memory_space<smem>>
    %8 = vector.broadcast %7 : f32 to vector<2x26x26xf32>
    %9 = arith.mulf %6, %8 : vector<2x26x26xf32>
    %c9 = arith.constant 9 : index
    %10 = memref.load %arg1[%c9] : memref<60xf32, #tpu.memory_space<smem>>
    %11 = vector.broadcast %10 : f32 to vector<2x26x26xf32>
    %12 = arith.mulf %6, %11 : vector<2x26x26xf32>
    %c18 = arith.constant 18 : index
    %13 = memref.load %arg1[%c18] : memref<60xf32, #tpu.memory_space<smem>>
    %14 = vector.broadcast %13 : f32 to vector<2x26x26xf32>
    %15 = arith.mulf %6, %14 : vector<2x26x26xf32>
    %c27 = arith.constant 27 : index
    %16 = memref.load %arg1[%c27] : memref<60xf32, #tpu.memory_space<smem>>
    %17 = vector.broadcast %16 : f32 to vector<2x26x26xf32>
    %18 = arith.mulf %6, %17 : vector<2x26x26xf32>
    %c36 = arith.constant 36 : index
    %19 = memref.load %arg1[%c36] : memref<60xf32, #tpu.memory_space<smem>>
    %20 = vector.broadcast %19 : f32 to vector<2x26x26xf32>
    %21 = arith.mulf %6, %20 : vector<2x26x26xf32>
    %c45 = arith.constant 45 : index
    %22 = memref.load %arg1[%c45] : memref<60xf32, #tpu.memory_space<smem>>
    %23 = vector.broadcast %22 : f32 to vector<2x26x26xf32>
    %24 = arith.mulf %6, %23 : vector<2x26x26xf32>
    %25 = vector.extract_strided_slice %4 {offsets = [0, 0, 0, 1], sizes = [2, 1, 26, 26], strides = [1, 1, 1, 1]} : vector<2x1x28x28xf32> to vector<2x1x26x26xf32>
    %26 = vector.shape_cast %25 : vector<2x1x26x26xf32> to vector<2x26x26xf32>
    %c1 = arith.constant 1 : index
    %27 = memref.load %arg1[%c1] : memref<60xf32, #tpu.memory_space<smem>>
    %28 = vector.broadcast %27 : f32 to vector<2x26x26xf32>
    %29 = arith.mulf %26, %28 : vector<2x26x26xf32>
    %30 = arith.addf %9, %29 : vector<2x26x26xf32>
    %c10 = arith.constant 10 : index
    %31 = memref.load %arg1[%c10] : memref<60xf32, #tpu.memory_space<smem>>
    %32 = vector.broadcast %31 : f32 to vector<2x26x26xf32>
    %33 = arith.mulf %26, %32 : vector<2x26x26xf32>
    %34 = arith.addf %12, %33 : vector<2x26x26xf32>
    %c19 = arith.constant 19 : index
    %35 = memref.load %arg1[%c19] : memref<60xf32, #tpu.memory_space<smem>>
    %36 = vector.broadcast %35 : f32 to vector<2x26x26xf32>
    %37 = arith.mulf %26, %36 : vector<2x26x26xf32>
    %38 = arith.addf %15, %37 : vector<2x26x26xf32>
    %c28 = arith.constant 28 : index
    %39 = memref.load %arg1[%c28] : memref<60xf32, #tpu.memory_space<smem>>
    %40 = vector.broadcast %39 : f32 to vector<2x26x26xf32>
    %41 = arith.mulf %26, %40 : vector<2x26x26xf32>
    %42 = arith.addf %18, %41 : vector<2x26x26xf32>
    %c37 = arith.constant 37 : index
    %43 = memref.load %arg1[%c37] : memref<60xf32, #tpu.memory_space<smem>>
    %44 = vector.broadcast %43 : f32 to vector<2x26x26xf32>
    %45 = arith.mulf %26, %44 : vector<2x26x26xf32>
    %46 = arith.addf %21, %45 : vector<2x26x26xf32>
    %c46 = arith.constant 46 : index
    %47 = memref.load %arg1[%c46] : memref<60xf32, #tpu.memory_space<smem>>
    %48 = vector.broadcast %47 : f32 to vector<2x26x26xf32>
    %49 = arith.mulf %26, %48 : vector<2x26x26xf32>
    %50 = arith.addf %24, %49 : vector<2x26x26xf32>
    %51 = vector.extract_strided_slice %4 {offsets = [0, 0, 0, 2], sizes = [2, 1, 26, 26], strides = [1, 1, 1, 1]} : vector<2x1x28x28xf32> to vector<2x1x26x26xf32>
    %52 = vector.shape_cast %51 : vector<2x1x26x26xf32> to vector<2x26x26xf32>
    %c2 = arith.constant 2 : index
    %53 = memref.load %arg1[%c2] : memref<60xf32, #tpu.memory_space<smem>>
    %54 = vector.broadcast %53 : f32 to vector<2x26x26xf32>
    %55 = arith.mulf %52, %54 : vector<2x26x26xf32>
    %56 = arith.addf %30, %55 : vector<2x26x26xf32>
    %c11 = arith.constant 11 : index
    %57 = memref.load %arg1[%c11] : memref<60xf32, #tpu.memory_space<smem>>
    %58 = vector.broadcast %57 : f32 to vector<2x26x26xf32>
    %59 = arith.mulf %52, %58 : vector<2x26x26xf32>
    %60 = arith.addf %34, %59 : vector<2x26x26xf32>
    %c20 = arith.constant 20 : index
    %61 = memref.load %arg1[%c20] : memref<60xf32, #tpu.memory_space<smem>>
    %62 = vector.broadcast %61 : f32 to vector<2x26x26xf32>
    %63 = arith.mulf %52, %62 : vector<2x26x26xf32>
    %64 = arith.addf %38, %63 : vector<2x26x26xf32>
    %c29 = arith.constant 29 : index
    %65 = memref.load %arg1[%c29] : memref<60xf32, #tpu.memory_space<smem>>
    %66 = vector.broadcast %65 : f32 to vector<2x26x26xf32>
    %67 = arith.mulf %52, %66 : vector<2x26x26xf32>
    %68 = arith.addf %42, %67 : vector<2x26x26xf32>
    %c38 = arith.constant 38 : index
    %69 = memref.load %arg1[%c38] : memref<60xf32, #tpu.memory_space<smem>>
    %70 = vector.broadcast %69 : f32 to vector<2x26x26xf32>
    %71 = arith.mulf %52, %70 : vector<2x26x26xf32>
    %72 = arith.addf %46, %71 : vector<2x26x26xf32>
    %c47 = arith.constant 47 : index
    %73 = memref.load %arg1[%c47] : memref<60xf32, #tpu.memory_space<smem>>
    %74 = vector.broadcast %73 : f32 to vector<2x26x26xf32>
    %75 = arith.mulf %52, %74 : vector<2x26x26xf32>
    %76 = arith.addf %50, %75 : vector<2x26x26xf32>
    %77 = vector.extract_strided_slice %4 {offsets = [0, 0, 1, 0], sizes = [2, 1, 26, 26], strides = [1, 1, 1, 1]} : vector<2x1x28x28xf32> to vector<2x1x26x26xf32>
    %78 = vector.shape_cast %77 : vector<2x1x26x26xf32> to vector<2x26x26xf32>
    %c3 = arith.constant 3 : index
    %79 = memref.load %arg1[%c3] : memref<60xf32, #tpu.memory_space<smem>>
    %80 = vector.broadcast %79 : f32 to vector<2x26x26xf32>
    %81 = arith.mulf %78, %80 : vector<2x26x26xf32>
    %82 = arith.addf %56, %81 : vector<2x26x26xf32>
    %c12 = arith.constant 12 : index
    %83 = memref.load %arg1[%c12] : memref<60xf32, #tpu.memory_space<smem>>
    %84 = vector.broadcast %83 : f32 to vector<2x26x26xf32>
    %85 = arith.mulf %78, %84 : vector<2x26x26xf32>
    %86 = arith.addf %60, %85 : vector<2x26x26xf32>
    %c21 = arith.constant 21 : index
    %87 = memref.load %arg1[%c21] : memref<60xf32, #tpu.memory_space<smem>>
    %88 = vector.broadcast %87 : f32 to vector<2x26x26xf32>
    %89 = arith.mulf %78, %88 : vector<2x26x26xf32>
    %90 = arith.addf %64, %89 : vector<2x26x26xf32>
    %c30 = arith.constant 30 : index
    %91 = memref.load %arg1[%c30] : memref<60xf32, #tpu.memory_space<smem>>
    %92 = vector.broadcast %91 : f32 to vector<2x26x26xf32>
    %93 = arith.mulf %78, %92 : vector<2x26x26xf32>
    %94 = arith.addf %68, %93 : vector<2x26x26xf32>
    %c39 = arith.constant 39 : index
    %95 = memref.load %arg1[%c39] : memref<60xf32, #tpu.memory_space<smem>>
    %96 = vector.broadcast %95 : f32 to vector<2x26x26xf32>
    %97 = arith.mulf %78, %96 : vector<2x26x26xf32>
    %98 = arith.addf %72, %97 : vector<2x26x26xf32>
    %c48 = arith.constant 48 : index
    %99 = memref.load %arg1[%c48] : memref<60xf32, #tpu.memory_space<smem>>
    %100 = vector.broadcast %99 : f32 to vector<2x26x26xf32>
    %101 = arith.mulf %78, %100 : vector<2x26x26xf32>
    %102 = arith.addf %76, %101 : vector<2x26x26xf32>
    %103 = vector.extract_strided_slice %4 {offsets = [0, 0, 1, 1], sizes = [2, 1, 26, 26], strides = [1, 1, 1, 1]} : vector<2x1x28x28xf32> to vector<2x1x26x26xf32>
    %104 = vector.shape_cast %103 : vector<2x1x26x26xf32> to vector<2x26x26xf32>
    %c4 = arith.constant 4 : index
    %105 = memref.load %arg1[%c4] : memref<60xf32, #tpu.memory_space<smem>>
    %106 = vector.broadcast %105 : f32 to vector<2x26x26xf32>
    %107 = arith.mulf %104, %106 : vector<2x26x26xf32>
    %108 = arith.addf %82, %107 : vector<2x26x26xf32>
    %c13 = arith.constant 13 : index
    %109 = memref.load %arg1[%c13] : memref<60xf32, #tpu.memory_space<smem>>
    %110 = vector.broadcast %109 : f32 to vector<2x26x26xf32>
    %111 = arith.mulf %104, %110 : vector<2x26x26xf32>
    %112 = arith.addf %86, %111 : vector<2x26x26xf32>
    %c22 = arith.constant 22 : index
    %113 = memref.load %arg1[%c22] : memref<60xf32, #tpu.memory_space<smem>>
    %114 = vector.broadcast %113 : f32 to vector<2x26x26xf32>
    %115 = arith.mulf %104, %114 : vector<2x26x26xf32>
    %116 = arith.addf %90, %115 : vector<2x26x26xf32>
    %c31 = arith.constant 31 : index
    %117 = memref.load %arg1[%c31] : memref<60xf32, #tpu.memory_space<smem>>
    %118 = vector.broadcast %117 : f32 to vector<2x26x26xf32>
    %119 = arith.mulf %104, %118 : vector<2x26x26xf32>
    %120 = arith.addf %94, %119 : vector<2x26x26xf32>
    %c40 = arith.constant 40 : index
    %121 = memref.load %arg1[%c40] : memref<60xf32, #tpu.memory_space<smem>>
    %122 = vector.broadcast %121 : f32 to vector<2x26x26xf32>
    %123 = arith.mulf %104, %122 : vector<2x26x26xf32>
    %124 = arith.addf %98, %123 : vector<2x26x26xf32>
    %c49 = arith.constant 49 : index
    %125 = memref.load %arg1[%c49] : memref<60xf32, #tpu.memory_space<smem>>
    %126 = vector.broadcast %125 : f32 to vector<2x26x26xf32>
    %127 = arith.mulf %104, %126 : vector<2x26x26xf32>
    %128 = arith.addf %102, %127 : vector<2x26x26xf32>
    %129 = vector.extract_strided_slice %4 {offsets = [0, 0, 1, 2], sizes = [2, 1, 26, 26], strides = [1, 1, 1, 1]} : vector<2x1x28x28xf32> to vector<2x1x26x26xf32>
    %130 = vector.shape_cast %129 : vector<2x1x26x26xf32> to vector<2x26x26xf32>
    %c5 = arith.constant 5 : index
    %131 = memref.load %arg1[%c5] : memref<60xf32, #tpu.memory_space<smem>>
    %132 = vector.broadcast %131 : f32 to vector<2x26x26xf32>
    %133 = arith.mulf %130, %132 : vector<2x26x26xf32>
    %134 = arith.addf %108, %133 : vector<2x26x26xf32>
    %c14 = arith.constant 14 : index
    %135 = memref.load %arg1[%c14] : memref<60xf32, #tpu.memory_space<smem>>
    %136 = vector.broadcast %135 : f32 to vector<2x26x26xf32>
    %137 = arith.mulf %130, %136 : vector<2x26x26xf32>
    %138 = arith.addf %112, %137 : vector<2x26x26xf32>
    %c23 = arith.constant 23 : index
    %139 = memref.load %arg1[%c23] : memref<60xf32, #tpu.memory_space<smem>>
    %140 = vector.broadcast %139 : f32 to vector<2x26x26xf32>
    %141 = arith.mulf %130, %140 : vector<2x26x26xf32>
    %142 = arith.addf %116, %141 : vector<2x26x26xf32>
    %c32 = arith.constant 32 : index
    %143 = memref.load %arg1[%c32] : memref<60xf32, #tpu.memory_space<smem>>
    %144 = vector.broadcast %143 : f32 to vector<2x26x26xf32>
    %145 = arith.mulf %130, %144 : vector<2x26x26xf32>
    %146 = arith.addf %120, %145 : vector<2x26x26xf32>
    %c41 = arith.constant 41 : index
    %147 = memref.load %arg1[%c41] : memref<60xf32, #tpu.memory_space<smem>>
    %148 = vector.broadcast %147 : f32 to vector<2x26x26xf32>
    %149 = arith.mulf %130, %148 : vector<2x26x26xf32>
    %150 = arith.addf %124, %149 : vector<2x26x26xf32>
    %c50 = arith.constant 50 : index
    %151 = memref.load %arg1[%c50] : memref<60xf32, #tpu.memory_space<smem>>
    %152 = vector.broadcast %151 : f32 to vector<2x26x26xf32>
    %153 = arith.mulf %130, %152 : vector<2x26x26xf32>
    %154 = arith.addf %128, %153 : vector<2x26x26xf32>
    %155 = vector.extract_strided_slice %4 {offsets = [0, 0, 2, 0], sizes = [2, 1, 26, 26], strides = [1, 1, 1, 1]} : vector<2x1x28x28xf32> to vector<2x1x26x26xf32>
    %156 = vector.shape_cast %155 : vector<2x1x26x26xf32> to vector<2x26x26xf32>
    %c6 = arith.constant 6 : index
    %157 = memref.load %arg1[%c6] : memref<60xf32, #tpu.memory_space<smem>>
    %158 = vector.broadcast %157 : f32 to vector<2x26x26xf32>
    %159 = arith.mulf %156, %158 : vector<2x26x26xf32>
    %160 = arith.addf %134, %159 : vector<2x26x26xf32>
    %c15 = arith.constant 15 : index
    %161 = memref.load %arg1[%c15] : memref<60xf32, #tpu.memory_space<smem>>
    %162 = vector.broadcast %161 : f32 to vector<2x26x26xf32>
    %163 = arith.mulf %156, %162 : vector<2x26x26xf32>
    %164 = arith.addf %138, %163 : vector<2x26x26xf32>
    %c24 = arith.constant 24 : index
    %165 = memref.load %arg1[%c24] : memref<60xf32, #tpu.memory_space<smem>>
    %166 = vector.broadcast %165 : f32 to vector<2x26x26xf32>
    %167 = arith.mulf %156, %166 : vector<2x26x26xf32>
    %168 = arith.addf %142, %167 : vector<2x26x26xf32>
    %c33 = arith.constant 33 : index
    %169 = memref.load %arg1[%c33] : memref<60xf32, #tpu.memory_space<smem>>
    %170 = vector.broadcast %169 : f32 to vector<2x26x26xf32>
    %171 = arith.mulf %156, %170 : vector<2x26x26xf32>
    %172 = arith.addf %146, %171 : vector<2x26x26xf32>
    %c42 = arith.constant 42 : index
    %173 = memref.load %arg1[%c42] : memref<60xf32, #tpu.memory_space<smem>>
    %174 = vector.broadcast %173 : f32 to vector<2x26x26xf32>
    %175 = arith.mulf %156, %174 : vector<2x26x26xf32>
    %176 = arith.addf %150, %175 : vector<2x26x26xf32>
    %c51 = arith.constant 51 : index
    %177 = memref.load %arg1[%c51] : memref<60xf32, #tpu.memory_space<smem>>
    %178 = vector.broadcast %177 : f32 to vector<2x26x26xf32>
    %179 = arith.mulf %156, %178 : vector<2x26x26xf32>
    %180 = arith.addf %154, %179 : vector<2x26x26xf32>
    %181 = vector.extract_strided_slice %4 {offsets = [0, 0, 2, 1], sizes = [2, 1, 26, 26], strides = [1, 1, 1, 1]} : vector<2x1x28x28xf32> to vector<2x1x26x26xf32>
    %182 = vector.shape_cast %181 : vector<2x1x26x26xf32> to vector<2x26x26xf32>
    %c7 = arith.constant 7 : index
    %183 = memref.load %arg1[%c7] : memref<60xf32, #tpu.memory_space<smem>>
    %184 = vector.broadcast %183 : f32 to vector<2x26x26xf32>
    %185 = arith.mulf %182, %184 : vector<2x26x26xf32>
    %186 = arith.addf %160, %185 : vector<2x26x26xf32>
    %c16 = arith.constant 16 : index
    %187 = memref.load %arg1[%c16] : memref<60xf32, #tpu.memory_space<smem>>
    %188 = vector.broadcast %187 : f32 to vector<2x26x26xf32>
    %189 = arith.mulf %182, %188 : vector<2x26x26xf32>
    %190 = arith.addf %164, %189 : vector<2x26x26xf32>
    %c25 = arith.constant 25 : index
    %191 = memref.load %arg1[%c25] : memref<60xf32, #tpu.memory_space<smem>>
    %192 = vector.broadcast %191 : f32 to vector<2x26x26xf32>
    %193 = arith.mulf %182, %192 : vector<2x26x26xf32>
    %194 = arith.addf %168, %193 : vector<2x26x26xf32>
    %c34 = arith.constant 34 : index
    %195 = memref.load %arg1[%c34] : memref<60xf32, #tpu.memory_space<smem>>
    %196 = vector.broadcast %195 : f32 to vector<2x26x26xf32>
    %197 = arith.mulf %182, %196 : vector<2x26x26xf32>
    %198 = arith.addf %172, %197 : vector<2x26x26xf32>
    %c43 = arith.constant 43 : index
    %199 = memref.load %arg1[%c43] : memref<60xf32, #tpu.memory_space<smem>>
    %200 = vector.broadcast %199 : f32 to vector<2x26x26xf32>
    %201 = arith.mulf %182, %200 : vector<2x26x26xf32>
    %202 = arith.addf %176, %201 : vector<2x26x26xf32>
    %c52 = arith.constant 52 : index
    %203 = memref.load %arg1[%c52] : memref<60xf32, #tpu.memory_space<smem>>
    %204 = vector.broadcast %203 : f32 to vector<2x26x26xf32>
    %205 = arith.mulf %182, %204 : vector<2x26x26xf32>
    %206 = arith.addf %180, %205 : vector<2x26x26xf32>
    %207 = vector.extract_strided_slice %4 {offsets = [0, 0, 2, 2], sizes = [2, 1, 26, 26], strides = [1, 1, 1, 1]} : vector<2x1x28x28xf32> to vector<2x1x26x26xf32>
    %208 = vector.shape_cast %207 : vector<2x1x26x26xf32> to vector<2x26x26xf32>
    %c8 = arith.constant 8 : index
    %209 = memref.load %arg1[%c8] : memref<60xf32, #tpu.memory_space<smem>>
    %210 = vector.broadcast %209 : f32 to vector<2x26x26xf32>
    %211 = arith.mulf %208, %210 : vector<2x26x26xf32>
    %212 = arith.addf %186, %211 : vector<2x26x26xf32>
    %c17 = arith.constant 17 : index
    %213 = memref.load %arg1[%c17] : memref<60xf32, #tpu.memory_space<smem>>
    %214 = vector.broadcast %213 : f32 to vector<2x26x26xf32>
    %215 = arith.mulf %208, %214 : vector<2x26x26xf32>
    %216 = arith.addf %190, %215 : vector<2x26x26xf32>
    %c26_7 = arith.constant 26 : index
    %217 = memref.load %arg1[%c26_7] : memref<60xf32, #tpu.memory_space<smem>>
    %218 = vector.broadcast %217 : f32 to vector<2x26x26xf32>
    %219 = arith.mulf %208, %218 : vector<2x26x26xf32>
    %220 = arith.addf %194, %219 : vector<2x26x26xf32>
    %c35 = arith.constant 35 : index
    %221 = memref.load %arg1[%c35] : memref<60xf32, #tpu.memory_space<smem>>
    %222 = vector.broadcast %221 : f32 to vector<2x26x26xf32>
    %223 = arith.mulf %208, %222 : vector<2x26x26xf32>
    %224 = arith.addf %198, %223 : vector<2x26x26xf32>
    %c44 = arith.constant 44 : index
    %225 = memref.load %arg1[%c44] : memref<60xf32, #tpu.memory_space<smem>>
    %226 = vector.broadcast %225 : f32 to vector<2x26x26xf32>
    %227 = arith.mulf %208, %226 : vector<2x26x26xf32>
    %228 = arith.addf %202, %227 : vector<2x26x26xf32>
    %c53 = arith.constant 53 : index
    %229 = memref.load %arg1[%c53] : memref<60xf32, #tpu.memory_space<smem>>
    %230 = vector.broadcast %229 : f32 to vector<2x26x26xf32>
    %231 = arith.mulf %208, %230 : vector<2x26x26xf32>
    %232 = arith.addf %206, %231 : vector<2x26x26xf32>
    %c54 = arith.constant 54 : index
    %233 = memref.load %arg1[%c54] : memref<60xf32, #tpu.memory_space<smem>>
    %234 = vector.broadcast %233 : f32 to vector<2x26x26xf32>
    %235 = arith.addf %212, %234 : vector<2x26x26xf32>
    %cst_8 = arith.constant 0.000000e+00 : f32
    %236 = vector.broadcast %cst_8 : f32 to vector<2x26x26xf32>
    %237 = arith.maximumf %235, %236 : vector<2x26x26xf32>
    %238 = vector.extract_strided_slice %237 {offsets = [0, 0, 0], sizes = [1, 26, 26], strides = [1, 1, 1]} : vector<2x26x26xf32> to vector<1x26x26xf32>
    %239 = vector.shape_cast %238 : vector<1x26x26xf32> to vector<26x26xf32>
    %c0_9 = arith.constant 0 : index
    %c0_10 = arith.constant 0 : index
    %240 = vector.load %arg7[%c0_9, %c0_10] : memref<64x156xf32, #tpu.memory_space<vmem>>, vector<26x26xf32>
    tpu.vector_store %arg7[%c0_9, %c0_10], %239 {strides = array<i32>} : memref<64x156xf32, #tpu.memory_space<vmem>>, vector<26x26xf32>,
    %241 = vector.extract_strided_slice %237 {offsets = [1, 0, 0], sizes = [1, 26, 26], strides = [1, 1, 1]} : vector<2x26x26xf32> to vector<1x26x26xf32>
    %242 = vector.shape_cast %241 : vector<1x26x26xf32> to vector<26x26xf32>
    %c32_11 = arith.constant 32 : index
    %c0_12 = arith.constant 0 : index
    %243 = vector.load %arg7[%c32_11, %c0_12] : memref<64x156xf32, #tpu.memory_space<vmem>>, vector<26x26xf32>
    tpu.vector_store %arg7[%c32_11, %c0_12], %242 {strides = array<i32>} : memref<64x156xf32, #tpu.memory_space<vmem>>, vector<26x26xf32>,
    %c55 = arith.constant 55 : index
    %244 = memref.load %arg1[%c55] : memref<60xf32, #tpu.memory_space<smem>>
    %245 = vector.broadcast %244 : f32 to vector<2x26x26xf32>
    %246 = arith.addf %216, %245 : vector<2x26x26xf32>
    %cst_13 = arith.constant 0.000000e+00 : f32
    %247 = vector.broadcast %cst_13 : f32 to vector<2x26x26xf32>
    %248 = arith.maximumf %246, %247 : vector<2x26x26xf32>
    %249 = vector.extract_strided_slice %248 {offsets = [0, 0, 0], sizes = [1, 26, 26], strides = [1, 1, 1]} : vector<2x26x26xf32> to vector<1x26x26xf32>
    %250 = vector.shape_cast %249 : vector<1x26x26xf32> to vector<26x26xf32>
    %c0_14 = arith.constant 0 : index
    %c26_15 = arith.constant 26 : index
    %251 = vector.load %arg7[%c0_14, %c26_15] : memref<64x156xf32, #tpu.memory_space<vmem>>, vector<26x26xf32>
    tpu.vector_store %arg7[%c0_14, %c26_15], %250 {strides = array<i32>} : memref<64x156xf32, #tpu.memory_space<vmem>>, vector<26x26xf32>,
    %252 = vector.extract_strided_slice %248 {offsets = [1, 0, 0], sizes = [1, 26, 26], strides = [1, 1, 1]} : vector<2x26x26xf32> to vector<1x26x26xf32>
    %253 = vector.shape_cast %252 : vector<1x26x26xf32> to vector<26x26xf32>
    %c32_16 = arith.constant 32 : index
    %c26_17 = arith.constant 26 : index
    %254 = vector.load %arg7[%c32_16, %c26_17] : memref<64x156xf32, #tpu.memory_space<vmem>>, vector<26x26xf32>
    tpu.vector_store %arg7[%c32_16, %c26_17], %253 {strides = array<i32>} : memref<64x156xf32, #tpu.memory_space<vmem>>, vector<26x26xf32>,
    %c56 = arith.constant 56 : index
    %255 = memref.load %arg1[%c56] : memref<60xf32, #tpu.memory_space<smem>>
    %256 = vector.broadcast %255 : f32 to vector<2x26x26xf32>
    %257 = arith.addf %220, %256 : vector<2x26x26xf32>
    %cst_18 = arith.constant 0.000000e+00 : f32
    %258 = vector.broadcast %cst_18 : f32 to vector<2x26x26xf32>
    %259 = arith.maximumf %257, %258 : vector<2x26x26xf32>
    %260 = vector.extract_strided_slice %259 {offsets = [0, 0, 0], sizes = [1, 26, 26], strides = [1, 1, 1]} : vector<2x26x26xf32> to vector<1x26x26xf32>
    %261 = vector.shape_cast %260 : vector<1x26x26xf32> to vector<26x26xf32>
    %c0_19 = arith.constant 0 : index
    %c52_20 = arith.constant 52 : index
    %262 = vector.load %arg7[%c0_19, %c52_20] : memref<64x156xf32, #tpu.memory_space<vmem>>, vector<26x26xf32>
    tpu.vector_store %arg7[%c0_19, %c52_20], %261 {strides = array<i32>} : memref<64x156xf32, #tpu.memory_space<vmem>>, vector<26x26xf32>,
    %263 = vector.extract_strided_slice %259 {offsets = [1, 0, 0], sizes = [1, 26, 26], strides = [1, 1, 1]} : vector<2x26x26xf32> to vector<1x26x26xf32>
    %264 = vector.shape_cast %263 : vector<1x26x26xf32> to vector<26x26xf32>
    %c32_21 = arith.constant 32 : index
    %c52_22 = arith.constant 52 : index
    %265 = vector.load %arg7[%c32_21, %c52_22] : memref<64x156xf32, #tpu.memory_space<vmem>>, vector<26x26xf32>
    tpu.vector_store %arg7[%c32_21, %c52_22], %264 {strides = array<i32>} : memref<64x156xf32, #tpu.memory_space<vmem>>, vector<26x26xf32>,
    %c57 = arith.constant 57 : index
    %266 = memref.load %arg1[%c57] : memref<60xf32, #tpu.memory_space<smem>>
    %267 = vector.broadcast %266 : f32 to vector<2x26x26xf32>
    %268 = arith.addf %224, %267 : vector<2x26x26xf32>
    %cst_23 = arith.constant 0.000000e+00 : f32
    %269 = vector.broadcast %cst_23 : f32 to vector<2x26x26xf32>
    %270 = arith.maximumf %268, %269 : vector<2x26x26xf32>
    %271 = vector.extract_strided_slice %270 {offsets = [0, 0, 0], sizes = [1, 26, 26], strides = [1, 1, 1]} : vector<2x26x26xf32> to vector<1x26x26xf32>
    %272 = vector.shape_cast %271 : vector<1x26x26xf32> to vector<26x26xf32>
    %c0_24 = arith.constant 0 : index
    %c78 = arith.constant 78 : index
    %273 = vector.load %arg7[%c0_24, %c78] : memref<64x156xf32, #tpu.memory_space<vmem>>, vector<26x26xf32>
    tpu.vector_store %arg7[%c0_24, %c78], %272 {strides = array<i32>} : memref<64x156xf32, #tpu.memory_space<vmem>>, vector<26x26xf32>,
    %274 = vector.extract_strided_slice %270 {offsets = [1, 0, 0], sizes = [1, 26, 26], strides = [1, 1, 1]} : vector<2x26x26xf32> to vector<1x26x26xf32>
    %275 = vector.shape_cast %274 : vector<1x26x26xf32> to vector<26x26xf32>
    %c32_25 = arith.constant 32 : index
    %c78_26 = arith.constant 78 : index
    %276 = vector.load %arg7[%c32_25, %c78_26] : memref<64x156xf32, #tpu.memory_space<vmem>>, vector<26x26xf32>
    tpu.vector_store %arg7[%c32_25, %c78_26], %275 {strides = array<i32>} : memref<64x156xf32, #tpu.memory_space<vmem>>, vector<26x26xf32>,
    %c58_27 = arith.constant 58 : index
    %277 = memref.load %arg1[%c58_27] : memref<60xf32, #tpu.memory_space<smem>>
    %278 = vector.broadcast %277 : f32 to vector<2x26x26xf32>
    %279 = arith.addf %228, %278 : vector<2x26x26xf32>
    %cst_28 = arith.constant 0.000000e+00 : f32
    %280 = vector.broadcast %cst_28 : f32 to vector<2x26x26xf32>
    %281 = arith.maximumf %279, %280 : vector<2x26x26xf32>
    %282 = vector.extract_strided_slice %281 {offsets = [0, 0, 0], sizes = [1, 26, 26], strides = [1, 1, 1]} : vector<2x26x26xf32> to vector<1x26x26xf32>
    %283 = vector.shape_cast %282 : vector<1x26x26xf32> to vector<26x26xf32>
    %c0_29 = arith.constant 0 : index
    %c104 = arith.constant 104 : index
    %284 = vector.load %arg7[%c0_29, %c104] : memref<64x156xf32, #tpu.memory_space<vmem>>, vector<26x26xf32>
    tpu.vector_store %arg7[%c0_29, %c104], %283 {strides = array<i32>} : memref<64x156xf32, #tpu.memory_space<vmem>>, vector<26x26xf32>,
    %285 = vector.extract_strided_slice %281 {offsets = [1, 0, 0], sizes = [1, 26, 26], strides = [1, 1, 1]} : vector<2x26x26xf32> to vector<1x26x26xf32>
    %286 = vector.shape_cast %285 : vector<1x26x26xf32> to vector<26x26xf32>
    %c32_30 = arith.constant 32 : index
    %c104_31 = arith.constant 104 : index
    %287 = vector.load %arg7[%c32_30, %c104_31] : memref<64x156xf32, #tpu.memory_space<vmem>>, vector<26x26xf32>
    tpu.vector_store %arg7[%c32_30, %c104_31], %286 {strides = array<i32>} : memref<64x156xf32, #tpu.memory_space<vmem>>, vector<26x26xf32>,
    %c59 = arith.constant 59 : index
    %288 = memref.load %arg1[%c59] : memref<60xf32, #tpu.memory_space<smem>>
    %289 = vector.broadcast %288 : f32 to vector<2x26x26xf32>
    %290 = arith.addf %232, %289 : vector<2x26x26xf32>
    %cst_32 = arith.constant 0.000000e+00 : f32
    %291 = vector.broadcast %cst_32 : f32 to vector<2x26x26xf32>
    %292 = arith.maximumf %290, %291 : vector<2x26x26xf32>
    %293 = vector.extract_strided_slice %292 {offsets = [0, 0, 0], sizes = [1, 26, 26], strides = [1, 1, 1]} : vector<2x26x26xf32> to vector<1x26x26xf32>
    %294 = vector.shape_cast %293 : vector<1x26x26xf32> to vector<26x26xf32>
    %c0_33 = arith.constant 0 : index
    %c130 = arith.constant 130 : index
    %295 = vector.load %arg7[%c0_33, %c130] : memref<64x156xf32, #tpu.memory_space<vmem>>, vector<26x26xf32>
    tpu.vector_store %arg7[%c0_33, %c130], %294 {strides = array<i32>} : memref<64x156xf32, #tpu.memory_space<vmem>>, vector<26x26xf32>,
    %296 = vector.extract_strided_slice %292 {offsets = [1, 0, 0], sizes = [1, 26, 26], strides = [1, 1, 1]} : vector<2x26x26xf32> to vector<1x26x26xf32>
    %297 = vector.shape_cast %296 : vector<1x26x26xf32> to vector<26x26xf32>
    %c32_34 = arith.constant 32 : index
    %c130_35 = arith.constant 130 : index
    %298 = vector.load %arg7[%c32_34, %c130_35] : memref<64x156xf32, #tpu.memory_space<vmem>>, vector<26x26xf32>
    tpu.vector_store %arg7[%c32_34, %c130_35], %297 {strides = array<i32>} : memref<64x156xf32, #tpu.memory_space<vmem>>, vector<26x26xf32>,
    %c0_36 = arith.constant 0 : index
    %c0_37 = arith.constant 0 : index
    %299 = vector.load %arg7[%c0_36, %c0_37] : memref<64x156xf32, #tpu.memory_space<vmem>>, vector<64x156xf32>
    %c0_38 = arith.constant 0 : index
    %c0_39 = arith.constant 0 : index
    %c0_40 = arith.constant 0 : index
    %300 = vector.load %arg2[%c0_38, %c0_39, %c0_40] : memref<2x32x64xf32, #tpu.memory_space<vmem>>, vector<1x32x64xf32>
    %301 = vector.shape_cast %300 : vector<1x32x64xf32> to vector<32x64xf32>
    %cst_41 = arith.constant dense<0.000000e+00> : vector<32x156xf32>
    %302 = tpu.matmul %301, %299, %cst_41 {dimension_numbers = #tpu.dot_dimension_numbers<[1], [0], [0], [1], [0, 0, 1, 1], [], []>} : vector<32x64xf32>, vector<64x156xf32>, vector<32x156xf32> -> vector<32x156xf32>
    %c1_42 = arith.constant 1 : index
    %c0_43 = arith.constant 0 : index
    %c0_44 = arith.constant 0 : index
    %303 = vector.load %arg2[%c1_42, %c0_43, %c0_44] : memref<2x32x64xf32, #tpu.memory_space<vmem>>, vector<1x32x64xf32>
    %304 = vector.shape_cast %303 : vector<1x32x64xf32> to vector<32x64xf32>
    %cst_45 = arith.constant dense<0.000000e+00> : vector<32x156xf32>
    %305 = tpu.matmul %304, %299, %cst_45 {dimension_numbers = #tpu.dot_dimension_numbers<[1], [0], [0], [1], [0, 0, 1, 1], [], []>} : vector<32x64xf32>, vector<64x156xf32>, vector<32x156xf32> -> vector<32x156xf32>
    %306 = arith.maximumf %302, %305 : vector<32x156xf32>
    %c0_46 = arith.constant 0 : index
    %c0_47 = arith.constant 0 : index
    %c0_48 = arith.constant 0 : index
    %307 = vector.load %arg3[%c0_46, %c0_47, %c0_48] : memref<2x156x78xf32, #tpu.memory_space<vmem>>, vector<1x156x78xf32>
    %308 = vector.shape_cast %307 : vector<1x156x78xf32> to vector<156x78xf32>
    %cst_49 = arith.constant dense<0.000000e+00> : vector<32x78xf32>
    %309 = tpu.matmul %306, %308, %cst_49 {dimension_numbers = #tpu.dot_dimension_numbers<[1], [0], [0], [1], [0, 0, 1, 1], [], []>} : vector<32x156xf32>, vector<156x78xf32>, vector<32x78xf32> -> vector<32x78xf32>
    %c1_50 = arith.constant 1 : index
    %c0_51 = arith.constant 0 : index
    %c0_52 = arith.constant 0 : index
    %310 = vector.load %arg3[%c1_50, %c0_51, %c0_52] : memref<2x156x78xf32, #tpu.memory_space<vmem>>, vector<1x156x78xf32>
    %311 = vector.shape_cast %310 : vector<1x156x78xf32> to vector<156x78xf32>
    %cst_53 = arith.constant dense<0.000000e+00> : vector<32x78xf32>
    %312 = tpu.matmul %306, %311, %cst_53 {dimension_numbers = #tpu.dot_dimension_numbers<[1], [0], [0], [1], [0, 0, 1, 1], [], []>} : vector<32x156xf32>, vector<156x78xf32>, vector<32x78xf32> -> vector<32x78xf32>
    %313 = arith.maximumf %309, %312 : vector<32x78xf32>
    %314 = vector.extract_strided_slice %313 {offsets = [0, 0], sizes = [1, 78], strides = [1, 1]} : vector<32x78xf32> to vector<1x78xf32>
    %c0_54 = arith.constant 0 : index
    %c0_55 = arith.constant 0 : index
    %315 = vector.load %arg8[%c0_54, %c0_55] : memref<2x1014xf32, #tpu.memory_space<vmem>>, vector<1x78xf32>
    tpu.vector_store %arg8[%c0_54, %c0_55], %314 {strides = array<i32>} : memref<2x1014xf32, #tpu.memory_space<vmem>>, vector<1x78xf32>,
    %316 = vector.extract_strided_slice %313 {offsets = [1, 0], sizes = [1, 78], strides = [1, 1]} : vector<32x78xf32> to vector<1x78xf32>
    %c0_56 = arith.constant 0 : index
    %c78_57 = arith.constant 78 : index
    %317 = vector.load %arg8[%c0_56, %c78_57] : memref<2x1014xf32, #tpu.memory_space<vmem>>, vector<1x78xf32>
    tpu.vector_store %arg8[%c0_56, %c78_57], %316 {strides = array<i32>} : memref<2x1014xf32, #tpu.memory_space<vmem>>, vector<1x78xf32>,
    %318 = vector.extract_strided_slice %313 {offsets = [2, 0], sizes = [1, 78], strides = [1, 1]} : vector<32x78xf32> to vector<1x78xf32>
    %c0_58 = arith.constant 0 : index
    %c156 = arith.constant 156 : index
    %319 = vector.load %arg8[%c0_58, %c156] : memref<2x1014xf32, #tpu.memory_space<vmem>>, vector<1x78xf32>
    tpu.vector_store %arg8[%c0_58, %c156], %318 {strides = array<i32>} : memref<2x1014xf32, #tpu.memory_space<vmem>>, vector<1x78xf32>,
    %320 = vector.extract_strided_slice %313 {offsets = [3, 0], sizes = [1, 78], strides = [1, 1]} : vector<32x78xf32> to vector<1x78xf32>
    %c0_59 = arith.constant 0 : index
    %c234 = arith.constant 234 : index
    %321 = vector.load %arg8[%c0_59, %c234] : memref<2x1014xf32, #tpu.memory_space<vmem>>, vector<1x78xf32>
    tpu.vector_store %arg8[%c0_59, %c234], %320 {strides = array<i32>} : memref<2x1014xf32, #tpu.memory_space<vmem>>, vector<1x78xf32>,
    %322 = vector.extract_strided_slice %313 {offsets = [4, 0], sizes = [1, 78], strides = [1, 1]} : vector<32x78xf32> to vector<1x78xf32>
    %c0_60 = arith.constant 0 : index
    %c312 = arith.constant 312 : index
    %323 = vector.load %arg8[%c0_60, %c312] : memref<2x1014xf32, #tpu.memory_space<vmem>>, vector<1x78xf32>
    tpu.vector_store %arg8[%c0_60, %c312], %322 {strides = array<i32>} : memref<2x1014xf32, #tpu.memory_space<vmem>>, vector<1x78xf32>,
    %324 = vector.extract_strided_slice %313 {offsets = [5, 0], sizes = [1, 78], strides = [1, 1]} : vector<32x78xf32> to vector<1x78xf32>
    %c0_61 = arith.constant 0 : index
    %c390 = arith.constant 390 : index
    %325 = vector.load %arg8[%c0_61, %c390] : memref<2x1014xf32, #tpu.memory_space<vmem>>, vector<1x78xf32>
    tpu.vector_store %arg8[%c0_61, %c390], %324 {strides = array<i32>} : memref<2x1014xf32, #tpu.memory_space<vmem>>, vector<1x78xf32>,
    %326 = vector.extract_strided_slice %313 {offsets = [6, 0], sizes = [1, 78], strides = [1, 1]} : vector<32x78xf32> to vector<1x78xf32>
    %c0_62 = arith.constant 0 : index
    %c468 = arith.constant 468 : index
    %327 = vector.load %arg8[%c0_62, %c468] : memref<2x1014xf32, #tpu.memory_space<vmem>>, vector<1x78xf32>
    tpu.vector_store %arg8[%c0_62, %c468], %326 {strides = array<i32>} : memref<2x1014xf32, #tpu.memory_space<vmem>>, vector<1x78xf32>,
    %328 = vector.extract_strided_slice %313 {offsets = [7, 0], sizes = [1, 78], strides = [1, 1]} : vector<32x78xf32> to vector<1x78xf32>
    %c0_63 = arith.constant 0 : index
    %c546 = arith.constant 546 : index
    %329 = vector.load %arg8[%c0_63, %c546] : memref<2x1014xf32, #tpu.memory_space<vmem>>, vector<1x78xf32>
    tpu.vector_store %arg8[%c0_63, %c546], %328 {strides = array<i32>} : memref<2x1014xf32, #tpu.memory_space<vmem>>, vector<1x78xf32>,
    %330 = vector.extract_strided_slice %313 {offsets = [8, 0], sizes = [1, 78], strides = [1, 1]} : vector<32x78xf32> to vector<1x78xf32>
    %c0_64 = arith.constant 0 : index
    %c624 = arith.constant 624 : index
    %331 = vector.load %arg8[%c0_64, %c624] : memref<2x1014xf32, #tpu.memory_space<vmem>>, vector<1x78xf32>
    tpu.vector_store %arg8[%c0_64, %c624], %330 {strides = array<i32>} : memref<2x1014xf32, #tpu.memory_space<vmem>>, vector<1x78xf32>,
    %332 = vector.extract_strided_slice %313 {offsets = [9, 0], sizes = [1, 78], strides = [1, 1]} : vector<32x78xf32> to vector<1x78xf32>
    %c0_65 = arith.constant 0 : index
    %c702 = arith.constant 702 : index
    %333 = vector.load %arg8[%c0_65, %c702] : memref<2x1014xf32, #tpu.memory_space<vmem>>, vector<1x78xf32>
    tpu.vector_store %arg8[%c0_65, %c702], %332 {strides = array<i32>} : memref<2x1014xf32, #tpu.memory_space<vmem>>, vector<1x78xf32>,
    %334 = vector.extract_strided_slice %313 {offsets = [10, 0], sizes = [1, 78], strides = [1, 1]} : vector<32x78xf32> to vector<1x78xf32>
    %c0_66 = arith.constant 0 : index
    %c780 = arith.constant 780 : index
    %335 = vector.load %arg8[%c0_66, %c780] : memref<2x1014xf32, #tpu.memory_space<vmem>>, vector<1x78xf32>
    tpu.vector_store %arg8[%c0_66, %c780], %334 {strides = array<i32>} : memref<2x1014xf32, #tpu.memory_space<vmem>>, vector<1x78xf32>,
    %336 = vector.extract_strided_slice %313 {offsets = [11, 0], sizes = [1, 78], strides = [1, 1]} : vector<32x78xf32> to vector<1x78xf32>
    %c0_67 = arith.constant 0 : index
    %c858 = arith.constant 858 : index
    %337 = vector.load %arg8[%c0_67, %c858] : memref<2x1014xf32, #tpu.memory_space<vmem>>, vector<1x78xf32>
    tpu.vector_store %arg8[%c0_67, %c858], %336 {strides = array<i32>} : memref<2x1014xf32, #tpu.memory_space<vmem>>, vector<1x78xf32>,
    %338 = vector.extract_strided_slice %313 {offsets = [12, 0], sizes = [1, 78], strides = [1, 1]} : vector<32x78xf32> to vector<1x78xf32>
    %c0_68 = arith.constant 0 : index
    %c936 = arith.constant 936 : index
    %339 = vector.load %arg8[%c0_68, %c936] : memref<2x1014xf32, #tpu.memory_space<vmem>>, vector<1x78xf32>
    tpu.vector_store %arg8[%c0_68, %c936], %338 {strides = array<i32>} : memref<2x1014xf32, #tpu.memory_space<vmem>>, vector<1x78xf32>,
    %340 = vector.extract_strided_slice %313 {offsets = [16, 0], sizes = [1, 78], strides = [1, 1]} : vector<32x78xf32> to vector<1x78xf32>
    %c1_69 = arith.constant 1 : index
    %c0_70 = arith.constant 0 : index
    %341 = vector.load %arg8[%c1_69, %c0_70] : memref<2x1014xf32, #tpu.memory_space<vmem>>, vector<1x78xf32>
    tpu.vector_store %arg8[%c1_69, %c0_70], %340 {strides = array<i32>} : memref<2x1014xf32, #tpu.memory_space<vmem>>, vector<1x78xf32>,
    %342 = vector.extract_strided_slice %313 {offsets = [17, 0], sizes = [1, 78], strides = [1, 1]} : vector<32x78xf32> to vector<1x78xf32>
    %c1_71 = arith.constant 1 : index
    %c78_72 = arith.constant 78 : index
    %343 = vector.load %arg8[%c1_71, %c78_72] : memref<2x1014xf32, #tpu.memory_space<vmem>>, vector<1x78xf32>
    tpu.vector_store %arg8[%c1_71, %c78_72], %342 {strides = array<i32>} : memref<2x1014xf32, #tpu.memory_space<vmem>>, vector<1x78xf32>,
    %344 = vector.extract_strided_slice %313 {offsets = [18, 0], sizes = [1, 78], strides = [1, 1]} : vector<32x78xf32> to vector<1x78xf32>
    %c1_73 = arith.constant 1 : index
    %c156_74 = arith.constant 156 : index
    %345 = vector.load %arg8[%c1_73, %c156_74] : memref<2x1014xf32, #tpu.memory_space<vmem>>, vector<1x78xf32>
    tpu.vector_store %arg8[%c1_73, %c156_74], %344 {strides = array<i32>} : memref<2x1014xf32, #tpu.memory_space<vmem>>, vector<1x78xf32>,
    %346 = vector.extract_strided_slice %313 {offsets = [19, 0], sizes = [1, 78], strides = [1, 1]} : vector<32x78xf32> to vector<1x78xf32>
    %c1_75 = arith.constant 1 : index
    %c234_76 = arith.constant 234 : index
    %347 = vector.load %arg8[%c1_75, %c234_76] : memref<2x1014xf32, #tpu.memory_space<vmem>>, vector<1x78xf32>
    tpu.vector_store %arg8[%c1_75, %c234_76], %346 {strides = array<i32>} : memref<2x1014xf32, #tpu.memory_space<vmem>>, vector<1x78xf32>,
    %348 = vector.extract_strided_slice %313 {offsets = [20, 0], sizes = [1, 78], strides = [1, 1]} : vector<32x78xf32> to vector<1x78xf32>
    %c1_77 = arith.constant 1 : index
    %c312_78 = arith.constant 312 : index
    %349 = vector.load %arg8[%c1_77, %c312_78] : memref<2x1014xf32, #tpu.memory_space<vmem>>, vector<1x78xf32>
    tpu.vector_store %arg8[%c1_77, %c312_78], %348 {strides = array<i32>} : memref<2x1014xf32, #tpu.memory_space<vmem>>, vector<1x78xf32>,
    %350 = vector.extract_strided_slice %313 {offsets = [21, 0], sizes = [1, 78], strides = [1, 1]} : vector<32x78xf32> to vector<1x78xf32>
    %c1_79 = arith.constant 1 : index
    %c390_80 = arith.constant 390 : index
    %351 = vector.load %arg8[%c1_79, %c390_80] : memref<2x1014xf32, #tpu.memory_space<vmem>>, vector<1x78xf32>
    tpu.vector_store %arg8[%c1_79, %c390_80], %350 {strides = array<i32>} : memref<2x1014xf32, #tpu.memory_space<vmem>>, vector<1x78xf32>,
    %352 = vector.extract_strided_slice %313 {offsets = [22, 0], sizes = [1, 78], strides = [1, 1]} : vector<32x78xf32> to vector<1x78xf32>
    %c1_81 = arith.constant 1 : index
    %c468_82 = arith.constant 468 : index
    %353 = vector.load %arg8[%c1_81, %c468_82] : memref<2x1014xf32, #tpu.memory_space<vmem>>, vector<1x78xf32>
    tpu.vector_store %arg8[%c1_81, %c468_82], %352 {strides = array<i32>} : memref<2x1014xf32, #tpu.memory_space<vmem>>, vector<1x78xf32>,
    %354 = vector.extract_strided_slice %313 {offsets = [23, 0], sizes = [1, 78], strides = [1, 1]} : vector<32x78xf32> to vector<1x78xf32>
    %c1_83 = arith.constant 1 : index
    %c546_84 = arith.constant 546 : index
    %355 = vector.load %arg8[%c1_83, %c546_84] : memref<2x1014xf32, #tpu.memory_space<vmem>>, vector<1x78xf32>
    tpu.vector_store %arg8[%c1_83, %c546_84], %354 {strides = array<i32>} : memref<2x1014xf32, #tpu.memory_space<vmem>>, vector<1x78xf32>,
    %356 = vector.extract_strided_slice %313 {offsets = [24, 0], sizes = [1, 78], strides = [1, 1]} : vector<32x78xf32> to vector<1x78xf32>
    %c1_85 = arith.constant 1 : index
    %c624_86 = arith.constant 624 : index
    %357 = vector.load %arg8[%c1_85, %c624_86] : memref<2x1014xf32, #tpu.memory_space<vmem>>, vector<1x78xf32>
    tpu.vector_store %arg8[%c1_85, %c624_86], %356 {strides = array<i32>} : memref<2x1014xf32, #tpu.memory_space<vmem>>, vector<1x78xf32>,
    %358 = vector.extract_strided_slice %313 {offsets = [25, 0], sizes = [1, 78], strides = [1, 1]} : vector<32x78xf32> to vector<1x78xf32>
    %c1_87 = arith.constant 1 : index
    %c702_88 = arith.constant 702 : index
    %359 = vector.load %arg8[%c1_87, %c702_88] : memref<2x1014xf32, #tpu.memory_space<vmem>>, vector<1x78xf32>
    tpu.vector_store %arg8[%c1_87, %c702_88], %358 {strides = array<i32>} : memref<2x1014xf32, #tpu.memory_space<vmem>>, vector<1x78xf32>,
    %360 = vector.extract_strided_slice %313 {offsets = [26, 0], sizes = [1, 78], strides = [1, 1]} : vector<32x78xf32> to vector<1x78xf32>
    %c1_89 = arith.constant 1 : index
    %c780_90 = arith.constant 780 : index
    %361 = vector.load %arg8[%c1_89, %c780_90] : memref<2x1014xf32, #tpu.memory_space<vmem>>, vector<1x78xf32>
    tpu.vector_store %arg8[%c1_89, %c780_90], %360 {strides = array<i32>} : memref<2x1014xf32, #tpu.memory_space<vmem>>, vector<1x78xf32>,
    %362 = vector.extract_strided_slice %313 {offsets = [27, 0], sizes = [1, 78], strides = [1, 1]} : vector<32x78xf32> to vector<1x78xf32>
    %c1_91 = arith.constant 1 : index
    %c858_92 = arith.constant 858 : index
    %363 = vector.load %arg8[%c1_91, %c858_92] : memref<2x1014xf32, #tpu.memory_space<vmem>>, vector<1x78xf32>
    tpu.vector_store %arg8[%c1_91, %c858_92], %362 {strides = array<i32>} : memref<2x1014xf32, #tpu.memory_space<vmem>>, vector<1x78xf32>,
    %364 = vector.extract_strided_slice %313 {offsets = [28, 0], sizes = [1, 78], strides = [1, 1]} : vector<32x78xf32> to vector<1x78xf32>
    %c1_93 = arith.constant 1 : index
    %c936_94 = arith.constant 936 : index
    %365 = vector.load %arg8[%c1_93, %c936_94] : memref<2x1014xf32, #tpu.memory_space<vmem>>, vector<1x78xf32>
    tpu.vector_store %arg8[%c1_93, %c936_94], %364 {strides = array<i32>} : memref<2x1014xf32, #tpu.memory_space<vmem>>, vector<1x78xf32>,
    %c0_95 = arith.constant 0 : index
    %c0_96 = arith.constant 0 : index
    %366 = vector.load %arg8[%c0_95, %c0_96] : memref<2x1014xf32, #tpu.memory_space<vmem>>, vector<2x1014xf32>
    %c0_97 = arith.constant 0 : index
    %c0_98 = arith.constant 0 : index
    %367 = vector.load %arg4[%c0_97, %c0_98] : memref<1014x10xf32, #tpu.memory_space<vmem>>, vector<1014x10xf32>
    %cst_99 = arith.constant dense<0.000000e+00> : vector<2x10xf32>
    %368 = tpu.matmul %366, %367, %cst_99 {dimension_numbers = #tpu.dot_dimension_numbers<[1], [0], [0], [1], [0, 0, 1, 1], [], []>} : vector<2x1014xf32>, vector<1014x10xf32>, vector<2x10xf32> -> vector<2x10xf32>
    %c0_100 = arith.constant 0 : index
    %c0_101 = arith.constant 0 : index
    %369 = vector.load %arg5[%c0_100, %c0_101] : memref<1x10xf32, #tpu.memory_space<vmem>>, vector<1x10xf32>
    %370 = vector.broadcast %369 : vector<1x10xf32> to vector<2x10xf32>
    %371 = arith.addf %368, %370 : vector<2x10xf32>
    %c0_102 = arith.constant 0 : index
    %c0_103 = arith.constant 0 : index
    %372 = vector.load %arg6[%c0_102, %c0_103] : memref<2x10xf32, #tpu.memory_space<vmem>>, vector<2x10xf32>
    tpu.vector_store %arg6[%c0_102, %c0_103], %371 {strides = array<i32>} : memref<2x10xf32, #tpu.memory_space<vmem>>, vector<2x10xf32>,
    return
  }
}

</mosaic_0001>

<llo_original>
// kernel: cnn_forward.1
$region0: #{cnn_forward.1}
  #allocation0 [shape = 'u32[]', space=smem, size = 0x4, offset = 0x4, fixed_abs, tag = 'smem constant byte address 0x4 - core index']
  #allocation1 [shape = 'u32[144,128]{1,0:T(1,128)}', space=vmem, size = 0x12000, scoped, tag = 'internal scratch']
  #allocation2 [shape = 'f32[64,156]{1,0:T(8,128)}', space=vmem, size = 0x10000, scoped, tag = 'scratch operand']
  #allocation3 [shape = 'f32[2,1014]{1,0:T(2,128)}', space=vmem, size = 0x2000, scoped, tag = 'scratch operand']
  %s0 = inlined_call_operand.vmem [shape: f32[2,1,28,28], index: 0, kind: input, shape index: {}]
  %s1 = inlined_call_operand.vmem [shape: f32[60], index: 1, kind: input, shape index: {}]
  %s2 = inlined_call_operand.vmem [shape: f32[2,32,64], index: 2, kind: input, shape index: {}]
  %s3 = inlined_call_operand.vmem [shape: f32[2,156,78], index: 3, kind: input, shape index: {}]
  %s4 = inlined_call_operand.vmem [shape: f32[1014,10], index: 4, kind: input, shape index: {}]
  %s5 = inlined_call_operand.vmem [shape: f32[1,10], index: 5, kind: input, shape index: {}]
  %s6 = inlined_call_operand.hbm [shape: f32[2,10], index: 6, kind: output, shape index: {}]
  %s7 = sld [smem:[#allocation0]]
  $region38: #{cnn_forward.1} parent=0
    _
  %s9 = ssub.s32 1, %s7
  %s10 = scalar_select 0, %s9, %s7
  $region1: #{cnn_forward.1} parent=0
    #allocation4 [shape = 'u8[512]{0}', space=smem, size = 0x200, scoped, tag = 'input window, operand 1, single buffered']
    #allocation5 [shape = 's32[1]{0}', space=sflag, size = 0x4, scoped, tag = 'scoped memory for cnn_forward.1']
    #allocation6 [shape = 's32[1]{0}', space=sflag, size = 0x4, scoped, tag = 'scoped memory for cnn_forward.1']
    #allocation7 [shape = 'u8[1024]{0}', space=vmem, size = 0x400, scoped, tag = 'output window, operand 0, single buffered']
    %11 = vsyncpa [#allocation6], 0
    %12 = vsyncpa [#allocation5], 0
    // Predicated region
    $region2: #{cnn_forward.1} parent=1 // pred_check
      _
    $region3: #{cnn_forward.1} parent=1 // pred_check_branch
      %14 = sbr.rel (0) target = $region5
    $region4: #{cnn_forward.1} parent=1 // pred_region
      _
    $region5: #{cnn_forward.1} parent=1 // pred_fallthru
      _
    // Predicated region
    $region6: #{cnn_forward.1} parent=1 // pred_check
      _
    $region7: #{cnn_forward.1} parent=1 // pred_check_branch
      %16 = sbr.rel (0) target = $region9
    $region8: #{cnn_forward.1} parent=1 // pred_region
      %s18 = ssub.s32 16, 16
      %19 = vsyncadd [#allocation6], %s18
      %s21 = sshll.u32 %s1, 4
      %s22 = int_to_ptr.vmem [resolvable:$true] %s21
      %24 = dma.vmem_to_smem %s22, 16, [#allocation4], [#allocation6]
    $region9: #{cnn_forward.1} parent=1 // pred_fallthru
      _
    // Predicated region
    $region10: #{cnn_forward.1} parent=1 // pred_check
      _
    $region11: #{cnn_forward.1} parent=1 // pred_check_branch
      %26 = sbr.rel (0) target = $region13
    $region12: #{cnn_forward.1} parent=1 // pred_region
      _
    $region13: #{cnn_forward.1} parent=1 // pred_fallthru
      _
    // Predicated region
    $region14: #{cnn_forward.1} parent=1 // pred_check
      _
    $region15: #{cnn_forward.1} parent=1 // pred_check_branch
      %28 = sbr.rel (0) target = $region17
    $region16: #{cnn_forward.1} parent=1 // pred_region
      _
    $region17: #{cnn_forward.1} parent=1 // pred_fallthru
      _
    // Predicated region
    $region18: #{cnn_forward.1} parent=1 // pred_check
      _
    $region19: #{cnn_forward.1} parent=1 // pred_check_branch
      %30 = sbr.rel (0) target = $region21
    $region20: #{cnn_forward.1} parent=1 // pred_region
      _
    $region21: #{cnn_forward.1} parent=1 // pred_fallthru
      _
    // Predicated region
    $region22: #{cnn_forward.1} parent=1 // pred_check
      _
    $region23: #{cnn_forward.1} parent=1 // pred_check_branch
      %32 = sbr.rel (0) target = $region25
    $region24: #{cnn_forward.1} parent=1 // pred_region
      _
    $region25: #{cnn_forward.1} parent=1 // pred_fallthru
      _
    // Predicated region
    $region26: #{cnn_forward.1} parent=1 // pred_check
      _
    $region27: #{cnn_forward.1} parent=1 // pred_check_branch
      %34 = sbr.rel (0) target = $region29
    $region28: #{cnn_forward.1} parent=1 // pred_region
      %35 = dma.done [#allocation6], 16
    $region29: #{cnn_forward.1} parent=1 // pred_fallthru
      _
    %36 = sfence
    %37 = vst [vmem:[#allocation2 + $0x30] sm:$0xfc] 0.0
    %vm38 = vcmask 228354
    %39 = vst.msk [vmem:[#allocation2 + $0x38] sm:$0xfc] %vm38, 0.0
    %40 = vst [vmem:[#allocation2 + $0x70] sm:$0xfc] 0.0
    %41 = vst.msk [vmem:[#allocation2 + $0x78] sm:$0xfc] %vm38, 0.0
    %v42 = vld [vmem:[%s0] sm:$0xff]
    %v43 = vld [vmem:[%s0 + $0x8] sm:$0xff]
    %v44 = vld [vmem:[%s0 + $0x10] sm:$0xff]
    %v45 = vld [vmem:[%s0 + $0x18] sm:$0xf]
    %v46 = vld [vmem:[%s0 + $0x20] sm:$0xff]
    %v47 = vld [vmem:[%s0 + $0x28] sm:$0xff]
    %v48 = vld [vmem:[%s0 + $0x30] sm:$0xff]
    %v49 = vld [vmem:[%s0 + $0x38] sm:$0xf]
    %s50 = sld [smem:[#allocation4]]
    %v51 = vstv %s50
    %v52 = vmul.f32 %v42, %v51
    %v53 = vmul.f32 %v43, %v51
    %v54 = vmul.f32 %v44, %v51
    %v55 = vmul.f32 %v45, %v51
    %v56 = vmul.f32 %v46, %v51
    %v57 = vmul.f32 %v47, %v51
    %v58 = vmul.f32 %v48, %v51
    %v59 = vmul.f32 %v49, %v51
    %s60 = sld [smem:[#allocation4 + $0x9]]
    %v61 = vstv %s60
    %v62 = vmul.f32 %v42, %v61
    %v63 = vmul.f32 %v43, %v61
    %v64 = vmul.f32 %v44, %v61
    %v65 = vmul.f32 %v45, %v61
    %v66 = vmul.f32 %v46, %v61
    %v67 = vmul.f32 %v47, %v61
    %v68 = vmul.f32 %v48, %v61
    %v69 = vmul.f32 %v49, %v61
    %s70 = sld [smem:[#allocation4 + $0x12]]
    %v71 = vstv %s70
    %v72 = vmul.f32 %v42, %v71
    %v73 = vmul.f32 %v43, %v71
    %v74 = vmul.f32 %v44, %v71
    %v75 = vmul.f32 %v45, %v71
    %v76 = vmul.f32 %v46, %v71
    %v77 = vmul.f32 %v47, %v71
    %v78 = vmul.f32 %v48, %v71
    %v79 = vmul.f32 %v49, %v71
    %s80 = sld [smem:[#allocation4 + $0x1b]]
    %v81 = vstv %s80
    %v82 = vmul.f32 %v42, %v81
    %v83 = vmul.f32 %v43, %v81
    %v84 = vmul.f32 %v44, %v81
    %v85 = vmul.f32 %v45, %v81
    %v86 = vmul.f32 %v46, %v81
    %v87 = vmul.f32 %v47, %v81
    %v88 = vmul.f32 %v48, %v81
    %v89 = vmul.f32 %v49, %v81
    %s90 = sld [smem:[#allocation4 + $0x24]]
    %v91 = vstv %s90
    %v92 = vmul.f32 %v42, %v91
    %v93 = vmul.f32 %v43, %v91
    %v94 = vmul.f32 %v44, %v91
    %v95 = vmul.f32 %v45, %v91
    %v96 = vmul.f32 %v46, %v91
    %v97 = vmul.f32 %v47, %v91
    %v98 = vmul.f32 %v48, %v91
    %v99 = vmul.f32 %v49, %v91
    %s100 = sld [smem:[#allocation4 + $0x2d]]
    %v101 = vstv %s100
    %v102 = vmul.f32 %v42, %v101
    %v103 = vmul.f32 %v43, %v101
    %v104 = vmul.f32 %v44, %v101
    %v105 = vmul.f32 %v45, %v101
    %v106 = vmul.f32 %v46, %v101
    %v107 = vmul.f32 %v47, %v101
    %v108 = vmul.f32 %v48, %v101
    %v109 = vmul.f32 %v49, %v101
    %s110 = sld [smem:[#allocation4 + $0x1]]
    %v111 = vstv %s110
    %v112 = vmul.f32 %v42, %v111
    %v113 = vmul.f32 %v43, %v111
    %v114 = vmul.f32 %v44, %v111
    %v115 = vmul.f32 %v45, %v111
    %v116 = vmul.f32 %v46, %v111
    %v117 = vmul.f32 %v47, %v111
    %v118 = vmul.f32 %v48, %v111
    %v119 = vmul.f32 %v49, %v111
    %128 = vrot.lane.b32.xlu0 %v112, 127
    %v129 = vpop.permute.xlu0 %128
    %130 = vrot.lane.b32.xlu0 %v113, 127
    %v131 = vpop.permute.xlu0 %130
    %132 = vrot.lane.b32.xlu0 %v114, 127
    %v133 = vpop.permute.xlu0 %132
    %134 = vrot.lane.b32.xlu0 %v115, 127
    %v135 = vpop.permute.xlu0 %134
    %136 = vrot.lane.b32.xlu0 %v116, 127
    %v137 = vpop.permute.xlu0 %136
    %138 = vrot.lane.b32.xlu0 %v117, 127
    %v139 = vpop.permute.xlu0 %138
    %140 = vrot.lane.b32.xlu0 %v118, 127
    %v141 = vpop.permute.xlu0 %140
    %142 = vrot.lane.b32.xlu0 %v119, 127
    %v143 = vpop.permute.xlu0 %142
    %v152 = vadd.f32 %v52, %v129
    %v153 = vadd.f32 %v53, %v131
    %v154 = vadd.f32 %v54, %v133
    %v155 = vadd.f32 %v55, %v135
    %v156 = vadd.f32 %v56, %v137
    %v157 = vadd.f32 %v57, %v139
    %v158 = vadd.f32 %v58, %v141
    %v159 = vadd.f32 %v59, %v143
    %s160 = sld [smem:[#allocation4 + $0xa]]
    %v161 = vstv %s160
    %v162 = vmul.f32 %v42, %v161
    %v163 = vmul.f32 %v43, %v161
    %v164 = vmul.f32 %v44, %v161
    %v165 = vmul.f32 %v45, %v161
    %v166 = vmul.f32 %v46, %v161
    %v167 = vmul.f32 %v47, %v161
    %v168 = vmul.f32 %v48, %v161
    %v169 = vmul.f32 %v49, %v161
    %178 = vrot.lane.b32.xlu0 %v162, 127
    %v179 = vpop.permute.xlu0 %178
    %180 = vrot.lane.b32.xlu0 %v163, 127
    %v181 = vpop.permute.xlu0 %180
    %182 = vrot.lane.b32.xlu0 %v164, 127
    %v183 = vpop.permute.xlu0 %182
    %184 = vrot.lane.b32.xlu0 %v165, 127
    %v185 = vpop.permute.xlu0 %184
    %186 = vrot.lane.b32.xlu0 %v166, 127
    %v187 = vpop.permute.xlu0 %186
    %188 = vrot.lane.b32.xlu0 %v167, 127
    %v189 = vpop.permute.xlu0 %188
    %190 = vrot.lane.b32.xlu0 %v168, 127
    %v191 = vpop.permute.xlu0 %190
    %192 = vrot.lane.b32.xlu0 %v169, 127
    %v193 = vpop.permute.xlu0 %192
    %v202 = vadd.f32 %v62, %v179
    %v203 = vadd.f32 %v63, %v181
    %v204 = vadd.f32 %v64, %v183
    %v205 = vadd.f32 %v65, %v185
    %v206 = vadd.f32 %v66, %v187
    %v207 = vadd.f32 %v67, %v189
    %v208 = vadd.f32 %v68, %v191
    %v209 = vadd.f32 %v69, %v193
    %s210 = sld [smem:[#allocation4 + $0x13]]
    %v211 = vstv %s210
    %v212 = vmul.f32 %v42, %v211
    %v213 = vmul.f32 %v43, %v211
    %v214 = vmul.f32 %v44, %v211
    %v215 = vmul.f32 %v45, %v211
    %v216 = vmul.f32 %v46, %v211
    %v217 = vmul.f32 %v47, %v211
    %v218 = vmul.f32 %v48, %v211
    %v219 = vmul.f32 %v49, %v211
    %228 = vrot.lane.b32.xlu0 %v212, 127
    %v229 = vpop.permute.xlu0 %228
    %230 = vrot.lane.b32.xlu0 %v213, 127
    %v231 = vpop.permute.xlu0 %230
    %232 = vrot.lane.b32.xlu0 %v214, 127
    %v233 = vpop.permute.xlu0 %232
    %234 = vrot.lane.b32.xlu0 %v215, 127
    %v235 = vpop.permute.xlu0 %234
    %236 = vrot.lane.b32.xlu0 %v216, 127
    %v237 = vpop.permute.xlu0 %236
    %238 = vrot.lane.b32.xlu0 %v217, 127
    %v239 = vpop.permute.xlu0 %238
    %240 = vrot.lane.b32.xlu0 %v218, 127
    %v241 = vpop.permute.xlu0 %240
    %242 = vrot.lane.b32.xlu0 %v219, 127
    %v243 = vpop.permute.xlu0 %242
    %v252 = vadd.f32 %v72, %v229
    %v253 = vadd.f32 %v73, %v231
    %v254 = vadd.f32 %v74, %v233
    %v255 = vadd.f32 %v75, %v235
    %v256 = vadd.f32 %v76, %v237
    %v257 = vadd.f32 %v77, %v239
    %v258 = vadd.f32 %v78, %v241
    %v259 = vadd.f32 %v79, %v243
    %s260 = sld [smem:[#allocation4 + $0x1c]]
    %v261 = vstv %s260
    %v262 = vmul.f32 %v42, %v261
    %v263 = vmul.f32 %v43, %v261
    %v264 = vmul.f32 %v44, %v261
    %v265 = vmul.f32 %v45, %v261
    %v266 = vmul.f32 %v46, %v261
    %v267 = vmul.f32 %v47, %v261
    %v268 = vmul.f32 %v48, %v261
    %v269 = vmul.f32 %v49, %v261
    %278 = vrot.lane.b32.xlu0 %v262, 127
    %v279 = vpop.permute.xlu0 %278
    %280 = vrot.lane.b32.xlu0 %v263, 127
    %v281 = vpop.permute.xlu0 %280
    %282 = vrot.lane.b32.xlu0 %v264, 127
    %v283 = vpop.permute.xlu0 %282
    %284 = vrot.lane.b32.xlu0 %v265, 127
    %v285 = vpop.permute.xlu0 %284
    %286 = vrot.lane.b32.xlu0 %v266, 127
    %v287 = vpop.permute.xlu0 %286
    %288 = vrot.lane.b32.xlu0 %v267, 127
    %v289 = vpop.permute.xlu0 %288
    %290 = vrot.lane.b32.xlu0 %v268, 127
    %v291 = vpop.permute.xlu0 %290
    %292 = vrot.lane.b32.xlu0 %v269, 127
    %v293 = vpop.permute.xlu0 %292
    %v302 = vadd.f32 %v82, %v279
    %v303 = vadd.f32 %v83, %v281
    %v304 = vadd.f32 %v84, %v283
    %v305 = vadd.f32 %v85, %v285
    %v306 = vadd.f32 %v86, %v287
    %v307 = vadd.f32 %v87, %v289
    %v308 = vadd.f32 %v88, %v291
    %v309 = vadd.f32 %v89, %v293
    %s310 = sld [smem:[#allocation4 + $0x25]]
    %v311 = vstv %s310
    %v312 = vmul.f32 %v42, %v311
    %v313 = vmul.f32 %v43, %v311
    %v314 = vmul.f32 %v44, %v311
    %v315 = vmul.f32 %v45, %v311
    %v316 = vmul.f32 %v46, %v311
    %v317 = vmul.f32 %v47, %v311
    %v318 = vmul.f32 %v48, %v311
    %v319 = vmul.f32 %v49, %v311
    %328 = vrot.lane.b32.xlu0 %v312, 127
    %v329 = vpop.permute.xlu0 %328
    %330 = vrot.lane.b32.xlu0 %v313, 127
    %v331 = vpop.permute.xlu0 %330
    %332 = vrot.lane.b32.xlu0 %v314, 127
    %v333 = vpop.permute.xlu0 %332
    %334 = vrot.lane.b32.xlu0 %v315, 127
    %v335 = vpop.permute.xlu0 %334
    %336 = vrot.lane.b32.xlu0 %v316, 127
    %v337 = vpop.permute.xlu0 %336
    %338 = vrot.lane.b32.xlu0 %v317, 127
    %v339 = vpop.permute.xlu0 %338
    %340 = vrot.lane.b32.xlu0 %v318, 127
    %v341 = vpop.permute.xlu0 %340
    %342 = vrot.lane.b32.xlu0 %v319, 127
    %v343 = vpop.permute.xlu0 %342
    %v352 = vadd.f32 %v92, %v329
    %v353 = vadd.f32 %v93, %v331
    %v354 = vadd.f32 %v94, %v333
    %v355 = vadd.f32 %v95, %v335
    %v356 = vadd.f32 %v96, %v337
    %v357 = vadd.f32 %v97, %v339
    %v358 = vadd.f32 %v98, %v341
    %v359 = vadd.f32 %v99, %v343
    %s360 = sld [smem:[#allocation4 + $0x2e]]
    %v361 = vstv %s360
    %v362 = vmul.f32 %v42, %v361
    %v363 = vmul.f32 %v43, %v361
    %v364 = vmul.f32 %v44, %v361
    %v365 = vmul.f32 %v45, %v361
    %v366 = vmul.f32 %v46, %v361
    %v367 = vmul.f32 %v47, %v361
    %v368 = vmul.f32 %v48, %v361
    %v369 = vmul.f32 %v49, %v361
    %378 = vrot.lane.b32.xlu0 %v362, 127
    %v379 = vpop.permute.xlu0 %378
    %380 = vrot.lane.b32.xlu0 %v363, 127
    %v381 = vpop.permute.xlu0 %380
    %382 = vrot.lane.b32.xlu0 %v364, 127
    %v383 = vpop.permute.xlu0 %382
    %384 = vrot.lane.b32.xlu0 %v365, 127
    %v385 = vpop.permute.xlu0 %384
    %386 = vrot.lane.b32.xlu0 %v366, 127
    %v387 = vpop.permute.xlu0 %386
    %388 = vrot.lane.b32.xlu0 %v367, 127
    %v389 = vpop.permute.xlu0 %388
    %390 = vrot.lane.b32.xlu0 %v368, 127
    %v391 = vpop.permute.xlu0 %390
    %392 = vrot.lane.b32.xlu0 %v369, 127
    %v393 = vpop.permute.xlu0 %392
    %v402 = vadd.f32 %v102, %v379
    %v403 = vadd.f32 %v103, %v381
    %v404 = vadd.f32 %v104, %v383
    %v405 = vadd.f32 %v105, %v385
    %v406 = vadd.f32 %v106, %v387
    %v407 = vadd.f32 %v107, %v389
    %v408 = vadd.f32 %v108, %v391
    %v409 = vadd.f32 %v109, %v393
    %s410 = sld [smem:[#allocation4 + $0x2]]
    %v411 = vstv %s410
    %v412 = vmul.f32 %v42, %v411
    %v413 = vmul.f32 %v43, %v411
    %v414 = vmul.f32 %v44, %v411
    %v415 = vmul.f32 %v45, %v411
    %v416 = vmul.f32 %v46, %v411
    %v417 = vmul.f32 %v47, %v411
    %v418 = vmul.f32 %v48, %v411
    %v419 = vmul.f32 %v49, %v411
    %428 = vrot.lane.b32.xlu0 %v412, 126
    %v429 = vpop.permute.xlu0 %428
    %430 = vrot.lane.b32.xlu0 %v413, 126
    %v431 = vpop.permute.xlu0 %430
    %432 = vrot.lane.b32.xlu0 %v414, 126
    %v433 = vpop.permute.xlu0 %432
    %434 = vrot.lane.b32.xlu0 %v415, 126
    %v435 = vpop.permute.xlu0 %434
    %436 = vrot.lane.b32.xlu0 %v416, 126
    %v437 = vpop.permute.xlu0 %436
    %438 = vrot.lane.b32.xlu0 %v417, 126
    %v439 = vpop.permute.xlu0 %438
    %440 = vrot.lane.b32.xlu0 %v418, 126
    %v441 = vpop.permute.xlu0 %440
    %442 = vrot.lane.b32.xlu0 %v419, 126
    %v443 = vpop.permute.xlu0 %442
    %v452 = vadd.f32 %v152, %v429
    %v453 = vadd.f32 %v153, %v431
    %v454 = vadd.f32 %v154, %v433
    %v455 = vadd.f32 %v155, %v435
    %v456 = vadd.f32 %v156, %v437
    %v457 = vadd.f32 %v157, %v439
    %v458 = vadd.f32 %v158, %v441
    %v459 = vadd.f32 %v159, %v443
    %s460 = sld [smem:[#allocation4 + $0xb]]
    %v461 = vstv %s460
    %v462 = vmul.f32 %v42, %v461
    %v463 = vmul.f32 %v43, %v461
    %v464 = vmul.f32 %v44, %v461
    %v465 = vmul.f32 %v45, %v461
    %v466 = vmul.f32 %v46, %v461
    %v467 = vmul.f32 %v47, %v461
    %v468 = vmul.f32 %v48, %v461
    %v469 = vmul.f32 %v49, %v461
    %478 = vrot.lane.b32.xlu0 %v462, 126
    %v479 = vpop.permute.xlu0 %478
    %480 = vrot.lane.b32.xlu0 %v463, 126
    %v481 = vpop.permute.xlu0 %480
    %482 = vrot.lane.b32.xlu0 %v464, 126
    %v483 = vpop.permute.xlu0 %482
    %484 = vrot.lane.b32.xlu0 %v465, 126
    %v485 = vpop.permute.xlu0 %484
    %486 = vrot.lane.b32.xlu0 %v466, 126
    %v487 = vpop.permute.xlu0 %486
    %488 = vrot.lane.b32.xlu0 %v467, 126
    %v489 = vpop.permute.xlu0 %488
    %490 = vrot.lane.b32.xlu0 %v468, 126
    %v491 = vpop.permute.xlu0 %490
    %492 = vrot.lane.b32.xlu0 %v469, 126
    %v493 = vpop.permute.xlu0 %492
    %v502 = vadd.f32 %v202, %v479
    %v503 = vadd.f32 %v203, %v481
    %v504 = vadd.f32 %v204, %v483
    %v505 = vadd.f32 %v205, %v485
    %v506 = vadd.f32 %v206, %v487
    %v507 = vadd.f32 %v207, %v489
    %v508 = vadd.f32 %v208, %v491
    %v509 = vadd.f32 %v209, %v493
    %s510 = sld [smem:[#allocation4 + $0x14]]
    %v511 = vstv %s510
    %v512 = vmul.f32 %v42, %v511
    %v513 = vmul.f32 %v43, %v511
    %v514 = vmul.f32 %v44, %v511
    %v515 = vmul.f32 %v45, %v511
    %v516 = vmul.f32 %v46, %v511
    %v517 = vmul.f32 %v47, %v511
    %v518 = vmul.f32 %v48, %v511
    %v519 = vmul.f32 %v49, %v511
    %528 = vrot.lane.b32.xlu0 %v512, 126
    %v529 = vpop.permute.xlu0 %528
    %530 = vrot.lane.b32.xlu0 %v513, 126
    %v531 = vpop.permute.xlu0 %530
    %532 = vrot.lane.b32.xlu0 %v514, 126
    %v533 = vpop.permute.xlu0 %532
    %534 = vrot.lane.b32.xlu0 %v515, 126
    %v535 = vpop.permute.xlu0 %534
    %536 = vrot.lane.b32.xlu0 %v516, 126
    %v537 = vpop.permute.xlu0 %536
    %538 = vrot.lane.b32.xlu0 %v517, 126
    %v539 = vpop.permute.xlu0 %538
    %540 = vrot.lane.b32.xlu0 %v518, 126
    %v541 = vpop.permute.xlu0 %540
    %542 = vrot.lane.b32.xlu0 %v519, 126
    %v543 = vpop.permute.xlu0 %542
    %v552 = vadd.f32 %v252, %v529
    %v553 = vadd.f32 %v253, %v531
    %v554 = vadd.f32 %v254, %v533
    %v555 = vadd.f32 %v255, %v535
    %v556 = vadd.f32 %v256, %v537
    %v557 = vadd.f32 %v257, %v539
    %v558 = vadd.f32 %v258, %v541
    %v559 = vadd.f32 %v259, %v543
    %s560 = sld [smem:[#allocation4 + $0x1d]]
    %v561 = vstv %s560
    %v562 = vmul.f32 %v42, %v561
    %v563 = vmul.f32 %v43, %v561
    %v564 = vmul.f32 %v44, %v561
    %v565 = vmul.f32 %v45, %v561
    %v566 = vmul.f32 %v46, %v561
    %v567 = vmul.f32 %v47, %v561
    %v568 = vmul.f32 %v48, %v561
    %v569 = vmul.f32 %v49, %v561
    %578 = vrot.lane.b32.xlu0 %v562, 126
    %v579 = vpop.permute.xlu0 %578
    %580 = vrot.lane.b32.xlu0 %v563, 126
    %v581 = vpop.permute.xlu0 %580
    %582 = vrot.lane.b32.xlu0 %v564, 126
    %v583 = vpop.permute.xlu0 %582
    %584 = vrot.lane.b32.xlu0 %v565, 126
    %v585 = vpop.permute.xlu0 %584
    %586 = vrot.lane.b32.xlu0 %v566, 126
    %v587 = vpop.permute.xlu0 %586
    %588 = vrot.lane.b32.xlu0 %v567, 126
    %v589 = vpop.permute.xlu0 %588
    %590 = vrot.lane.b32.xlu0 %v568, 126
    %v591 = vpop.permute.xlu0 %590
    %592 = vrot.lane.b32.xlu0 %v569, 126
    %v593 = vpop.permute.xlu0 %592
    %v602 = vadd.f32 %v302, %v579
    %v603 = vadd.f32 %v303, %v581
    %v604 = vadd.f32 %v304, %v583
    %v605 = vadd.f32 %v305, %v585
    %v606 = vadd.f32 %v306, %v587
    %v607 = vadd.f32 %v307, %v589
    %v608 = vadd.f32 %v308, %v591
    %v609 = vadd.f32 %v309, %v593
    %s610 = sld [smem:[#allocation4 + $0x26]]
    %v611 = vstv %s610
    %v612 = vmul.f32 %v42, %v611
    %v613 = vmul.f32 %v43, %v611
    %v614 = vmul.f32 %v44, %v611
    %v615 = vmul.f32 %v45, %v611
    %v616 = vmul.f32 %v46, %v611
    %v617 = vmul.f32 %v47, %v611
    %v618 = vmul.f32 %v48, %v611
    %v619 = vmul.f32 %v49, %v611
    %628 = vrot.lane.b32.xlu0 %v612, 126
    %v629 = vpop.permute.xlu0 %628
    %630 = vrot.lane.b32.xlu0 %v613, 126
    %v631 = vpop.permute.xlu0 %630
    %632 = vrot.lane.b32.xlu0 %v614, 126
    %v633 = vpop.permute.xlu0 %632
    %634 = vrot.lane.b32.xlu0 %v615, 126
    %v635 = vpop.permute.xlu0 %634
    %636 = vrot.lane.b32.xlu0 %v616, 126
    %v637 = vpop.permute.xlu0 %636
    %638 = vrot.lane.b32.xlu0 %v617, 126
    %v639 = vpop.permute.xlu0 %638
    %640 = vrot.lane.b32.xlu0 %v618, 126
    %v641 = vpop.permute.xlu0 %640
    %642 = vrot.lane.b32.xlu0 %v619, 126
    %v643 = vpop.permute.xlu0 %642
    %v652 = vadd.f32 %v352, %v629
    %v653 = vadd.f32 %v353, %v631
    %v654 = vadd.f32 %v354, %v633
    %v655 = vadd.f32 %v355, %v635
    %v656 = vadd.f32 %v356, %v637
    %v657 = vadd.f32 %v357, %v639
    %v658 = vadd.f32 %v358, %v641
    %v659 = vadd.f32 %v359, %v643
    %s660 = sld [smem:[#allocation4 + $0x2f]]
    %v661 = vstv %s660
    %v662 = vmul.f32 %v42, %v661
    %v663 = vmul.f32 %v43, %v661
    %v664 = vmul.f32 %v44, %v661
    %v665 = vmul.f32 %v45, %v661
    %v666 = vmul.f32 %v46, %v661
    %v667 = vmul.f32 %v47, %v661
    %v668 = vmul.f32 %v48, %v661
    %v669 = vmul.f32 %v49, %v661
    %678 = vrot.lane.b32.xlu0 %v662, 126
    %v679 = vpop.permute.xlu0 %678
    %680 = vrot.lane.b32.xlu0 %v663, 126
    %v681 = vpop.permute.xlu0 %680
    %682 = vrot.lane.b32.xlu0 %v664, 126
    %v683 = vpop.permute.xlu0 %682
    %684 = vrot.lane.b32.xlu0 %v665, 126
    %v685 = vpop.permute.xlu0 %684
    %686 = vrot.lane.b32.xlu0 %v666, 126
    %v687 = vpop.permute.xlu0 %686
    %688 = vrot.lane.b32.xlu0 %v667, 126
    %v689 = vpop.permute.xlu0 %688
    %690 = vrot.lane.b32.xlu0 %v668, 126
    %v691 = vpop.permute.xlu0 %690
    %692 = vrot.lane.b32.xlu0 %v669, 126
    %v693 = vpop.permute.xlu0 %692
    %v702 = vadd.f32 %v402, %v679
    %v703 = vadd.f32 %v403, %v681
    %v704 = vadd.f32 %v404, %v683
    %v705 = vadd.f32 %v405, %v685
    %v706 = vadd.f32 %v406, %v687
    %v707 = vadd.f32 %v407, %v689
    %v708 = vadd.f32 %v408, %v691
    %v709 = vadd.f32 %v409, %v693
    %s710 = sld [smem:[#allocation4 + $0x3]]
    %v711 = vstv %s710
    %v712 = vmul.f32 %v42, %v711
    %v713 = vmul.f32 %v43, %v711
    %v714 = vmul.f32 %v44, %v711
    %v715 = vmul.f32 %v45, %v711
    %v716 = vmul.f32 %v46, %v711
    %v717 = vmul.f32 %v47, %v711
    %v718 = vmul.f32 %v48, %v711
    %v719 = vmul.f32 %v49, %v711
    %vm728 = vcmask 1046528
    %v729 = vrot.slane %v712, 1
    %v730 = vrot.slane %v713, 1
    %v731 = vsel %vm728, %v729, %v730
    %v732 = vrot.slane %v714, 1
    %v733 = vsel %vm728, %v730, %v732
    %v734 = vrot.slane %v715, 1
    %v735 = vsel %vm728, %v732, %v734
    %v736 = vrot.slane %v716, 1
    %v737 = vrot.slane %v717, 1
    %v738 = vsel %vm728, %v736, %v737
    %v739 = vrot.slane %v718, 1
    %v740 = vsel %vm728, %v737, %v739
    %v741 = vrot.slane %v719, 1
    %v742 = vsel %vm728, %v739, %v741
    %v751 = vadd.f32 %v452, %v731
    %v752 = vadd.f32 %v453, %v733
    %v753 = vadd.f32 %v454, %v735
    %v754 = vadd.f32 %v455, %v734
    %v755 = vadd.f32 %v456, %v738
    %v756 = vadd.f32 %v457, %v740
    %v757 = vadd.f32 %v458, %v742
    %v758 = vadd.f32 %v459, %v741
    %s759 = sld [smem:[#allocation4 + $0xc]]
    %v760 = vstv %s759
    %v761 = vmul.f32 %v42, %v760
    %v762 = vmul.f32 %v43, %v760
    %v763 = vmul.f32 %v44, %v760
    %v764 = vmul.f32 %v45, %v760
    %v765 = vmul.f32 %v46, %v760
    %v766 = vmul.f32 %v47, %v760
    %v767 = vmul.f32 %v48, %v760
    %v768 = vmul.f32 %v49, %v760
    %v777 = vrot.slane %v761, 1
    %v778 = vrot.slane %v762, 1
    %v779 = vsel %vm728, %v777, %v778
    %v780 = vrot.slane %v763, 1
    %v781 = vsel %vm728, %v778, %v780
    %v782 = vrot.slane %v764, 1
    %v783 = vsel %vm728, %v780, %v782
    %v784 = vrot.slane %v765, 1
    %v785 = vrot.slane %v766, 1
    %v786 = vsel %vm728, %v784, %v785
    %v787 = vrot.slane %v767, 1
    %v788 = vsel %vm728, %v785, %v787
    %v789 = vrot.slane %v768, 1
    %v790 = vsel %vm728, %v787, %v789
    %v799 = vadd.f32 %v502, %v779
    %v800 = vadd.f32 %v503, %v781
    %v801 = vadd.f32 %v504, %v783
    %v802 = vadd.f32 %v505, %v782
    %v803 = vadd.f32 %v506, %v786
    %v804 = vadd.f32 %v507, %v788
    %v805 = vadd.f32 %v508, %v790
    %v806 = vadd.f32 %v509, %v789
    %s807 = sld [smem:[#allocation4 + $0x15]]
    %v808 = vstv %s807
    %v809 = vmul.f32 %v42, %v808
    %v810 = vmul.f32 %v43, %v808
    %v811 = vmul.f32 %v44, %v808
    %v812 = vmul.f32 %v45, %v808
    %v813 = vmul.f32 %v46, %v808
    %v814 = vmul.f32 %v47, %v808
    %v815 = vmul.f32 %v48, %v808
    %v816 = vmul.f32 %v49, %v808
    %v825 = vrot.slane %v809, 1
    %v826 = vrot.slane %v810, 1
    %v827 = vsel %vm728, %v825, %v826
    %v828 = vrot.slane %v811, 1
    %v829 = vsel %vm728, %v826, %v828
    %v830 = vrot.slane %v812, 1
    %v831 = vsel %vm728, %v828, %v830
    %v832 = vrot.slane %v813, 1
    %v833 = vrot.slane %v814, 1
    %v834 = vsel %vm728, %v832, %v833
    %v835 = vrot.slane %v815, 1
    %v836 = vsel %vm728, %v833, %v835
    %v837 = vrot.slane %v816, 1
    %v838 = vsel %vm728, %v835, %v837
    %v847 = vadd.f32 %v552, %v827
    %v848 = vadd.f32 %v553, %v829
    %v849 = vadd.f32 %v554, %v831
    %v850 = vadd.f32 %v555, %v830
    %v851 = vadd.f32 %v556, %v834
    %v852 = vadd.f32 %v557, %v836
    %v853 = vadd.f32 %v558, %v838
    %v854 = vadd.f32 %v559, %v837
    %s855 = sld [smem:[#allocation4 + $0x1e]]
    %v856 = vstv %s855
    %v857 = vmul.f32 %v42, %v856
    %v858 = vmul.f32 %v43, %v856
    %v859 = vmul.f32 %v44, %v856
    %v860 = vmul.f32 %v45, %v856
    %v861 = vmul.f32 %v46, %v856
    %v862 = vmul.f32 %v47, %v856
    %v863 = vmul.f32 %v48, %v856
    %v864 = vmul.f32 %v49, %v856
    %v873 = vrot.slane %v857, 1
    %v874 = vrot.slane %v858, 1
    %v875 = vsel %vm728, %v873, %v874
    %v876 = vrot.slane %v859, 1
    %v877 = vsel %vm728, %v874, %v876
    %v878 = vrot.slane %v860, 1
    %v879 = vsel %vm728, %v876, %v878
    %v880 = vrot.slane %v861, 1
    %v881 = vrot.slane %v862, 1
    %v882 = vsel %vm728, %v880, %v881
    %v883 = vrot.slane %v863, 1
    %v884 = vsel %vm728, %v881, %v883
    %v885 = vrot.slane %v864, 1
    %v886 = vsel %vm728, %v883, %v885
    %v895 = vadd.f32 %v602, %v875
    %v896 = vadd.f32 %v603, %v877
    %v897 = vadd.f32 %v604, %v879
    %v898 = vadd.f32 %v605, %v878
    %v899 = vadd.f32 %v606, %v882
    %v900 = vadd.f32 %v607, %v884
    %v901 = vadd.f32 %v608, %v886
    %v902 = vadd.f32 %v609, %v885
    %s903 = sld [smem:[#allocation4 + $0x27]]
    %v904 = vstv %s903
    %v905 = vmul.f32 %v42, %v904
    %v906 = vmul.f32 %v43, %v904
    %v907 = vmul.f32 %v44, %v904
    %v908 = vmul.f32 %v45, %v904
    %v909 = vmul.f32 %v46, %v904
    %v910 = vmul.f32 %v47, %v904
    %v911 = vmul.f32 %v48, %v904
    %v912 = vmul.f32 %v49, %v904
    %v921 = vrot.slane %v905, 1
    %v922 = vrot.slane %v906, 1
    %v923 = vsel %vm728, %v921, %v922
    %v924 = vrot.slane %v907, 1
    %v925 = vsel %vm728, %v922, %v924
    %v926 = vrot.slane %v908, 1
    %v927 = vsel %vm728, %v924, %v926
    %v928 = vrot.slane %v909, 1
    %v929 = vrot.slane %v910, 1
    %v930 = vsel %vm728, %v928, %v929
    %v931 = vrot.slane %v911, 1
    %v932 = vsel %vm728, %v929, %v931
    %v933 = vrot.slane %v912, 1
    %v934 = vsel %vm728, %v931, %v933
    %v943 = vadd.f32 %v652, %v923
    %v944 = vadd.f32 %v653, %v925
    %v945 = vadd.f32 %v654, %v927
    %v946 = vadd.f32 %v655, %v926
    %v947 = vadd.f32 %v656, %v930
    %v948 = vadd.f32 %v657, %v932
    %v949 = vadd.f32 %v658, %v934
    %v950 = vadd.f32 %v659, %v933
    %s951 = sld [smem:[#allocation4 + $0x30]]
    %v952 = vstv %s951
    %v953 = vmul.f32 %v42, %v952
    %v954 = vmul.f32 %v43, %v952
    %v955 = vmul.f32 %v44, %v952
    %v956 = vmul.f32 %v45, %v952
    %v957 = vmul.f32 %v46, %v952
    %v958 = vmul.f32 %v47, %v952
    %v959 = vmul.f32 %v48, %v952
    %v960 = vmul.f32 %v49, %v952
    %v969 = vrot.slane %v953, 1
    %v970 = vrot.slane %v954, 1
    %v971 = vsel %vm728, %v969, %v970
    %v972 = vrot.slane %v955, 1
    %v973 = vsel %vm728, %v970, %v972
    %v974 = vrot.slane %v956, 1
    %v975 = vsel %vm728, %v972, %v974
    %v976 = vrot.slane %v957, 1
    %v977 = vrot.slane %v958, 1
    %v978 = vsel %vm728, %v976, %v977
    %v979 = vrot.slane %v959, 1
    %v980 = vsel %vm728, %v977, %v979
    %v981 = vrot.slane %v960, 1
    %v982 = vsel %vm728, %v979, %v981
    %v991 = vadd.f32 %v702, %v971
    %v992 = vadd.f32 %v703, %v973
    %v993 = vadd.f32 %v704, %v975
    %v994 = vadd.f32 %v705, %v974
    %v995 = vadd.f32 %v706, %v978
    %v996 = vadd.f32 %v707, %v980
    %v997 = vadd.f32 %v708, %v982
    %v998 = vadd.f32 %v709, %v981
    %s999 = sld [smem:[#allocation4 + $0x4]]
    %v1000 = vstv %s999
    %v1001 = vmul.f32 %v42, %v1000
    %v1002 = vmul.f32 %v43, %v1000
    %v1003 = vmul.f32 %v44, %v1000
    %v1004 = vmul.f32 %v45, %v1000
    %v1005 = vmul.f32 %v46, %v1000
    %v1006 = vmul.f32 %v47, %v1000
    %v1007 = vmul.f32 %v48, %v1000
    %v1008 = vmul.f32 %v49, %v1000
    %v1017 = vrot.slane %v1001, 1
    %v1018 = vrot.slane %v1002, 1
    %v1019 = vsel %vm728, %v1017, %v1018
    %v1020 = vrot.slane %v1003, 1
    %v1021 = vsel %vm728, %v1018, %v1020
    %v1022 = vrot.slane %v1004, 1
    %v1023 = vsel %vm728, %v1020, %v1022
    %v1024 = vrot.slane %v1005, 1
    %v1025 = vrot.slane %v1006, 1
    %v1026 = vsel %vm728, %v1024, %v1025
    %v1027 = vrot.slane %v1007, 1
    %v1028 = vsel %vm728, %v1025, %v1027
    %v1029 = vrot.slane %v1008, 1
    %v1030 = vsel %vm728, %v1027, %v1029
    %1031 = vrot.lane.b32.xlu0 %v1019, 127
    %v1032 = vpop.permute.xlu0 %1031
    %1033 = vrot.lane.b32.xlu0 %v1021, 127
    %v1034 = vpop.permute.xlu0 %1033
    %1035 = vrot.lane.b32.xlu0 %v1023, 127
    %v1036 = vpop.permute.xlu0 %1035
    %1037 = vrot.lane.b32.xlu0 %v1022, 127
    %v1038 = vpop.permute.xlu0 %1037
    %1039 = vrot.lane.b32.xlu0 %v1026, 127
    %v1040 = vpop.permute.xlu0 %1039
    %1041 = vrot.lane.b32.xlu0 %v1028, 127
    %v1042 = vpop.permute.xlu0 %1041
    %1043 = vrot.lane.b32.xlu0 %v1030, 127
    %v1044 = vpop.permute.xlu0 %1043
    %1045 = vrot.lane.b32.xlu0 %v1029, 127
    %v1046 = vpop.permute.xlu0 %1045
    %v1055 = vadd.f32 %v751, %v1032
    %v1056 = vadd.f32 %v752, %v1034
    %v1057 = vadd.f32 %v753, %v1036
    %v1058 = vadd.f32 %v754, %v1038
    %v1059 = vadd.f32 %v755, %v1040
    %v1060 = vadd.f32 %v756, %v1042
    %v1061 = vadd.f32 %v757, %v1044
    %v1062 = vadd.f32 %v758, %v1046
    %s1063 = sld [smem:[#allocation4 + $0xd]]
    %v1064 = vstv %s1063
    %v1065 = vmul.f32 %v42, %v1064
    %v1066 = vmul.f32 %v43, %v1064
    %v1067 = vmul.f32 %v44, %v1064
    %v1068 = vmul.f32 %v45, %v1064
    %v1069 = vmul.f32 %v46, %v1064
    %v1070 = vmul.f32 %v47, %v1064
    %v1071 = vmul.f32 %v48, %v1064
    %v1072 = vmul.f32 %v49, %v1064
    %v1081 = vrot.slane %v1065, 1
    %v1082 = vrot.slane %v1066, 1
    %v1083 = vsel %vm728, %v1081, %v1082
    %v1084 = vrot.slane %v1067, 1
    %v1085 = vsel %vm728, %v1082, %v1084
    %v1086 = vrot.slane %v1068, 1
    %v1087 = vsel %vm728, %v1084, %v1086
    %v1088 = vrot.slane %v1069, 1
    %v1089 = vrot.slane %v1070, 1
    %v1090 = vsel %vm728, %v1088, %v1089
    %v1091 = vrot.slane %v1071, 1
    %v1092 = vsel %vm728, %v1089, %v1091
    %v1093 = vrot.slane %v1072, 1
    %v1094 = vsel %vm728, %v1091, %v1093
    %1095 = vrot.lane.b32.xlu0 %v1083, 127
    %v1096 = vpop.permute.xlu0 %1095
    %1097 = vrot.lane.b32.xlu0 %v1085, 127
    %v1098 = vpop.permute.xlu0 %1097
    %1099 = vrot.lane.b32.xlu0 %v1087, 127
    %v1100 = vpop.permute.xlu0 %1099
    %1101 = vrot.lane.b32.xlu0 %v1086, 127
    %v1102 = vpop.permute.xlu0 %1101
    %1103 = vrot.lane.b32.xlu0 %v1090, 127
    %v1104 = vpop.permute.xlu0 %1103
    %1105 = vrot.lane.b32.xlu0 %v1092, 127
    %v1106 = vpop.permute.xlu0 %1105
    %1107 = vrot.lane.b32.xlu0 %v1094, 127
    %v1108 = vpop.permute.xlu0 %1107
    %1109 = vrot.lane.b32.xlu0 %v1093, 127
    %v1110 = vpop.permute.xlu0 %1109
    %v1119 = vadd.f32 %v799, %v1096
    %v1120 = vadd.f32 %v800, %v1098
    %v1121 = vadd.f32 %v801, %v1100
    %v1122 = vadd.f32 %v802, %v1102
    %v1123 = vadd.f32 %v803, %v1104
    %v1124 = vadd.f32 %v804, %v1106
    %v1125 = vadd.f32 %v805, %v1108
    %v1126 = vadd.f32 %v806, %v1110
    %s1127 = sld [smem:[#allocation4 + $0x16]]
    %v1128 = vstv %s1127
    %v1129 = vmul.f32 %v42, %v1128
    %v1130 = vmul.f32 %v43, %v1128
    %v1131 = vmul.f32 %v44, %v1128
    %v1132 = vmul.f32 %v45, %v1128
    %v1133 = vmul.f32 %v46, %v1128
    %v1134 = vmul.f32 %v47, %v1128
    %v1135 = vmul.f32 %v48, %v1128
    %v1136 = vmul.f32 %v49, %v1128
    %v1145 = vrot.slane %v1129, 1
    %v1146 = vrot.slane %v1130, 1
    %v1147 = vsel %vm728, %v1145, %v1146
    %v1148 = vrot.slane %v1131, 1
    %v1149 = vsel %vm728, %v1146, %v1148
    %v1150 = vrot.slane %v1132, 1
    %v1151 = vsel %vm728, %v1148, %v1150
    %v1152 = vrot.slane %v1133, 1
    %v1153 = vrot.slane %v1134, 1
    %v1154 = vsel %vm728, %v1152, %v1153
    %v1155 = vrot.slane %v1135, 1
    %v1156 = vsel %vm728, %v1153, %v1155
    %v1157 = vrot.slane %v1136, 1
    %v1158 = vsel %vm728, %v1155, %v1157
    %1159 = vrot.lane.b32.xlu0 %v1147, 127
    %v1160 = vpop.permute.xlu0 %1159
    %1161 = vrot.lane.b32.xlu0 %v1149, 127
    %v1162 = vpop.permute.xlu0 %1161
    %1163 = vrot.lane.b32.xlu0 %v1151, 127
    %v1164 = vpop.permute.xlu0 %1163
    %1165 = vrot.lane.b32.xlu0 %v1150, 127
    %v1166 = vpop.permute.xlu0 %1165
    %1167 = vrot.lane.b32.xlu0 %v1154, 127
    %v1168 = vpop.permute.xlu0 %1167
    %1169 = vrot.lane.b32.xlu0 %v1156, 127
    %v1170 = vpop.permute.xlu0 %1169
    %1171 = vrot.lane.b32.xlu0 %v1158, 127
    %v1172 = vpop.permute.xlu0 %1171
    %1173 = vrot.lane.b32.xlu0 %v1157, 127
    %v1174 = vpop.permute.xlu0 %1173
    %v1183 = vadd.f32 %v847, %v1160
    %v1184 = vadd.f32 %v848, %v1162
    %v1185 = vadd.f32 %v849, %v1164
    %v1186 = vadd.f32 %v850, %v1166
    %v1187 = vadd.f32 %v851, %v1168
    %v1188 = vadd.f32 %v852, %v1170
    %v1189 = vadd.f32 %v853, %v1172
    %v1190 = vadd.f32 %v854, %v1174
    %s1191 = sld [smem:[#allocation4 + $0x1f]]
    %v1192 = vstv %s1191
    %v1193 = vmul.f32 %v42, %v1192
    %v1194 = vmul.f32 %v43, %v1192
    %v1195 = vmul.f32 %v44, %v1192
    %v1196 = vmul.f32 %v45, %v1192
    %v1197 = vmul.f32 %v46, %v1192
    %v1198 = vmul.f32 %v47, %v1192
    %v1199 = vmul.f32 %v48, %v1192
    %v1200 = vmul.f32 %v49, %v1192
    %v1209 = vrot.slane %v1193, 1
    %v1210 = vrot.slane %v1194, 1
    %v1211 = vsel %vm728, %v1209, %v1210
    %v1212 = vrot.slane %v1195, 1
    %v1213 = vsel %vm728, %v1210, %v1212
    %v1214 = vrot.slane %v1196, 1
    %v1215 = vsel %vm728, %v1212, %v1214
    %v1216 = vrot.slane %v1197, 1
    %v1217 = vrot.slane %v1198, 1
    %v1218 = vsel %vm728, %v1216, %v1217
    %v1219 = vrot.slane %v1199, 1
    %v1220 = vsel %vm728, %v1217, %v1219
    %v1221 = vrot.slane %v1200, 1
    %v1222 = vsel %vm728, %v1219, %v1221
    %1223 = vrot.lane.b32.xlu0 %v1211, 127
    %v1224 = vpop.permute.xlu0 %1223
    %1225 = vrot.lane.b32.xlu0 %v1213, 127
    %v1226 = vpop.permute.xlu0 %1225
    %1227 = vrot.lane.b32.xlu0 %v1215, 127
    %v1228 = vpop.permute.xlu0 %1227
    %1229 = vrot.lane.b32.xlu0 %v1214, 127
    %v1230 = vpop.permute.xlu0 %1229
    %1231 = vrot.lane.b32.xlu0 %v1218, 127
    %v1232 = vpop.permute.xlu0 %1231
    %1233 = vrot.lane.b32.xlu0 %v1220, 127
    %v1234 = vpop.permute.xlu0 %1233
    %1235 = vrot.lane.b32.xlu0 %v1222, 127
    %v1236 = vpop.permute.xlu0 %1235
    %1237 = vrot.lane.b32.xlu0 %v1221, 127
    %v1238 = vpop.permute.xlu0 %1237
    %v1247 = vadd.f32 %v895, %v1224
    %v1248 = vadd.f32 %v896, %v1226
    %v1249 = vadd.f32 %v897, %v1228
    %v1250 = vadd.f32 %v898, %v1230
    %v1251 = vadd.f32 %v899, %v1232
    %v1252 = vadd.f32 %v900, %v1234
    %v1253 = vadd.f32 %v901, %v1236
    %v1254 = vadd.f32 %v902, %v1238
    %s1255 = sld [smem:[#allocation4 + $0x28]]
    %v1256 = vstv %s1255
    %v1257 = vmul.f32 %v42, %v1256
    %v1258 = vmul.f32 %v43, %v1256
    %v1259 = vmul.f32 %v44, %v1256
    %v1260 = vmul.f32 %v45, %v1256
    %v1261 = vmul.f32 %v46, %v1256
    %v1262 = vmul.f32 %v47, %v1256
    %v1263 = vmul.f32 %v48, %v1256
    %v1264 = vmul.f32 %v49, %v1256
    %v1273 = vrot.slane %v1257, 1
    %v1274 = vrot.slane %v1258, 1
    %v1275 = vsel %vm728, %v1273, %v1274
    %v1276 = vrot.slane %v1259, 1
    %v1277 = vsel %vm728, %v1274, %v1276
    %v1278 = vrot.slane %v1260, 1
    %v1279 = vsel %vm728, %v1276, %v1278
    %v1280 = vrot.slane %v1261, 1
    %v1281 = vrot.slane %v1262, 1
    %v1282 = vsel %vm728, %v1280, %v1281
    %v1283 = vrot.slane %v1263, 1
    %v1284 = vsel %vm728, %v1281, %v1283
    %v1285 = vrot.slane %v1264, 1
    %v1286 = vsel %vm728, %v1283, %v1285
    %1287 = vrot.lane.b32.xlu0 %v1275, 127
    %v1288 = vpop.permute.xlu0 %1287
    %1289 = vrot.lane.b32.xlu0 %v1277, 127
    %v1290 = vpop.permute.xlu0 %1289
    %1291 = vrot.lane.b32.xlu0 %v1279, 127
    %v1292 = vpop.permute.xlu0 %1291
    %1293 = vrot.lane.b32.xlu0 %v1278, 127
    %v1294 = vpop.permute.xlu0 %1293
    %1295 = vrot.lane.b32.xlu0 %v1282, 127
    %v1296 = vpop.permute.xlu0 %1295
    %1297 = vrot.lane.b32.xlu0 %v1284, 127
    %v1298 = vpop.permute.xlu0 %1297
    %1299 = vrot.lane.b32.xlu0 %v1286, 127
    %v1300 = vpop.permute.xlu0 %1299
    %1301 = vrot.lane.b32.xlu0 %v1285, 127
    %v1302 = vpop.permute.xlu0 %1301
    %v1311 = vadd.f32 %v943, %v1288
    %v1312 = vadd.f32 %v944, %v1290
    %v1313 = vadd.f32 %v945, %v1292
    %v1314 = vadd.f32 %v946, %v1294
    %v1315 = vadd.f32 %v947, %v1296
    %v1316 = vadd.f32 %v948, %v1298
    %v1317 = vadd.f32 %v949, %v1300
    %v1318 = vadd.f32 %v950, %v1302
    %s1319 = sld [smem:[#allocation4 + $0x31]]
    %v1320 = vstv %s1319
    %v1321 = vmul.f32 %v42, %v1320
    %v1322 = vmul.f32 %v43, %v1320
    %v1323 = vmul.f32 %v44, %v1320
    %v1324 = vmul.f32 %v45, %v1320
    %v1325 = vmul.f32 %v46, %v1320
    %v1326 = vmul.f32 %v47, %v1320
    %v1327 = vmul.f32 %v48, %v1320
    %v1328 = vmul.f32 %v49, %v1320
    %v1337 = vrot.slane %v1321, 1
    %v1338 = vrot.slane %v1322, 1
    %v1339 = vsel %vm728, %v1337, %v1338
    %v1340 = vrot.slane %v1323, 1
    %v1341 = vsel %vm728, %v1338, %v1340
    %v1342 = vrot.slane %v1324, 1
    %v1343 = vsel %vm728, %v1340, %v1342
    %v1344 = vrot.slane %v1325, 1
    %v1345 = vrot.slane %v1326, 1
    %v1346 = vsel %vm728, %v1344, %v1345
    %v1347 = vrot.slane %v1327, 1
    %v1348 = vsel %vm728, %v1345, %v1347
    %v1349 = vrot.slane %v1328, 1
    %v1350 = vsel %vm728, %v1347, %v1349
    %1351 = vrot.lane.b32.xlu0 %v1339, 127
    %v1352 = vpop.permute.xlu0 %1351
    %1353 = vrot.lane.b32.xlu0 %v1341, 127
    %v1354 = vpop.permute.xlu0 %1353
    %1355 = vrot.lane.b32.xlu0 %v1343, 127
    %v1356 = vpop.permute.xlu0 %1355
    %1357 = vrot.lane.b32.xlu0 %v1342, 127
    %v1358 = vpop.permute.xlu0 %1357
    %1359 = vrot.lane.b32.xlu0 %v1346, 127
    %v1360 = vpop.permute.xlu0 %1359
    %1361 = vrot.lane.b32.xlu0 %v1348, 127
    %v1362 = vpop.permute.xlu0 %1361
    %1363 = vrot.lane.b32.xlu0 %v1350, 127
    %v1364 = vpop.permute.xlu0 %1363
    %1365 = vrot.lane.b32.xlu0 %v1349, 127
    %v1366 = vpop.permute.xlu0 %1365
    %v1375 = vadd.f32 %v991, %v1352
    %v1376 = vadd.f32 %v992, %v1354
    %v1377 = vadd.f32 %v993, %v1356
    %v1378 = vadd.f32 %v994, %v1358
    %v1379 = vadd.f32 %v995, %v1360
    %v1380 = vadd.f32 %v996, %v1362
    %v1381 = vadd.f32 %v997, %v1364
    %v1382 = vadd.f32 %v998, %v1366
    %s1383 = sld [smem:[#allocation4 + $0x5]]
    %v1384 = vstv %s1383
    %v1385 = vmul.f32 %v42, %v1384
    %v1386 = vmul.f32 %v43, %v1384
    %v1387 = vmul.f32 %v44, %v1384
    %v1388 = vmul.f32 %v45, %v1384
    %v1389 = vmul.f32 %v46, %v1384
    %v1390 = vmul.f32 %v47, %v1384
    %v1391 = vmul.f32 %v48, %v1384
    %v1392 = vmul.f32 %v49, %v1384
    %v1401 = vrot.slane %v1385, 1
    %v1402 = vrot.slane %v1386, 1
    %v1403 = vsel %vm728, %v1401, %v1402
    %v1404 = vrot.slane %v1387, 1
    %v1405 = vsel %vm728, %v1402, %v1404
    %v1406 = vrot.slane %v1388, 1
    %v1407 = vsel %vm728, %v1404, %v1406
    %v1408 = vrot.slane %v1389, 1
    %v1409 = vrot.slane %v1390, 1
    %v1410 = vsel %vm728, %v1408, %v1409
    %v1411 = vrot.slane %v1391, 1
    %v1412 = vsel %vm728, %v1409, %v1411
    %v1413 = vrot.slane %v1392, 1
    %v1414 = vsel %vm728, %v1411, %v1413
    %1415 = vrot.lane.b32.xlu0 %v1403, 126
    %v1416 = vpop.permute.xlu0 %1415
    %1417 = vrot.lane.b32.xlu0 %v1405, 126
    %v1418 = vpop.permute.xlu0 %1417
    %1419 = vrot.lane.b32.xlu0 %v1407, 126
    %v1420 = vpop.permute.xlu0 %1419
    %1421 = vrot.lane.b32.xlu0 %v1406, 126
    %v1422 = vpop.permute.xlu0 %1421
    %1423 = vrot.lane.b32.xlu0 %v1410, 126
    %v1424 = vpop.permute.xlu0 %1423
    %1425 = vrot.lane.b32.xlu0 %v1412, 126
    %v1426 = vpop.permute.xlu0 %1425
    %1427 = vrot.lane.b32.xlu0 %v1414, 126
    %v1428 = vpop.permute.xlu0 %1427
    %1429 = vrot.lane.b32.xlu0 %v1413, 126
    %v1430 = vpop.permute.xlu0 %1429
    %v1439 = vadd.f32 %v1055, %v1416
    %v1440 = vadd.f32 %v1056, %v1418
    %v1441 = vadd.f32 %v1057, %v1420
    %v1442 = vadd.f32 %v1058, %v1422
    %v1443 = vadd.f32 %v1059, %v1424
    %v1444 = vadd.f32 %v1060, %v1426
    %v1445 = vadd.f32 %v1061, %v1428
    %v1446 = vadd.f32 %v1062, %v1430
    %s1447 = sld [smem:[#allocation4 + $0xe]]
    %v1448 = vstv %s1447
    %v1449 = vmul.f32 %v42, %v1448
    %v1450 = vmul.f32 %v43, %v1448
    %v1451 = vmul.f32 %v44, %v1448
    %v1452 = vmul.f32 %v45, %v1448
    %v1453 = vmul.f32 %v46, %v1448
    %v1454 = vmul.f32 %v47, %v1448
    %v1455 = vmul.f32 %v48, %v1448
    %v1456 = vmul.f32 %v49, %v1448
    %v1465 = vrot.slane %v1449, 1
    %v1466 = vrot.slane %v1450, 1
    %v1467 = vsel %vm728, %v1465, %v1466
    %v1468 = vrot.slane %v1451, 1
    %v1469 = vsel %vm728, %v1466, %v1468
    %v1470 = vrot.slane %v1452, 1
    %v1471 = vsel %vm728, %v1468, %v1470
    %v1472 = vrot.slane %v1453, 1
    %v1473 = vrot.slane %v1454, 1
    %v1474 = vsel %vm728, %v1472, %v1473
    %v1475 = vrot.slane %v1455, 1
    %v1476 = vsel %vm728, %v1473, %v1475
    %v1477 = vrot.slane %v1456, 1
    %v1478 = vsel %vm728, %v1475, %v1477
    %1479 = vrot.lane.b32.xlu0 %v1467, 126
    %v1480 = vpop.permute.xlu0 %1479
    %1481 = vrot.lane.b32.xlu0 %v1469, 126
    %v1482 = vpop.permute.xlu0 %1481
    %1483 = vrot.lane.b32.xlu0 %v1471, 126
    %v1484 = vpop.permute.xlu0 %1483
    %1485 = vrot.lane.b32.xlu0 %v1470, 126
    %v1486 = vpop.permute.xlu0 %1485
    %1487 = vrot.lane.b32.xlu0 %v1474, 126
    %v1488 = vpop.permute.xlu0 %1487
    %1489 = vrot.lane.b32.xlu0 %v1476, 126
    %v1490 = vpop.permute.xlu0 %1489
    %1491 = vrot.lane.b32.xlu0 %v1478, 126
    %v1492 = vpop.permute.xlu0 %1491
    %1493 = vrot.lane.b32.xlu0 %v1477, 126
    %v1494 = vpop.permute.xlu0 %1493
    %v1503 = vadd.f32 %v1119, %v1480
    %v1504 = vadd.f32 %v1120, %v1482
    %v1505 = vadd.f32 %v1121, %v1484
    %v1506 = vadd.f32 %v1122, %v1486
    %v1507 = vadd.f32 %v1123, %v1488
    %v1508 = vadd.f32 %v1124, %v1490
    %v1509 = vadd.f32 %v1125, %v1492
    %v1510 = vadd.f32 %v1126, %v1494
    %s1511 = sld [smem:[#allocation4 + $0x17]]
    %v1512 = vstv %s1511
    %v1513 = vmul.f32 %v42, %v1512
    %v1514 = vmul.f32 %v43, %v1512
    %v1515 = vmul.f32 %v44, %v1512
    %v1516 = vmul.f32 %v45, %v1512
    %v1517 = vmul.f32 %v46, %v1512
    %v1518 = vmul.f32 %v47, %v1512
    %v1519 = vmul.f32 %v48, %v1512
    %v1520 = vmul.f32 %v49, %v1512
    %v1529 = vrot.slane %v1513, 1
    %v1530 = vrot.slane %v1514, 1
    %v1531 = vsel %vm728, %v1529, %v1530
    %v1532 = vrot.slane %v1515, 1
    %v1533 = vsel %vm728, %v1530, %v1532
    %v1534 = vrot.slane %v1516, 1
    %v1535 = vsel %vm728, %v1532, %v1534
    %v1536 = vrot.slane %v1517, 1
    %v1537 = vrot.slane %v1518, 1
    %v1538 = vsel %vm728, %v1536, %v1537
    %v1539 = vrot.slane %v1519, 1
    %v1540 = vsel %vm728, %v1537, %v1539
    %v1541 = vrot.slane %v1520, 1
    %v1542 = vsel %vm728, %v1539, %v1541
    %1543 = vrot.lane.b32.xlu0 %v1531, 126
    %v1544 = vpop.permute.xlu0 %1543
    %1545 = vrot.lane.b32.xlu0 %v1533, 126
    %v1546 = vpop.permute.xlu0 %1545
    %1547 = vrot.lane.b32.xlu0 %v1535, 126
    %v1548 = vpop.permute.xlu0 %1547
    %1549 = vrot.lane.b32.xlu0 %v1534, 126
    %v1550 = vpop.permute.xlu0 %1549
    %1551 = vrot.lane.b32.xlu0 %v1538, 126
    %v1552 = vpop.permute.xlu0 %1551
    %1553 = vrot.lane.b32.xlu0 %v1540, 126
    %v1554 = vpop.permute.xlu0 %1553
    %1555 = vrot.lane.b32.xlu0 %v1542, 126
    %v1556 = vpop.permute.xlu0 %1555
    %1557 = vrot.lane.b32.xlu0 %v1541, 126
    %v1558 = vpop.permute.xlu0 %1557
    %v1567 = vadd.f32 %v1183, %v1544
    %v1568 = vadd.f32 %v1184, %v1546
    %v1569 = vadd.f32 %v1185, %v1548
    %v1570 = vadd.f32 %v1186, %v1550
    %v1571 = vadd.f32 %v1187, %v1552
    %v1572 = vadd.f32 %v1188, %v1554
    %v1573 = vadd.f32 %v1189, %v1556
    %v1574 = vadd.f32 %v1190, %v1558
    %s1575 = sld [smem:[#allocation4 + $0x20]]
    %v1576 = vstv %s1575
    %v1577 = vmul.f32 %v42, %v1576
    %v1578 = vmul.f32 %v43, %v1576
    %v1579 = vmul.f32 %v44, %v1576
    %v1580 = vmul.f32 %v45, %v1576
    %v1581 = vmul.f32 %v46, %v1576
    %v1582 = vmul.f32 %v47, %v1576
    %v1583 = vmul.f32 %v48, %v1576
    %v1584 = vmul.f32 %v49, %v1576
    %v1593 = vrot.slane %v1577, 1
    %v1594 = vrot.slane %v1578, 1
    %v1595 = vsel %vm728, %v1593, %v1594
    %v1596 = vrot.slane %v1579, 1
    %v1597 = vsel %vm728, %v1594, %v1596
    %v1598 = vrot.slane %v1580, 1
    %v1599 = vsel %vm728, %v1596, %v1598
    %v1600 = vrot.slane %v1581, 1
    %v1601 = vrot.slane %v1582, 1
    %v1602 = vsel %vm728, %v1600, %v1601
    %v1603 = vrot.slane %v1583, 1
    %v1604 = vsel %vm728, %v1601, %v1603
    %v1605 = vrot.slane %v1584, 1
    %v1606 = vsel %vm728, %v1603, %v1605
    %1607 = vrot.lane.b32.xlu0 %v1595, 126
    %v1608 = vpop.permute.xlu0 %1607
    %1609 = vrot.lane.b32.xlu0 %v1597, 126
    %v1610 = vpop.permute.xlu0 %1609
    %1611 = vrot.lane.b32.xlu0 %v1599, 126
    %v1612 = vpop.permute.xlu0 %1611
    %1613 = vrot.lane.b32.xlu0 %v1598, 126
    %v1614 = vpop.permute.xlu0 %1613
    %1615 = vrot.lane.b32.xlu0 %v1602, 126
    %v1616 = vpop.permute.xlu0 %1615
    %1617 = vrot.lane.b32.xlu0 %v1604, 126
    %v1618 = vpop.permute.xlu0 %1617
    %1619 = vrot.lane.b32.xlu0 %v1606, 126
    %v1620 = vpop.permute.xlu0 %1619
    %1621 = vrot.lane.b32.xlu0 %v1605, 126
    %v1622 = vpop.permute.xlu0 %1621
    %v1631 = vadd.f32 %v1247, %v1608
    %v1632 = vadd.f32 %v1248, %v1610
    %v1633 = vadd.f32 %v1249, %v1612
    %v1634 = vadd.f32 %v1250, %v1614
    %v1635 = vadd.f32 %v1251, %v1616
    %v1636 = vadd.f32 %v1252, %v1618
    %v1637 = vadd.f32 %v1253, %v1620
    %v1638 = vadd.f32 %v1254, %v1622
    %s1639 = sld [smem:[#allocation4 + $0x29]]
    %v1640 = vstv %s1639
    %v1641 = vmul.f32 %v42, %v1640
    %v1642 = vmul.f32 %v43, %v1640
    %v1643 = vmul.f32 %v44, %v1640
    %v1644 = vmul.f32 %v45, %v1640
    %v1645 = vmul.f32 %v46, %v1640
    %v1646 = vmul.f32 %v47, %v1640
    %v1647 = vmul.f32 %v48, %v1640
    %v1648 = vmul.f32 %v49, %v1640
    %v1657 = vrot.slane %v1641, 1
    %v1658 = vrot.slane %v1642, 1
    %v1659 = vsel %vm728, %v1657, %v1658
    %v1660 = vrot.slane %v1643, 1
    %v1661 = vsel %vm728, %v1658, %v1660
    %v1662 = vrot.slane %v1644, 1
    %v1663 = vsel %vm728, %v1660, %v1662
    %v1664 = vrot.slane %v1645, 1
    %v1665 = vrot.slane %v1646, 1
    %v1666 = vsel %vm728, %v1664, %v1665
    %v1667 = vrot.slane %v1647, 1
    %v1668 = vsel %vm728, %v1665, %v1667
    %v1669 = vrot.slane %v1648, 1
    %v1670 = vsel %vm728, %v1667, %v1669
    %1671 = vrot.lane.b32.xlu0 %v1659, 126
    %v1672 = vpop.permute.xlu0 %1671
    %1673 = vrot.lane.b32.xlu0 %v1661, 126
    %v1674 = vpop.permute.xlu0 %1673
    %1675 = vrot.lane.b32.xlu0 %v1663, 126
    %v1676 = vpop.permute.xlu0 %1675
    %1677 = vrot.lane.b32.xlu0 %v1662, 126
    %v1678 = vpop.permute.xlu0 %1677
    %1679 = vrot.lane.b32.xlu0 %v1666, 126
    %v1680 = vpop.permute.xlu0 %1679
    %1681 = vrot.lane.b32.xlu0 %v1668, 126
    %v1682 = vpop.permute.xlu0 %1681
    %1683 = vrot.lane.b32.xlu0 %v1670, 126
    %v1684 = vpop.permute.xlu0 %1683
    %1685 = vrot.lane.b32.xlu0 %v1669, 126
    %v1686 = vpop.permute.xlu0 %1685
    %v1695 = vadd.f32 %v1311, %v1672
    %v1696 = vadd.f32 %v1312, %v1674
    %v1697 = vadd.f32 %v1313, %v1676
    %v1698 = vadd.f32 %v1314, %v1678
    %v1699 = vadd.f32 %v1315, %v1680
    %v1700 = vadd.f32 %v1316, %v1682
    %v1701 = vadd.f32 %v1317, %v1684
    %v1702 = vadd.f32 %v1318, %v1686
    %s1703 = sld [smem:[#allocation4 + $0x32]]
    %v1704 = vstv %s1703
    %v1705 = vmul.f32 %v42, %v1704
    %v1706 = vmul.f32 %v43, %v1704
    %v1707 = vmul.f32 %v44, %v1704
    %v1708 = vmul.f32 %v45, %v1704
    %v1709 = vmul.f32 %v46, %v1704
    %v1710 = vmul.f32 %v47, %v1704
    %v1711 = vmul.f32 %v48, %v1704
    %v1712 = vmul.f32 %v49, %v1704
    %v1721 = vrot.slane %v1705, 1
    %v1722 = vrot.slane %v1706, 1
    %v1723 = vsel %vm728, %v1721, %v1722
    %v1724 = vrot.slane %v1707, 1
    %v1725 = vsel %vm728, %v1722, %v1724
    %v1726 = vrot.slane %v1708, 1
    %v1727 = vsel %vm728, %v1724, %v1726
    %v1728 = vrot.slane %v1709, 1
    %v1729 = vrot.slane %v1710, 1
    %v1730 = vsel %vm728, %v1728, %v1729
    %v1731 = vrot.slane %v1711, 1
    %v1732 = vsel %vm728, %v1729, %v1731
    %v1733 = vrot.slane %v1712, 1
    %v1734 = vsel %vm728, %v1731, %v1733
    %1735 = vrot.lane.b32.xlu0 %v1723, 126
    %v1736 = vpop.permute.xlu0 %1735
    %1737 = vrot.lane.b32.xlu0 %v1725, 126
    %v1738 = vpop.permute.xlu0 %1737
    %1739 = vrot.lane.b32.xlu0 %v1727, 126
    %v1740 = vpop.permute.xlu0 %1739
    %1741 = vrot.lane.b32.xlu0 %v1726, 126
    %v1742 = vpop.permute.xlu0 %1741
    %1743 = vrot.lane.b32.xlu0 %v1730, 126
    %v1744 = vpop.permute.xlu0 %1743
    %1745 = vrot.lane.b32.xlu0 %v1732, 126
    %v1746 = vpop.permute.xlu0 %1745
    %1747 = vrot.lane.b32.xlu0 %v1734, 126
    %v1748 = vpop.permute.xlu0 %1747
    %1749 = vrot.lane.b32.xlu0 %v1733, 126
    %v1750 = vpop.permute.xlu0 %1749
    %v1759 = vadd.f32 %v1375, %v1736
    %v1760 = vadd.f32 %v1376, %v1738
    %v1761 = vadd.f32 %v1377, %v1740
    %v1762 = vadd.f32 %v1378, %v1742
    %v1763 = vadd.f32 %v1379, %v1744
    %v1764 = vadd.f32 %v1380, %v1746
    %v1765 = vadd.f32 %v1381, %v1748
    %v1766 = vadd.f32 %v1382, %v1750
    %s1767 = sld [smem:[#allocation4 + $0x6]]
    %v1768 = vstv %s1767
    %v1769 = vmul.f32 %v42, %v1768
    %v1770 = vmul.f32 %v43, %v1768
    %v1771 = vmul.f32 %v44, %v1768
    %v1772 = vmul.f32 %v45, %v1768
    %v1773 = vmul.f32 %v46, %v1768
    %v1774 = vmul.f32 %v47, %v1768
    %v1775 = vmul.f32 %v48, %v1768
    %v1776 = vmul.f32 %v49, %v1768
    %vm1785 = vcmask 1045504
    %v1786 = vrot.slane %v1769, 2
    %v1787 = vrot.slane %v1770, 2
    %v1788 = vsel %vm1785, %v1786, %v1787
    %v1789 = vrot.slane %v1771, 2
    %v1790 = vsel %vm1785, %v1787, %v1789
    %v1791 = vrot.slane %v1772, 2
    %v1792 = vsel %vm1785, %v1789, %v1791
    %v1793 = vrot.slane %v1773, 2
    %v1794 = vrot.slane %v1774, 2
    %v1795 = vsel %vm1785, %v1793, %v1794
    %v1796 = vrot.slane %v1775, 2
    %v1797 = vsel %vm1785, %v1794, %v1796
    %v1798 = vrot.slane %v1776, 2
    %v1799 = vsel %vm1785, %v1796, %v1798
    %v1808 = vadd.f32 %v1439, %v1788
    %v1809 = vadd.f32 %v1440, %v1790
    %v1810 = vadd.f32 %v1441, %v1792
    %v1811 = vadd.f32 %v1442, %v1791
    %v1812 = vadd.f32 %v1443, %v1795
    %v1813 = vadd.f32 %v1444, %v1797
    %v1814 = vadd.f32 %v1445, %v1799
    %v1815 = vadd.f32 %v1446, %v1798
    %s1816 = sld [smem:[#allocation4 + $0xf]]
    %v1817 = vstv %s1816
    %v1818 = vmul.f32 %v42, %v1817
    %v1819 = vmul.f32 %v43, %v1817
    %v1820 = vmul.f32 %v44, %v1817
    %v1821 = vmul.f32 %v45, %v1817
    %v1822 = vmul.f32 %v46, %v1817
    %v1823 = vmul.f32 %v47, %v1817
    %v1824 = vmul.f32 %v48, %v1817
    %v1825 = vmul.f32 %v49, %v1817
    %v1834 = vrot.slane %v1818, 2
    %v1835 = vrot.slane %v1819, 2
    %v1836 = vsel %vm1785, %v1834, %v1835
    %v1837 = vrot.slane %v1820, 2
    %v1838 = vsel %vm1785, %v1835, %v1837
    %v1839 = vrot.slane %v1821, 2
    %v1840 = vsel %vm1785, %v1837, %v1839
    %v1841 = vrot.slane %v1822, 2
    %v1842 = vrot.slane %v1823, 2
    %v1843 = vsel %vm1785, %v1841, %v1842
    %v1844 = vrot.slane %v1824, 2
    %v1845 = vsel %vm1785, %v1842, %v1844
    %v1846 = vrot.slane %v1825, 2
    %v1847 = vsel %vm1785, %v1844, %v1846
    %v1856 = vadd.f32 %v1503, %v1836
    %v1857 = vadd.f32 %v1504, %v1838
    %v1858 = vadd.f32 %v1505, %v1840
    %v1859 = vadd.f32 %v1506, %v1839
    %v1860 = vadd.f32 %v1507, %v1843
    %v1861 = vadd.f32 %v1508, %v1845
    %v1862 = vadd.f32 %v1509, %v1847
    %v1863 = vadd.f32 %v1510, %v1846
    %s1864 = sld [smem:[#allocation4 + $0x18]]
    %v1865 = vstv %s1864
    %v1866 = vmul.f32 %v42, %v1865
    %v1867 = vmul.f32 %v43, %v1865
    %v1868 = vmul.f32 %v44, %v1865
    %v1869 = vmul.f32 %v45, %v1865
    %v1870 = vmul.f32 %v46, %v1865
    %v1871 = vmul.f32 %v47, %v1865
    %v1872 = vmul.f32 %v48, %v1865
    %v1873 = vmul.f32 %v49, %v1865
    %v1882 = vrot.slane %v1866, 2
    %v1883 = vrot.slane %v1867, 2
    %v1884 = vsel %vm1785, %v1882, %v1883
    %v1885 = vrot.slane %v1868, 2
    %v1886 = vsel %vm1785, %v1883, %v1885
    %v1887 = vrot.slane %v1869, 2
    %v1888 = vsel %vm1785, %v1885, %v1887
    %v1889 = vrot.slane %v1870, 2
    %v1890 = vrot.slane %v1871, 2
    %v1891 = vsel %vm1785, %v1889, %v1890
    %v1892 = vrot.slane %v1872, 2
    %v1893 = vsel %vm1785, %v1890, %v1892
    %v1894 = vrot.slane %v1873, 2
    %v1895 = vsel %vm1785, %v1892, %v1894
    %v1904 = vadd.f32 %v1567, %v1884
    %v1905 = vadd.f32 %v1568, %v1886
    %v1906 = vadd.f32 %v1569, %v1888
    %v1907 = vadd.f32 %v1570, %v1887
    %v1908 = vadd.f32 %v1571, %v1891
    %v1909 = vadd.f32 %v1572, %v1893
    %v1910 = vadd.f32 %v1573, %v1895
    %v1911 = vadd.f32 %v1574, %v1894
    %s1912 = sld [smem:[#allocation4 + $0x21]]
    %v1913 = vstv %s1912
    %v1914 = vmul.f32 %v42, %v1913
    %v1915 = vmul.f32 %v43, %v1913
    %v1916 = vmul.f32 %v44, %v1913
    %v1917 = vmul.f32 %v45, %v1913
    %v1918 = vmul.f32 %v46, %v1913
    %v1919 = vmul.f32 %v47, %v1913
    %v1920 = vmul.f32 %v48, %v1913
    %v1921 = vmul.f32 %v49, %v1913
    %v1930 = vrot.slane %v1914, 2
    %v1931 = vrot.slane %v1915, 2
    %v1932 = vsel %vm1785, %v1930, %v1931
    %v1933 = vrot.slane %v1916, 2
    %v1934 = vsel %vm1785, %v1931, %v1933
    %v1935 = vrot.slane %v1917, 2
    %v1936 = vsel %vm1785, %v1933, %v1935
    %v1937 = vrot.slane %v1918, 2
    %v1938 = vrot.slane %v1919, 2
    %v1939 = vsel %vm1785, %v1937, %v1938
    %v1940 = vrot.slane %v1920, 2
    %v1941 = vsel %vm1785, %v1938, %v1940
    %v1942 = vrot.slane %v1921, 2
    %v1943 = vsel %vm1785, %v1940, %v1942
    %v1952 = vadd.f32 %v1631, %v1932
    %v1953 = vadd.f32 %v1632, %v1934
    %v1954 = vadd.f32 %v1633, %v1936
    %v1955 = vadd.f32 %v1634, %v1935
    %v1956 = vadd.f32 %v1635, %v1939
    %v1957 = vadd.f32 %v1636, %v1941
    %v1958 = vadd.f32 %v1637, %v1943
    %v1959 = vadd.f32 %v1638, %v1942
    %s1960 = sld [smem:[#allocation4 + $0x2a]]
    %v1961 = vstv %s1960
    %v1962 = vmul.f32 %v42, %v1961
    %v1963 = vmul.f32 %v43, %v1961
    %v1964 = vmul.f32 %v44, %v1961
    %v1965 = vmul.f32 %v45, %v1961
    %v1966 = vmul.f32 %v46, %v1961
    %v1967 = vmul.f32 %v47, %v1961
    %v1968 = vmul.f32 %v48, %v1961
    %v1969 = vmul.f32 %v49, %v1961
    %v1978 = vrot.slane %v1962, 2
    %v1979 = vrot.slane %v1963, 2
    %v1980 = vsel %vm1785, %v1978, %v1979
    %v1981 = vrot.slane %v1964, 2
    %v1982 = vsel %vm1785, %v1979, %v1981
    %v1983 = vrot.slane %v1965, 2
    %v1984 = vsel %vm1785, %v1981, %v1983
    %v1985 = vrot.slane %v1966, 2
    %v1986 = vrot.slane %v1967, 2
    %v1987 = vsel %vm1785, %v1985, %v1986
    %v1988 = vrot.slane %v1968, 2
    %v1989 = vsel %vm1785, %v1986, %v1988
    %v1990 = vrot.slane %v1969, 2
    %v1991 = vsel %vm1785, %v1988, %v1990
    %v2000 = vadd.f32 %v1695, %v1980
    %v2001 = vadd.f32 %v1696, %v1982
    %v2002 = vadd.f32 %v1697, %v1984
    %v2003 = vadd.f32 %v1698, %v1983
    %v2004 = vadd.f32 %v1699, %v1987
    %v2005 = vadd.f32 %v1700, %v1989
    %v2006 = vadd.f32 %v1701, %v1991
    %v2007 = vadd.f32 %v1702, %v1990
    %s2008 = sld [smem:[#allocation4 + $0x33]]
    %v2009 = vstv %s2008
    %v2010 = vmul.f32 %v42, %v2009
    %v2011 = vmul.f32 %v43, %v2009
    %v2012 = vmul.f32 %v44, %v2009
    %v2013 = vmul.f32 %v45, %v2009
    %v2014 = vmul.f32 %v46, %v2009
    %v2015 = vmul.f32 %v47, %v2009
    %v2016 = vmul.f32 %v48, %v2009
    %v2017 = vmul.f32 %v49, %v2009
    %v2026 = vrot.slane %v2010, 2
    %v2027 = vrot.slane %v2011, 2
    %v2028 = vsel %vm1785, %v2026, %v2027
    %v2029 = vrot.slane %v2012, 2
    %v2030 = vsel %vm1785, %v2027, %v2029
    %v2031 = vrot.slane %v2013, 2
    %v2032 = vsel %vm1785, %v2029, %v2031
    %v2033 = vrot.slane %v2014, 2
    %v2034 = vrot.slane %v2015, 2
    %v2035 = vsel %vm1785, %v2033, %v2034
    %v2036 = vrot.slane %v2016, 2
    %v2037 = vsel %vm1785, %v2034, %v2036
    %v2038 = vrot.slane %v2017, 2
    %v2039 = vsel %vm1785, %v2036, %v2038
    %v2048 = vadd.f32 %v1759, %v2028
    %v2049 = vadd.f32 %v1760, %v2030
    %v2050 = vadd.f32 %v1761, %v2032
    %v2051 = vadd.f32 %v1762, %v2031
    %v2052 = vadd.f32 %v1763, %v2035
    %v2053 = vadd.f32 %v1764, %v2037
    %v2054 = vadd.f32 %v1765, %v2039
    %v2055 = vadd.f32 %v1766, %v2038
    %s2056 = sld [smem:[#allocation4 + $0x7]]
    %v2057 = vstv %s2056
    %v2058 = vmul.f32 %v42, %v2057
    %v2059 = vmul.f32 %v43, %v2057
    %v2060 = vmul.f32 %v44, %v2057
    %v2061 = vmul.f32 %v45, %v2057
    %v2062 = vmul.f32 %v46, %v2057
    %v2063 = vmul.f32 %v47, %v2057
    %v2064 = vmul.f32 %v48, %v2057
    %v2065 = vmul.f32 %v49, %v2057
    %v2074 = vrot.slane %v2058, 2
    %v2075 = vrot.slane %v2059, 2
    %v2076 = vsel %vm1785, %v2074, %v2075
    %v2077 = vrot.slane %v2060, 2
    %v2078 = vsel %vm1785, %v2075, %v2077
    %v2079 = vrot.slane %v2061, 2
    %v2080 = vsel %vm1785, %v2077, %v2079
    %v2081 = vrot.slane %v2062, 2
    %v2082 = vrot.slane %v2063, 2
    %v2083 = vsel %vm1785, %v2081, %v2082
    %v2084 = vrot.slane %v2064, 2
    %v2085 = vsel %vm1785, %v2082, %v2084
    %v2086 = vrot.slane %v2065, 2
    %v2087 = vsel %vm1785, %v2084, %v2086
    %2088 = vrot.lane.b32.xlu0 %v2076, 127
    %v2089 = vpop.permute.xlu0 %2088
    %2090 = vrot.lane.b32.xlu0 %v2078, 127
    %v2091 = vpop.permute.xlu0 %2090
    %2092 = vrot.lane.b32.xlu0 %v2080, 127
    %v2093 = vpop.permute.xlu0 %2092
    %2094 = vrot.lane.b32.xlu0 %v2079, 127
    %v2095 = vpop.permute.xlu0 %2094
    %2096 = vrot.lane.b32.xlu0 %v2083, 127
    %v2097 = vpop.permute.xlu0 %2096
    %2098 = vrot.lane.b32.xlu0 %v2085, 127
    %v2099 = vpop.permute.xlu0 %2098
    %2100 = vrot.lane.b32.xlu0 %v2087, 127
    %v2101 = vpop.permute.xlu0 %2100
    %2102 = vrot.lane.b32.xlu0 %v2086, 127
    %v2103 = vpop.permute.xlu0 %2102
    %v2112 = vadd.f32 %v1808, %v2089
    %v2113 = vadd.f32 %v1809, %v2091
    %v2114 = vadd.f32 %v1810, %v2093
    %v2115 = vadd.f32 %v1811, %v2095
    %v2116 = vadd.f32 %v1812, %v2097
    %v2117 = vadd.f32 %v1813, %v2099
    %v2118 = vadd.f32 %v1814, %v2101
    %v2119 = vadd.f32 %v1815, %v2103
    %s2120 = sld [smem:[#allocation4 + $0x10]]
    %v2121 = vstv %s2120
    %v2122 = vmul.f32 %v42, %v2121
    %v2123 = vmul.f32 %v43, %v2121
    %v2124 = vmul.f32 %v44, %v2121
    %v2125 = vmul.f32 %v45, %v2121
    %v2126 = vmul.f32 %v46, %v2121
    %v2127 = vmul.f32 %v47, %v2121
    %v2128 = vmul.f32 %v48, %v2121
    %v2129 = vmul.f32 %v49, %v2121
    %v2138 = vrot.slane %v2122, 2
    %v2139 = vrot.slane %v2123, 2
    %v2140 = vsel %vm1785, %v2138, %v2139
    %v2141 = vrot.slane %v2124, 2
    %v2142 = vsel %vm1785, %v2139, %v2141
    %v2143 = vrot.slane %v2125, 2
    %v2144 = vsel %vm1785, %v2141, %v2143
    %v2145 = vrot.slane %v2126, 2
    %v2146 = vrot.slane %v2127, 2
    %v2147 = vsel %vm1785, %v2145, %v2146
    %v2148 = vrot.slane %v2128, 2
    %v2149 = vsel %vm1785, %v2146, %v2148
    %v2150 = vrot.slane %v2129, 2
    %v2151 = vsel %vm1785, %v2148, %v2150
    %2152 = vrot.lane.b32.xlu0 %v2140, 127
    %v2153 = vpop.permute.xlu0 %2152
    %2154 = vrot.lane.b32.xlu0 %v2142, 127
    %v2155 = vpop.permute.xlu0 %2154
    %2156 = vrot.lane.b32.xlu0 %v2144, 127
    %v2157 = vpop.permute.xlu0 %2156
    %2158 = vrot.lane.b32.xlu0 %v2143, 127
    %v2159 = vpop.permute.xlu0 %2158
    %2160 = vrot.lane.b32.xlu0 %v2147, 127
    %v2161 = vpop.permute.xlu0 %2160
    %2162 = vrot.lane.b32.xlu0 %v2149, 127
    %v2163 = vpop.permute.xlu0 %2162
    %2164 = vrot.lane.b32.xlu0 %v2151, 127
    %v2165 = vpop.permute.xlu0 %2164
    %2166 = vrot.lane.b32.xlu0 %v2150, 127
    %v2167 = vpop.permute.xlu0 %2166
    %v2176 = vadd.f32 %v1856, %v2153
    %v2177 = vadd.f32 %v1857, %v2155
    %v2178 = vadd.f32 %v1858, %v2157
    %v2179 = vadd.f32 %v1859, %v2159
    %v2180 = vadd.f32 %v1860, %v2161
    %v2181 = vadd.f32 %v1861, %v2163
    %v2182 = vadd.f32 %v1862, %v2165
    %v2183 = vadd.f32 %v1863, %v2167
    %s2184 = sld [smem:[#allocation4 + $0x19]]
    %v2185 = vstv %s2184
    %v2186 = vmul.f32 %v42, %v2185
    %v2187 = vmul.f32 %v43, %v2185
    %v2188 = vmul.f32 %v44, %v2185
    %v2189 = vmul.f32 %v45, %v2185
    %v2190 = vmul.f32 %v46, %v2185
    %v2191 = vmul.f32 %v47, %v2185
    %v2192 = vmul.f32 %v48, %v2185
    %v2193 = vmul.f32 %v49, %v2185
    %v2202 = vrot.slane %v2186, 2
    %v2203 = vrot.slane %v2187, 2
    %v2204 = vsel %vm1785, %v2202, %v2203
    %v2205 = vrot.slane %v2188, 2
    %v2206 = vsel %vm1785, %v2203, %v2205
    %v2207 = vrot.slane %v2189, 2
    %v2208 = vsel %vm1785, %v2205, %v2207
    %v2209 = vrot.slane %v2190, 2
    %v2210 = vrot.slane %v2191, 2
    %v2211 = vsel %vm1785, %v2209, %v2210
    %v2212 = vrot.slane %v2192, 2
    %v2213 = vsel %vm1785, %v2210, %v2212
    %v2214 = vrot.slane %v2193, 2
    %v2215 = vsel %vm1785, %v2212, %v2214
    %2216 = vrot.lane.b32.xlu0 %v2204, 127
    %v2217 = vpop.permute.xlu0 %2216
    %2218 = vrot.lane.b32.xlu0 %v2206, 127
    %v2219 = vpop.permute.xlu0 %2218
    %2220 = vrot.lane.b32.xlu0 %v2208, 127
    %v2221 = vpop.permute.xlu0 %2220
    %2222 = vrot.lane.b32.xlu0 %v2207, 127
    %v2223 = vpop.permute.xlu0 %2222
    %2224 = vrot.lane.b32.xlu0 %v2211, 127
    %v2225 = vpop.permute.xlu0 %2224
    %2226 = vrot.lane.b32.xlu0 %v2213, 127
    %v2227 = vpop.permute.xlu0 %2226
    %2228 = vrot.lane.b32.xlu0 %v2215, 127
    %v2229 = vpop.permute.xlu0 %2228
    %2230 = vrot.lane.b32.xlu0 %v2214, 127
    %v2231 = vpop.permute.xlu0 %2230
    %v2240 = vadd.f32 %v1904, %v2217
    %v2241 = vadd.f32 %v1905, %v2219
    %v2242 = vadd.f32 %v1906, %v2221
    %v2243 = vadd.f32 %v1907, %v2223
    %v2244 = vadd.f32 %v1908, %v2225
    %v2245 = vadd.f32 %v1909, %v2227
    %v2246 = vadd.f32 %v1910, %v2229
    %v2247 = vadd.f32 %v1911, %v2231
    %s2248 = sld [smem:[#allocation4 + $0x22]]
    %v2249 = vstv %s2248
    %v2250 = vmul.f32 %v42, %v2249
    %v2251 = vmul.f32 %v43, %v2249
    %v2252 = vmul.f32 %v44, %v2249
    %v2253 = vmul.f32 %v45, %v2249
    %v2254 = vmul.f32 %v46, %v2249
    %v2255 = vmul.f32 %v47, %v2249
    %v2256 = vmul.f32 %v48, %v2249
    %v2257 = vmul.f32 %v49, %v2249
    %v2266 = vrot.slane %v2250, 2
    %v2267 = vrot.slane %v2251, 2
    %v2268 = vsel %vm1785, %v2266, %v2267
    %v2269 = vrot.slane %v2252, 2
    %v2270 = vsel %vm1785, %v2267, %v2269
    %v2271 = vrot.slane %v2253, 2
    %v2272 = vsel %vm1785, %v2269, %v2271
    %v2273 = vrot.slane %v2254, 2
    %v2274 = vrot.slane %v2255, 2
    %v2275 = vsel %vm1785, %v2273, %v2274
    %v2276 = vrot.slane %v2256, 2
    %v2277 = vsel %vm1785, %v2274, %v2276
    %v2278 = vrot.slane %v2257, 2
    %v2279 = vsel %vm1785, %v2276, %v2278
    %2280 = vrot.lane.b32.xlu0 %v2268, 127
    %v2281 = vpop.permute.xlu0 %2280
    %2282 = vrot.lane.b32.xlu0 %v2270, 127
    %v2283 = vpop.permute.xlu0 %2282
    %2284 = vrot.lane.b32.xlu0 %v2272, 127
    %v2285 = vpop.permute.xlu0 %2284
    %2286 = vrot.lane.b32.xlu0 %v2271, 127
    %v2287 = vpop.permute.xlu0 %2286
    %2288 = vrot.lane.b32.xlu0 %v2275, 127
    %v2289 = vpop.permute.xlu0 %2288
    %2290 = vrot.lane.b32.xlu0 %v2277, 127
    %v2291 = vpop.permute.xlu0 %2290
    %2292 = vrot.lane.b32.xlu0 %v2279, 127
    %v2293 = vpop.permute.xlu0 %2292
    %2294 = vrot.lane.b32.xlu0 %v2278, 127
    %v2295 = vpop.permute.xlu0 %2294
    %v2304 = vadd.f32 %v1952, %v2281
    %v2305 = vadd.f32 %v1953, %v2283
    %v2306 = vadd.f32 %v1954, %v2285
    %v2307 = vadd.f32 %v1955, %v2287
    %v2308 = vadd.f32 %v1956, %v2289
    %v2309 = vadd.f32 %v1957, %v2291
    %v2310 = vadd.f32 %v1958, %v2293
    %v2311 = vadd.f32 %v1959, %v2295
    %s2312 = sld [smem:[#allocation4 + $0x2b]]
    %v2313 = vstv %s2312
    %v2314 = vmul.f32 %v42, %v2313
    %v2315 = vmul.f32 %v43, %v2313
    %v2316 = vmul.f32 %v44, %v2313
    %v2317 = vmul.f32 %v45, %v2313
    %v2318 = vmul.f32 %v46, %v2313
    %v2319 = vmul.f32 %v47, %v2313
    %v2320 = vmul.f32 %v48, %v2313
    %v2321 = vmul.f32 %v49, %v2313
    %v2330 = vrot.slane %v2314, 2
    %v2331 = vrot.slane %v2315, 2
    %v2332 = vsel %vm1785, %v2330, %v2331
    %v2333 = vrot.slane %v2316, 2
    %v2334 = vsel %vm1785, %v2331, %v2333
    %v2335 = vrot.slane %v2317, 2
    %v2336 = vsel %vm1785, %v2333, %v2335
    %v2337 = vrot.slane %v2318, 2
    %v2338 = vrot.slane %v2319, 2
    %v2339 = vsel %vm1785, %v2337, %v2338
    %v2340 = vrot.slane %v2320, 2
    %v2341 = vsel %vm1785, %v2338, %v2340
    %v2342 = vrot.slane %v2321, 2
    %v2343 = vsel %vm1785, %v2340, %v2342
    %2344 = vrot.lane.b32.xlu0 %v2332, 127
    %v2345 = vpop.permute.xlu0 %2344
    %2346 = vrot.lane.b32.xlu0 %v2334, 127
    %v2347 = vpop.permute.xlu0 %2346
    %2348 = vrot.lane.b32.xlu0 %v2336, 127
    %v2349 = vpop.permute.xlu0 %2348
    %2350 = vrot.lane.b32.xlu0 %v2335, 127
    %v2351 = vpop.permute.xlu0 %2350
    %2352 = vrot.lane.b32.xlu0 %v2339, 127
    %v2353 = vpop.permute.xlu0 %2352
    %2354 = vrot.lane.b32.xlu0 %v2341, 127
    %v2355 = vpop.permute.xlu0 %2354
    %2356 = vrot.lane.b32.xlu0 %v2343, 127
    %v2357 = vpop.permute.xlu0 %2356
    %2358 = vrot.lane.b32.xlu0 %v2342, 127
    %v2359 = vpop.permute.xlu0 %2358
    %v2368 = vadd.f32 %v2000, %v2345
    %v2369 = vadd.f32 %v2001, %v2347
    %v2370 = vadd.f32 %v2002, %v2349
    %v2371 = vadd.f32 %v2003, %v2351
    %v2372 = vadd.f32 %v2004, %v2353
    %v2373 = vadd.f32 %v2005, %v2355
    %v2374 = vadd.f32 %v2006, %v2357
    %v2375 = vadd.f32 %v2007, %v2359
    %s2376 = sld [smem:[#allocation4 + $0x34]]
    %v2377 = vstv %s2376
    %v2378 = vmul.f32 %v42, %v2377
    %v2379 = vmul.f32 %v43, %v2377
    %v2380 = vmul.f32 %v44, %v2377
    %v2381 = vmul.f32 %v45, %v2377
    %v2382 = vmul.f32 %v46, %v2377
    %v2383 = vmul.f32 %v47, %v2377
    %v2384 = vmul.f32 %v48, %v2377
    %v2385 = vmul.f32 %v49, %v2377
    %v2394 = vrot.slane %v2378, 2
    %v2395 = vrot.slane %v2379, 2
    %v2396 = vsel %vm1785, %v2394, %v2395
    %v2397 = vrot.slane %v2380, 2
    %v2398 = vsel %vm1785, %v2395, %v2397
    %v2399 = vrot.slane %v2381, 2
    %v2400 = vsel %vm1785, %v2397, %v2399
    %v2401 = vrot.slane %v2382, 2
    %v2402 = vrot.slane %v2383, 2
    %v2403 = vsel %vm1785, %v2401, %v2402
    %v2404 = vrot.slane %v2384, 2
    %v2405 = vsel %vm1785, %v2402, %v2404
    %v2406 = vrot.slane %v2385, 2
    %v2407 = vsel %vm1785, %v2404, %v2406
    %2408 = vrot.lane.b32.xlu0 %v2396, 127
    %v2409 = vpop.permute.xlu0 %2408
    %2410 = vrot.lane.b32.xlu0 %v2398, 127
    %v2411 = vpop.permute.xlu0 %2410
    %2412 = vrot.lane.b32.xlu0 %v2400, 127
    %v2413 = vpop.permute.xlu0 %2412
    %2414 = vrot.lane.b32.xlu0 %v2399, 127
    %v2415 = vpop.permute.xlu0 %2414
    %2416 = vrot.lane.b32.xlu0 %v2403, 127
    %v2417 = vpop.permute.xlu0 %2416
    %2418 = vrot.lane.b32.xlu0 %v2405, 127
    %v2419 = vpop.permute.xlu0 %2418
    %2420 = vrot.lane.b32.xlu0 %v2407, 127
    %v2421 = vpop.permute.xlu0 %2420
    %2422 = vrot.lane.b32.xlu0 %v2406, 127
    %v2423 = vpop.permute.xlu0 %2422
    %v2432 = vadd.f32 %v2048, %v2409
    %v2433 = vadd.f32 %v2049, %v2411
    %v2434 = vadd.f32 %v2050, %v2413
    %v2435 = vadd.f32 %v2051, %v2415
    %v2436 = vadd.f32 %v2052, %v2417
    %v2437 = vadd.f32 %v2053, %v2419
    %v2438 = vadd.f32 %v2054, %v2421
    %v2439 = vadd.f32 %v2055, %v2423
    %s2440 = sld [smem:[#allocation4 + $0x8]]
    %v2441 = vstv %s2440
    %v2442 = vmul.f32 %v42, %v2441
    %v2443 = vmul.f32 %v43, %v2441
    %v2444 = vmul.f32 %v44, %v2441
    %v2445 = vmul.f32 %v45, %v2441
    %v2446 = vmul.f32 %v46, %v2441
    %v2447 = vmul.f32 %v47, %v2441
    %v2448 = vmul.f32 %v48, %v2441
    %v2449 = vmul.f32 %v49, %v2441
    %v2458 = vrot.slane %v2442, 2
    %v2459 = vrot.slane %v2443, 2
    %v2460 = vsel %vm1785, %v2458, %v2459
    %v2461 = vrot.slane %v2444, 2
    %v2462 = vsel %vm1785, %v2459, %v2461
    %v2463 = vrot.slane %v2445, 2
    %v2464 = vsel %vm1785, %v2461, %v2463
    %v2465 = vrot.slane %v2446, 2
    %v2466 = vrot.slane %v2447, 2
    %v2467 = vsel %vm1785, %v2465, %v2466
    %v2468 = vrot.slane %v2448, 2
    %v2469 = vsel %vm1785, %v2466, %v2468
    %v2470 = vrot.slane %v2449, 2
    %v2471 = vsel %vm1785, %v2468, %v2470
    %2472 = vrot.lane.b32.xlu0 %v2460, 126
    %v2473 = vpop.permute.xlu0 %2472
    %2474 = vrot.lane.b32.xlu0 %v2462, 126
    %v2475 = vpop.permute.xlu0 %2474
    %2476 = vrot.lane.b32.xlu0 %v2464, 126
    %v2477 = vpop.permute.xlu0 %2476
    %2478 = vrot.lane.b32.xlu0 %v2463, 126
    %v2479 = vpop.permute.xlu0 %2478
    %2480 = vrot.lane.b32.xlu0 %v2467, 126
    %v2481 = vpop.permute.xlu0 %2480
    %2482 = vrot.lane.b32.xlu0 %v2469, 126
    %v2483 = vpop.permute.xlu0 %2482
    %2484 = vrot.lane.b32.xlu0 %v2471, 126
    %v2485 = vpop.permute.xlu0 %2484
    %2486 = vrot.lane.b32.xlu0 %v2470, 126
    %v2487 = vpop.permute.xlu0 %2486
    %v2496 = vadd.f32 %v2112, %v2473
    %v2497 = vadd.f32 %v2113, %v2475
    %v2498 = vadd.f32 %v2114, %v2477
    %v2499 = vadd.f32 %v2115, %v2479
    %v2500 = vadd.f32 %v2116, %v2481
    %v2501 = vadd.f32 %v2117, %v2483
    %v2502 = vadd.f32 %v2118, %v2485
    %v2503 = vadd.f32 %v2119, %v2487
    %s2504 = sld [smem:[#allocation4 + $0x11]]
    %v2505 = vstv %s2504
    %v2506 = vmul.f32 %v42, %v2505
    %v2507 = vmul.f32 %v43, %v2505
    %v2508 = vmul.f32 %v44, %v2505
    %v2509 = vmul.f32 %v45, %v2505
    %v2510 = vmul.f32 %v46, %v2505
    %v2511 = vmul.f32 %v47, %v2505
    %v2512 = vmul.f32 %v48, %v2505
    %v2513 = vmul.f32 %v49, %v2505
    %v2522 = vrot.slane %v2506, 2
    %v2523 = vrot.slane %v2507, 2
    %v2524 = vsel %vm1785, %v2522, %v2523
    %v2525 = vrot.slane %v2508, 2
    %v2526 = vsel %vm1785, %v2523, %v2525
    %v2527 = vrot.slane %v2509, 2
    %v2528 = vsel %vm1785, %v2525, %v2527
    %v2529 = vrot.slane %v2510, 2
    %v2530 = vrot.slane %v2511, 2
    %v2531 = vsel %vm1785, %v2529, %v2530
    %v2532 = vrot.slane %v2512, 2
    %v2533 = vsel %vm1785, %v2530, %v2532
    %v2534 = vrot.slane %v2513, 2
    %v2535 = vsel %vm1785, %v2532, %v2534
    %2536 = vrot.lane.b32.xlu0 %v2524, 126
    %v2537 = vpop.permute.xlu0 %2536
    %2538 = vrot.lane.b32.xlu0 %v2526, 126
    %v2539 = vpop.permute.xlu0 %2538
    %2540 = vrot.lane.b32.xlu0 %v2528, 126
    %v2541 = vpop.permute.xlu0 %2540
    %2542 = vrot.lane.b32.xlu0 %v2527, 126
    %v2543 = vpop.permute.xlu0 %2542
    %2544 = vrot.lane.b32.xlu0 %v2531, 126
    %v2545 = vpop.permute.xlu0 %2544
    %2546 = vrot.lane.b32.xlu0 %v2533, 126
    %v2547 = vpop.permute.xlu0 %2546
    %2548 = vrot.lane.b32.xlu0 %v2535, 126
    %v2549 = vpop.permute.xlu0 %2548
    %2550 = vrot.lane.b32.xlu0 %v2534, 126
    %v2551 = vpop.permute.xlu0 %2550
    %v2560 = vadd.f32 %v2176, %v2537
    %v2561 = vadd.f32 %v2177, %v2539
    %v2562 = vadd.f32 %v2178, %v2541
    %v2563 = vadd.f32 %v2179, %v2543
    %v2564 = vadd.f32 %v2180, %v2545
    %v2565 = vadd.f32 %v2181, %v2547
    %v2566 = vadd.f32 %v2182, %v2549
    %v2567 = vadd.f32 %v2183, %v2551
    %s2568 = sld [smem:[#allocation4 + $0x1a]]
    %v2569 = vstv %s2568
    %v2570 = vmul.f32 %v42, %v2569
    %v2571 = vmul.f32 %v43, %v2569
    %v2572 = vmul.f32 %v44, %v2569
    %v2573 = vmul.f32 %v45, %v2569
    %v2574 = vmul.f32 %v46, %v2569
    %v2575 = vmul.f32 %v47, %v2569
    %v2576 = vmul.f32 %v48, %v2569
    %v2577 = vmul.f32 %v49, %v2569
    %v2586 = vrot.slane %v2570, 2
    %v2587 = vrot.slane %v2571, 2
    %v2588 = vsel %vm1785, %v2586, %v2587
    %v2589 = vrot.slane %v2572, 2
    %v2590 = vsel %vm1785, %v2587, %v2589
    %v2591 = vrot.slane %v2573, 2
    %v2592 = vsel %vm1785, %v2589, %v2591
    %v2593 = vrot.slane %v2574, 2
    %v2594 = vrot.slane %v2575, 2
    %v2595 = vsel %vm1785, %v2593, %v2594
    %v2596 = vrot.slane %v2576, 2
    %v2597 = vsel %vm1785, %v2594, %v2596
    %v2598 = vrot.slane %v2577, 2
    %v2599 = vsel %vm1785, %v2596, %v2598
    %2600 = vrot.lane.b32.xlu0 %v2588, 126
    %v2601 = vpop.permute.xlu0 %2600
    %2602 = vrot.lane.b32.xlu0 %v2590, 126
    %v2603 = vpop.permute.xlu0 %2602
    %2604 = vrot.lane.b32.xlu0 %v2592, 126
    %v2605 = vpop.permute.xlu0 %2604
    %2606 = vrot.lane.b32.xlu0 %v2591, 126
    %v2607 = vpop.permute.xlu0 %2606
    %2608 = vrot.lane.b32.xlu0 %v2595, 126
    %v2609 = vpop.permute.xlu0 %2608
    %2610 = vrot.lane.b32.xlu0 %v2597, 126
    %v2611 = vpop.permute.xlu0 %2610
    %2612 = vrot.lane.b32.xlu0 %v2599, 126
    %v2613 = vpop.permute.xlu0 %2612
    %2614 = vrot.lane.b32.xlu0 %v2598, 126
    %v2615 = vpop.permute.xlu0 %2614
    %v2624 = vadd.f32 %v2240, %v2601
    %v2625 = vadd.f32 %v2241, %v2603
    %v2626 = vadd.f32 %v2242, %v2605
    %v2627 = vadd.f32 %v2243, %v2607
    %v2628 = vadd.f32 %v2244, %v2609
    %v2629 = vadd.f32 %v2245, %v2611
    %v2630 = vadd.f32 %v2246, %v2613
    %v2631 = vadd.f32 %v2247, %v2615
    %s2632 = sld [smem:[#allocation4 + $0x23]]
    %v2633 = vstv %s2632
    %v2634 = vmul.f32 %v42, %v2633
    %v2635 = vmul.f32 %v43, %v2633
    %v2636 = vmul.f32 %v44, %v2633
    %v2637 = vmul.f32 %v45, %v2633
    %v2638 = vmul.f32 %v46, %v2633
    %v2639 = vmul.f32 %v47, %v2633
    %v2640 = vmul.f32 %v48, %v2633
    %v2641 = vmul.f32 %v49, %v2633
    %v2650 = vrot.slane %v2634, 2
    %v2651 = vrot.slane %v2635, 2
    %v2652 = vsel %vm1785, %v2650, %v2651
    %v2653 = vrot.slane %v2636, 2
    %v2654 = vsel %vm1785, %v2651, %v2653
    %v2655 = vrot.slane %v2637, 2
    %v2656 = vsel %vm1785, %v2653, %v2655
    %v2657 = vrot.slane %v2638, 2
    %v2658 = vrot.slane %v2639, 2
    %v2659 = vsel %vm1785, %v2657, %v2658
    %v2660 = vrot.slane %v2640, 2
    %v2661 = vsel %vm1785, %v2658, %v2660
    %v2662 = vrot.slane %v2641, 2
    %v2663 = vsel %vm1785, %v2660, %v2662
    %2664 = vrot.lane.b32.xlu0 %v2652, 126
    %v2665 = vpop.permute.xlu0 %2664
    %2666 = vrot.lane.b32.xlu0 %v2654, 126
    %v2667 = vpop.permute.xlu0 %2666
    %2668 = vrot.lane.b32.xlu0 %v2656, 126
    %v2669 = vpop.permute.xlu0 %2668
    %2670 = vrot.lane.b32.xlu0 %v2655, 126
    %v2671 = vpop.permute.xlu0 %2670
    %2672 = vrot.lane.b32.xlu0 %v2659, 126
    %v2673 = vpop.permute.xlu0 %2672
    %2674 = vrot.lane.b32.xlu0 %v2661, 126
    %v2675 = vpop.permute.xlu0 %2674
    %2676 = vrot.lane.b32.xlu0 %v2663, 126
    %v2677 = vpop.permute.xlu0 %2676
    %2678 = vrot.lane.b32.xlu0 %v2662, 126
    %v2679 = vpop.permute.xlu0 %2678
    %v2688 = vadd.f32 %v2304, %v2665
    %v2689 = vadd.f32 %v2305, %v2667
    %v2690 = vadd.f32 %v2306, %v2669
    %v2691 = vadd.f32 %v2307, %v2671
    %v2692 = vadd.f32 %v2308, %v2673
    %v2693 = vadd.f32 %v2309, %v2675
    %v2694 = vadd.f32 %v2310, %v2677
    %v2695 = vadd.f32 %v2311, %v2679
    %s2696 = sld [smem:[#allocation4 + $0x2c]]
    %v2697 = vstv %s2696
    %v2698 = vmul.f32 %v42, %v2697
    %v2699 = vmul.f32 %v43, %v2697
    %v2700 = vmul.f32 %v44, %v2697
    %v2701 = vmul.f32 %v45, %v2697
    %v2702 = vmul.f32 %v46, %v2697
    %v2703 = vmul.f32 %v47, %v2697
    %v2704 = vmul.f32 %v48, %v2697
    %v2705 = vmul.f32 %v49, %v2697
    %v2714 = vrot.slane %v2698, 2
    %v2715 = vrot.slane %v2699, 2
    %v2716 = vsel %vm1785, %v2714, %v2715
    %v2717 = vrot.slane %v2700, 2
    %v2718 = vsel %vm1785, %v2715, %v2717
    %v2719 = vrot.slane %v2701, 2
    %v2720 = vsel %vm1785, %v2717, %v2719
    %v2721 = vrot.slane %v2702, 2
    %v2722 = vrot.slane %v2703, 2
    %v2723 = vsel %vm1785, %v2721, %v2722
    %v2724 = vrot.slane %v2704, 2
    %v2725 = vsel %vm1785, %v2722, %v2724
    %v2726 = vrot.slane %v2705, 2
    %v2727 = vsel %vm1785, %v2724, %v2726
    %2728 = vrot.lane.b32.xlu0 %v2716, 126
    %v2729 = vpop.permute.xlu0 %2728
    %2730 = vrot.lane.b32.xlu0 %v2718, 126
    %v2731 = vpop.permute.xlu0 %2730
    %2732 = vrot.lane.b32.xlu0 %v2720, 126
    %v2733 = vpop.permute.xlu0 %2732
    %2734 = vrot.lane.b32.xlu0 %v2719, 126
    %v2735 = vpop.permute.xlu0 %2734
    %2736 = vrot.lane.b32.xlu0 %v2723, 126
    %v2737 = vpop.permute.xlu0 %2736
    %2738 = vrot.lane.b32.xlu0 %v2725, 126
    %v2739 = vpop.permute.xlu0 %2738
    %2740 = vrot.lane.b32.xlu0 %v2727, 126
    %v2741 = vpop.permute.xlu0 %2740
    %2742 = vrot.lane.b32.xlu0 %v2726, 126
    %v2743 = vpop.permute.xlu0 %2742
    %v2752 = vadd.f32 %v2368, %v2729
    %v2753 = vadd.f32 %v2369, %v2731
    %v2754 = vadd.f32 %v2370, %v2733
    %v2755 = vadd.f32 %v2371, %v2735
    %v2756 = vadd.f32 %v2372, %v2737
    %v2757 = vadd.f32 %v2373, %v2739
    %v2758 = vadd.f32 %v2374, %v2741
    %v2759 = vadd.f32 %v2375, %v2743
    %s2760 = sld [smem:[#allocation4 + $0x35]]
    %v2761 = vstv %s2760
    %v2762 = vmul.f32 %v42, %v2761
    %v2763 = vmul.f32 %v43, %v2761
    %v2764 = vmul.f32 %v44, %v2761
    %v2765 = vmul.f32 %v45, %v2761
    %v2766 = vmul.f32 %v46, %v2761
    %v2767 = vmul.f32 %v47, %v2761
    %v2768 = vmul.f32 %v48, %v2761
    %v2769 = vmul.f32 %v49, %v2761
    %v2778 = vrot.slane %v2762, 2
    %v2779 = vrot.slane %v2763, 2
    %v2780 = vsel %vm1785, %v2778, %v2779
    %v2781 = vrot.slane %v2764, 2
    %v2782 = vsel %vm1785, %v2779, %v2781
    %v2783 = vrot.slane %v2765, 2
    %v2784 = vsel %vm1785, %v2781, %v2783
    %v2785 = vrot.slane %v2766, 2
    %v2786 = vrot.slane %v2767, 2
    %v2787 = vsel %vm1785, %v2785, %v2786
    %v2788 = vrot.slane %v2768, 2
    %v2789 = vsel %vm1785, %v2786, %v2788
    %v2790 = vrot.slane %v2769, 2
    %v2791 = vsel %vm1785, %v2788, %v2790
    %2792 = vrot.lane.b32.xlu0 %v2780, 126
    %v2793 = vpop.permute.xlu0 %2792
    %2794 = vrot.lane.b32.xlu0 %v2782, 126
    %v2795 = vpop.permute.xlu0 %2794
    %2796 = vrot.lane.b32.xlu0 %v2784, 126
    %v2797 = vpop.permute.xlu0 %2796
    %2798 = vrot.lane.b32.xlu0 %v2783, 126
    %v2799 = vpop.permute.xlu0 %2798
    %2800 = vrot.lane.b32.xlu0 %v2787, 126
    %v2801 = vpop.permute.xlu0 %2800
    %2802 = vrot.lane.b32.xlu0 %v2789, 126
    %v2803 = vpop.permute.xlu0 %2802
    %2804 = vrot.lane.b32.xlu0 %v2791, 126
    %v2805 = vpop.permute.xlu0 %2804
    %2806 = vrot.lane.b32.xlu0 %v2790, 126
    %v2807 = vpop.permute.xlu0 %2806
    %v2816 = vadd.f32 %v2432, %v2793
    %v2817 = vadd.f32 %v2433, %v2795
    %v2818 = vadd.f32 %v2434, %v2797
    %v2819 = vadd.f32 %v2435, %v2799
    %v2820 = vadd.f32 %v2436, %v2801
    %v2821 = vadd.f32 %v2437, %v2803
    %v2822 = vadd.f32 %v2438, %v2805
    %v2823 = vadd.f32 %v2439, %v2807
    %s2824 = sld [smem:[#allocation4 + $0x36]]
    %v2825 = vstv %s2824
    %v2826 = vadd.f32 %v2496, %v2825
    %v2827 = vadd.f32 %v2497, %v2825
    %v2828 = vadd.f32 %v2498, %v2825
    %v2829 = vadd.f32 %v2499, %v2825
    %v2830 = vadd.f32 %v2500, %v2825
    %v2831 = vadd.f32 %v2501, %v2825
    %v2832 = vadd.f32 %v2502, %v2825
    %v2833 = vadd.f32 %v2503, %v2825
    %v2834 = vmax.f32 %v2826, 0.0
    %v2835 = vmax.f32 %v2827, 0.0
    %v2836 = vmax.f32 %v2828, 0.0
    %v2837 = vmax.f32 %v2829, 0.0
    %v2838 = vmax.f32 %v2830, 0.0
    %v2839 = vmax.f32 %v2831, 0.0
    %v2840 = vmax.f32 %v2832, 0.0
    %v2841 = vmax.f32 %v2833, 0.0
    %vm2842 = vcmask 211968
    %2843 = vst.msk [vmem:[#allocation2] sm:$0xff] %vm2842, %v2834
    %2844 = vst.msk [vmem:[#allocation2 + $0x10] sm:$0xff] %vm2842, %v2835
    %2845 = vst.msk [vmem:[#allocation2 + $0x20] sm:$0xff] %vm2842, %v2836
    %vm2846 = vcmask 205824
    %2847 = vst.msk [vmem:[#allocation2 + $0x30] sm:$0x3] %vm2846, %v2837
    %2848 = vst.msk [vmem:[#allocation2 + $0x40] sm:$0xff] %vm2842, %v2838
    %2849 = vst.msk [vmem:[#allocation2 + $0x50] sm:$0xff] %vm2842, %v2839
    %2850 = vst.msk [vmem:[#allocation2 + $0x60] sm:$0xff] %vm2842, %v2840
    %2851 = vst.msk [vmem:[#allocation2 + $0x70] sm:$0x3] %vm2846, %v2841
    %s2852 = sld [smem:[#allocation4 + $0x37]]
    %v2853 = vstv %s2852
    %v2854 = vadd.f32 %v2560, %v2853
    %v2855 = vadd.f32 %v2561, %v2853
    %v2856 = vadd.f32 %v2562, %v2853
    %v2857 = vadd.f32 %v2563, %v2853
    %v2858 = vadd.f32 %v2564, %v2853
    %v2859 = vadd.f32 %v2565, %v2853
    %v2860 = vadd.f32 %v2566, %v2853
    %v2861 = vadd.f32 %v2567, %v2853
    %v2862 = vmax.f32 %v2854, 0.0
    %v2863 = vmax.f32 %v2855, 0.0
    %v2864 = vmax.f32 %v2856, 0.0
    %v2865 = vmax.f32 %v2857, 0.0
    %v2866 = vmax.f32 %v2858, 0.0
    %v2867 = vmax.f32 %v2859, 0.0
    %v2868 = vmax.f32 %v2860, 0.0
    %v2869 = vmax.f32 %v2861, 0.0
    %2874 = vrot.lane.b32.xlu0 %v2862, 26
    %v2875 = vpop.permute.xlu0 %2874
    %2876 = vrot.lane.b32.xlu0 %v2863, 26
    %v2877 = vpop.permute.xlu0 %2876
    %2878 = vrot.lane.b32.xlu0 %v2864, 26
    %v2879 = vpop.permute.xlu0 %2878
    %2880 = vrot.lane.b32.xlu0 %v2865, 26
    %v2881 = vpop.permute.xlu0 %2880
    %vm2886 = vcmask 425168
    %2887 = vst.msk [vmem:[#allocation2] sm:$0xff] %vm2886, %v2875
    %2888 = vst.msk [vmem:[#allocation2 + $0x10] sm:$0xff] %vm2886, %v2877
    %2889 = vst.msk [vmem:[#allocation2 + $0x20] sm:$0xff] %vm2886, %v2879
    %vm2890 = vcmask 419024
    %2891 = vst.msk [vmem:[#allocation2 + $0x30] sm:$0x3] %vm2890, %v2881
    %2896 = vrot.lane.b32.xlu0 %v2866, 26
    %v2897 = vpop.permute.xlu0 %2896
    %2898 = vrot.lane.b32.xlu0 %v2867, 26
    %v2899 = vpop.permute.xlu0 %2898
    %2900 = vrot.lane.b32.xlu0 %v2868, 26
    %v2901 = vpop.permute.xlu0 %2900
    %2902 = vrot.lane.b32.xlu0 %v2869, 26
    %v2903 = vpop.permute.xlu0 %2902
    %2908 = vst.msk [vmem:[#allocation2 + $0x40] sm:$0xff] %vm2886, %v2897
    %2909 = vst.msk [vmem:[#allocation2 + $0x50] sm:$0xff] %vm2886, %v2899
    %2910 = vst.msk [vmem:[#allocation2 + $0x60] sm:$0xff] %vm2886, %v2901
    %2911 = vst.msk [vmem:[#allocation2 + $0x70] sm:$0x3] %vm2890, %v2903
    %s2912 = sld [smem:[#allocation4 + $0x38]]
    %v2913 = vstv %s2912
    %v2914 = vadd.f32 %v2624, %v2913
    %v2915 = vadd.f32 %v2625, %v2913
    %v2916 = vadd.f32 %v2626, %v2913
    %v2917 = vadd.f32 %v2627, %v2913
    %v2918 = vadd.f32 %v2628, %v2913
    %v2919 = vadd.f32 %v2629, %v2913
    %v2920 = vadd.f32 %v2630, %v2913
    %v2921 = vadd.f32 %v2631, %v2913
    %v2922 = vmax.f32 %v2914, 0.0
    %v2923 = vmax.f32 %v2915, 0.0
    %v2924 = vmax.f32 %v2916, 0.0
    %v2925 = vmax.f32 %v2917, 0.0
    %v2926 = vmax.f32 %v2918, 0.0
    %v2927 = vmax.f32 %v2919, 0.0
    %v2928 = vmax.f32 %v2920, 0.0
    %v2929 = vmax.f32 %v2921, 0.0
    %2934 = vrot.lane.b32.xlu0 %v2922, 52
    %v2935 = vpop.permute.xlu0 %2934
    %2936 = vrot.lane.b32.xlu0 %v2923, 52
    %v2937 = vpop.permute.xlu0 %2936
    %2938 = vrot.lane.b32.xlu0 %v2924, 52
    %v2939 = vpop.permute.xlu0 %2938
    %2940 = vrot.lane.b32.xlu0 %v2925, 52
    %v2941 = vpop.permute.xlu0 %2940
    %vm2946 = vcmask 638368
    %2947 = vst.msk [vmem:[#allocation2] sm:$0xff] %vm2946, %v2935
    %2948 = vst.msk [vmem:[#allocation2 + $0x10] sm:$0xff] %vm2946, %v2937
    %2949 = vst.msk [vmem:[#allocation2 + $0x20] sm:$0xff] %vm2946, %v2939
    %vm2950 = vcmask 632224
    %2951 = vst.msk [vmem:[#allocation2 + $0x30] sm:$0x3] %vm2950, %v2941
    %2956 = vrot.lane.b32.xlu0 %v2926, 52
    %v2957 = vpop.permute.xlu0 %2956
    %2958 = vrot.lane.b32.xlu0 %v2927, 52
    %v2959 = vpop.permute.xlu0 %2958
    %2960 = vrot.lane.b32.xlu0 %v2928, 52
    %v2961 = vpop.permute.xlu0 %2960
    %2962 = vrot.lane.b32.xlu0 %v2929, 52
    %v2963 = vpop.permute.xlu0 %2962
    %2968 = vst.msk [vmem:[#allocation2 + $0x40] sm:$0xff] %vm2946, %v2957
    %2969 = vst.msk [vmem:[#allocation2 + $0x50] sm:$0xff] %vm2946, %v2959
    %2970 = vst.msk [vmem:[#allocation2 + $0x60] sm:$0xff] %vm2946, %v2961
    %2971 = vst.msk [vmem:[#allocation2 + $0x70] sm:$0x3] %vm2950, %v2963
    %s2972 = sld [smem:[#allocation4 + $0x39]]
    %v2973 = vstv %s2972
    %v2974 = vadd.f32 %v2688, %v2973
    %v2975 = vadd.f32 %v2689, %v2973
    %v2976 = vadd.f32 %v2690, %v2973
    %v2977 = vadd.f32 %v2691, %v2973
    %v2978 = vadd.f32 %v2692, %v2973
    %v2979 = vadd.f32 %v2693, %v2973
    %v2980 = vadd.f32 %v2694, %v2973
    %v2981 = vadd.f32 %v2695, %v2973
    %v2982 = vmax.f32 %v2974, 0.0
    %v2983 = vmax.f32 %v2975, 0.0
    %v2984 = vmax.f32 %v2976, 0.0
    %v2985 = vmax.f32 %v2977, 0.0
    %v2986 = vmax.f32 %v2978, 0.0
    %v2987 = vmax.f32 %v2979, 0.0
    %v2988 = vmax.f32 %v2980, 0.0
    %v2989 = vmax.f32 %v2981, 0.0
    %2994 = vrot.lane.b32.xlu0 %v2982, 78
    %v2995 = vpop.permute.xlu0 %2994
    %2996 = vrot.lane.b32.xlu0 %v2983, 78
    %v2997 = vpop.permute.xlu0 %2996
    %2998 = vrot.lane.b32.xlu0 %v2984, 78
    %v2999 = vpop.permute.xlu0 %2998
    %3000 = vrot.lane.b32.xlu0 %v2985, 78
    %v3001 = vpop.permute.xlu0 %3000
    %vm3006 = vcmask 851568
    %3007 = vst.msk [vmem:[#allocation2] sm:$0xff] %vm3006, %v2995
    %3008 = vst.msk [vmem:[#allocation2 + $0x10] sm:$0xff] %vm3006, %v2997
    %3009 = vst.msk [vmem:[#allocation2 + $0x20] sm:$0xff] %vm3006, %v2999
    %vm3010 = vcmask 845424
    %3011 = vst.msk [vmem:[#allocation2 + $0x30] sm:$0x3] %vm3010, %v3001
    %3016 = vrot.lane.b32.xlu0 %v2986, 78
    %v3017 = vpop.permute.xlu0 %3016
    %3018 = vrot.lane.b32.xlu0 %v2987, 78
    %v3019 = vpop.permute.xlu0 %3018
    %3020 = vrot.lane.b32.xlu0 %v2988, 78
    %v3021 = vpop.permute.xlu0 %3020
    %3022 = vrot.lane.b32.xlu0 %v2989, 78
    %v3023 = vpop.permute.xlu0 %3022
    %3028 = vst.msk [vmem:[#allocation2 + $0x40] sm:$0xff] %vm3006, %v3017
    %3029 = vst.msk [vmem:[#allocation2 + $0x50] sm:$0xff] %vm3006, %v3019
    %3030 = vst.msk [vmem:[#allocation2 + $0x60] sm:$0xff] %vm3006, %v3021
    %3031 = vst.msk [vmem:[#allocation2 + $0x70] sm:$0x3] %vm3010, %v3023
    %s3032 = sld [smem:[#allocation4 + $0x3a]]
    %v3033 = vstv %s3032
    %v3034 = vadd.f32 %v2752, %v3033
    %v3035 = vadd.f32 %v2753, %v3033
    %v3036 = vadd.f32 %v2754, %v3033
    %v3037 = vadd.f32 %v2755, %v3033
    %v3038 = vadd.f32 %v2756, %v3033
    %v3039 = vadd.f32 %v2757, %v3033
    %v3040 = vadd.f32 %v2758, %v3033
    %v3041 = vadd.f32 %v2759, %v3033
    %v3042 = vmax.f32 %v3034, 0.0
    %v3043 = vmax.f32 %v3035, 0.0
    %v3044 = vmax.f32 %v3036, 0.0
    %v3045 = vmax.f32 %v3037, 0.0
    %v3046 = vmax.f32 %v3038, 0.0
    %v3047 = vmax.f32 %v3039, 0.0
    %v3048 = vmax.f32 %v3040, 0.0
    %v3049 = vmax.f32 %v3041, 0.0
    %3054 = vrot.lane.b32.xlu0 %v3042, 104
    %v3055 = vpop.permute.xlu0 %3054
    %3056 = vrot.lane.b32.xlu0 %v3043, 104
    %v3057 = vpop.permute.xlu0 %3056
    %3058 = vrot.lane.b32.xlu0 %v3044, 104
    %v3059 = vpop.permute.xlu0 %3058
    %3060 = vrot.lane.b32.xlu0 %v3045, 104
    %v3061 = vpop.permute.xlu0 %3060
    %vm3066 = vcmask 1048384
    %3067 = vst.msk [vmem:[#allocation2] sm:$0xff] %vm3066, %v3055
    %vm3068 = vcmask 15360
    %3069 = vst.msk [vmem:[#allocation2 + $0x8] sm:$0xff] %vm3068, %v3055
    %3070 = vst.msk [vmem:[#allocation2 + $0x10] sm:$0xff] %vm3066, %v3057
    %3071 = vst.msk [vmem:[#allocation2 + $0x18] sm:$0xff] %vm3068, %v3057
    %3072 = vst.msk [vmem:[#allocation2 + $0x20] sm:$0xff] %vm3066, %v3059
    %3073 = vst.msk [vmem:[#allocation2 + $0x28] sm:$0xff] %vm3068, %v3059
    %vm3074 = vcmask 1042240
    %3075 = vst.msk [vmem:[#allocation2 + $0x30] sm:$0x3] %vm3074, %v3061
    %vm3076 = vcmask 9216
    %3077 = vst.msk [vmem:[#allocation2 + $0x38] sm:$0x3] %vm3076, %v3061
    %3082 = vrot.lane.b32.xlu0 %v3046, 104
    %v3083 = vpop.permute.xlu0 %3082
    %3084 = vrot.lane.b32.xlu0 %v3047, 104
    %v3085 = vpop.permute.xlu0 %3084
    %3086 = vrot.lane.b32.xlu0 %v3048, 104
    %v3087 = vpop.permute.xlu0 %3086
    %3088 = vrot.lane.b32.xlu0 %v3049, 104
    %v3089 = vpop.permute.xlu0 %3088
    %3094 = vst.msk [vmem:[#allocation2 + $0x40] sm:$0xff] %vm3066, %v3083
    %3095 = vst.msk [vmem:[#allocation2 + $0x48] sm:$0xff] %vm3068, %v3083
    %3096 = vst.msk [vmem:[#allocation2 + $0x50] sm:$0xff] %vm3066, %v3085
    %3097 = vst.msk [vmem:[#allocation2 + $0x58] sm:$0xff] %vm3068, %v3085
    %3098 = vst.msk [vmem:[#allocation2 + $0x60] sm:$0xff] %vm3066, %v3087
    %3099 = vst.msk [vmem:[#allocation2 + $0x68] sm:$0xff] %vm3068, %v3087
    %3100 = vst.msk [vmem:[#allocation2 + $0x70] sm:$0x3] %vm3074, %v3089
    %3101 = vst.msk [vmem:[#allocation2 + $0x78] sm:$0x3] %vm3076, %v3089
    %s3102 = sld [smem:[#allocation4 + $0x3b]]
    %v3103 = vstv %s3102
    %v3104 = vadd.f32 %v2816, %v3103
    %v3105 = vadd.f32 %v2817, %v3103
    %v3106 = vadd.f32 %v2818, %v3103
    %v3107 = vadd.f32 %v2819, %v3103
    %v3108 = vadd.f32 %v2820, %v3103
    %v3109 = vadd.f32 %v2821, %v3103
    %v3110 = vadd.f32 %v2822, %v3103
    %v3111 = vadd.f32 %v2823, %v3103
    %v3112 = vmax.f32 %v3104, 0.0
    %v3113 = vmax.f32 %v3105, 0.0
    %v3114 = vmax.f32 %v3106, 0.0
    %v3115 = vmax.f32 %v3107, 0.0
    %v3116 = vmax.f32 %v3108, 0.0
    %v3117 = vmax.f32 %v3109, 0.0
    %v3118 = vmax.f32 %v3110, 0.0
    %v3119 = vmax.f32 %v3111, 0.0
    %3124 = vrot.lane.b32.xlu0 %v3112, 2
    %v3125 = vpop.permute.xlu0 %3124
    %3126 = vrot.lane.b32.xlu0 %v3113, 2
    %v3127 = vpop.permute.xlu0 %3126
    %3128 = vrot.lane.b32.xlu0 %v3114, 2
    %v3129 = vpop.permute.xlu0 %3128
    %3130 = vrot.lane.b32.xlu0 %v3115, 2
    %v3131 = vpop.permute.xlu0 %3130
    %vm3136 = vcmask 228368
    %3137 = vst.msk [vmem:[#allocation2 + $0x8] sm:$0xff] %vm3136, %v3125
    %3138 = vst.msk [vmem:[#allocation2 + $0x18] sm:$0xff] %vm3136, %v3127
    %3139 = vst.msk [vmem:[#allocation2 + $0x28] sm:$0xff] %vm3136, %v3129
    %vm3140 = vcmask 222224
    %3141 = vst.msk [vmem:[#allocation2 + $0x38] sm:$0x3] %vm3140, %v3131
    %3146 = vrot.lane.b32.xlu0 %v3116, 2
    %v3147 = vpop.permute.xlu0 %3146
    %3148 = vrot.lane.b32.xlu0 %v3117, 2
    %v3149 = vpop.permute.xlu0 %3148
    %3150 = vrot.lane.b32.xlu0 %v3118, 2
    %v3151 = vpop.permute.xlu0 %3150
    %3152 = vrot.lane.b32.xlu0 %v3119, 2
    %v3153 = vpop.permute.xlu0 %3152
    %3158 = vst.msk [vmem:[#allocation2 + $0x48] sm:$0xff] %vm3136, %v3147
    %3159 = vst.msk [vmem:[#allocation2 + $0x58] sm:$0xff] %vm3136, %v3149
    %3160 = vst.msk [vmem:[#allocation2 + $0x68] sm:$0xff] %vm3136, %v3151
    %3161 = vst.msk [vmem:[#allocation2 + $0x78] sm:$0x3] %vm3140, %v3153
    %v3162 = vld [vmem:[#allocation2] sm:$0xff]
    %v3163 = vld [vmem:[#allocation2 + $0x8] sm:$0xff]
    %v3164 = vld [vmem:[#allocation2 + $0x10] sm:$0xff]
    %v3165 = vld [vmem:[#allocation2 + $0x18] sm:$0xff]
    %v3166 = vld [vmem:[#allocation2 + $0x20] sm:$0xff]
    %v3167 = vld [vmem:[#allocation2 + $0x28] sm:$0xff]
    %v3168 = vld [vmem:[#allocation2 + $0x30] sm:$0xff]
    %v3169 = vld [vmem:[#allocation2 + $0x38] sm:$0xff]
    %v3170 = vld [vmem:[#allocation2 + $0x40] sm:$0xff]
    %v3171 = vld [vmem:[#allocation2 + $0x48] sm:$0xff]
    %v3172 = vld [vmem:[#allocation2 + $0x50] sm:$0xff]
    %v3173 = vld [vmem:[#allocation2 + $0x58] sm:$0xff]
    %v3174 = vld [vmem:[#allocation2 + $0x60] sm:$0xff]
    %v3175 = vld [vmem:[#allocation2 + $0x68] sm:$0xff]
    %v3176 = vld [vmem:[#allocation2 + $0x70] sm:$0xff]
    %v3177 = vld [vmem:[#allocation2 + $0x78] sm:$0xff]
    %v3178 = vld [vmem:[%s2] sm:$0xff]
    %v3179 = vld [vmem:[%s2 + $0x8] sm:$0xff]
    %v3180 = vld [vmem:[%s2 + $0x10] sm:$0xff]
    %v3181 = vld [vmem:[%s2 + $0x18] sm:$0xff]
    %vm3182 = vcmask 523264
    %v3184 = vsel %vm3182, %v3178, 0
    %v3187 = vsel %vm3182, %v3179, 0
    %v3190 = vsel %vm3182, %v3180, 0
    %v3193 = vsel %vm3182, %v3181, 0
    %3195 = vmatprep.subr.mxu0 0.0
    %3196 = vmatpush1.msra.mxu0 0.0
    %3197 = vmatprep.subr.mxu0 0.0
    %3198 = vmatpush1.msra.mxu0 0.0
    %3199 = vmatprep.subr.mxu0 0.0
    %3200 = vmatpush1.msra.mxu0 0.0
    %3201 = vmatprep.subr.mxu0 0.0
    %3202 = vmatpush1.msra.mxu0 0.0
    %3203 = vmatprep.subr.mxu0 0.0
    %3204 = vmatpush1.msra.mxu0 0.0
    %3205 = vmatprep.subr.mxu0 0.0
    %3206 = vmatpush1.msra.mxu0 0.0
    %3207 = vmatprep.subr.mxu0 0.0
    %3208 = vmatpush1.msra.mxu0 0.0
    %3209 = vmatprep.subr.mxu0 0.0
    %3210 = vmatpush1.msra.mxu0 0.0
    %3211 = vmatprep.subr.mxu0 %v3177
    %3212 = vmatpush1.msra.mxu0 %v3176
    %3213 = vmatprep.subr.mxu0 %v3175
    %3214 = vmatpush1.msra.mxu0 %v3174
    %3215 = vmatprep.subr.mxu0 %v3173
    %3216 = vmatpush1.msra.mxu0 %v3172
    %3217 = vmatprep.subr.mxu0 %v3171
    %3218 = vmatpush1.msra.mxu0 %v3170
    %3219 = vmatprep.subr.mxu0 %v3169
    %3220 = vmatpush1.msra.mxu0 %v3168
    %3221 = vmatprep.subr.mxu0 %v3167
    %3222 = vmatpush1.msra.mxu0 %v3166
    %3223 = vmatprep.subr.mxu0 %v3165
    %3224 = vmatpush1.msra.mxu0 %v3164
    %3225 = vmatprep.subr.mxu0 %v3163
    %3226 = vmatpush1.msra.mxu0 %v3162
    %3227 = vmatprep.subr.mxu0 0.0
    %3228 = vmatpush2.msra.mxu0 0.0
    %3229 = vmatprep.subr.mxu0 0.0
    %3230 = vmatpush2.msra.mxu0 0.0
    %3231 = vmatprep.subr.mxu0 0.0
    %3232 = vmatpush2.msra.mxu0 0.0
    %3233 = vmatprep.subr.mxu0 0.0
    %3234 = vmatpush2.msra.mxu0 0.0
    %3235 = vmatprep.subr.mxu0 0.0
    %3236 = vmatpush2.msra.mxu0 0.0
    %3237 = vmatprep.subr.mxu0 0.0
    %3238 = vmatpush2.msra.mxu0 0.0
    %3239 = vmatprep.subr.mxu0 0.0
    %3240 = vmatpush2.msra.mxu0 0.0
    %3241 = vmatprep.subr.mxu0 0.0
    %3242 = vmatpush2.msra.mxu0 0.0
    %3243 = vmatprep.subr.mxu0 0.0
    %3244 = vmatpush2.msra.mxu0 0.0
    %3245 = vmatprep.subr.mxu0 0.0
    %3246 = vmatpush2.msra.mxu0 0.0
    %3247 = vmatprep.subr.mxu0 0.0
    %3248 = vmatpush2.msra.mxu0 0.0
    %3249 = vmatprep.subr.mxu0 0.0
    %3250 = vmatpush2.msra.mxu0 0.0
    %3251 = vmatprep.subr.mxu0 0.0
    %3252 = vmatpush2.msra.mxu0 0.0
    %3253 = vmatprep.subr.mxu0 0.0
    %3254 = vmatpush2.msra.mxu0 0.0
    %3255 = vmatprep.subr.mxu0 0.0
    %3256 = vmatpush2.msra.mxu0 0.0
    %3257 = vmatprep.subr.mxu0 0.0
    %3258 = vmatpush2.msra.mxu0 0.0
    %3259 = vmatprep.mubr.f32.mxu0 0.0
    %3260 = vmatmul.mubr.f32.gmra.mxu0 %v3184
    %v3261 = vpop.f32.mrf.mxu0
    %v3262 = vadd.f32 0.0, %v3261
    %v3263 = vpop.f32.mrf.mxu0
    %v3264 = vadd.f32 0.0, %v3263
    %3265 = vmatprep.mubr.f32.mxu0 0.0
    %3266 = vmatmul.mubr.f32.gmra.mxu0 %v3187
    %v3267 = vpop.f32.mrf.mxu0
    %v3268 = vadd.f32 0.0, %v3267
    %v3269 = vpop.f32.mrf.mxu0
    %v3270 = vadd.f32 0.0, %v3269
    %3271 = vmatprep.mubr.f32.mxu0 0.0
    %3272 = vmatmul.mubr.f32.gmra.mxu0 %v3190
    %v3273 = vpop.f32.mrf.mxu0
    %v3274 = vadd.f32 0.0, %v3273
    %v3275 = vpop.f32.mrf.mxu0
    %v3276 = vadd.f32 0.0, %v3275
    %3277 = vmatprep.mubr.f32.mxu0 0.0
    %3278 = vmatmul.mubr.f32.gmra.mxu0 %v3193
    %v3279 = vpop.f32.mrf.mxu0
    %v3280 = vadd.f32 0.0, %v3279
    %v3281 = vpop.f32.mrf.mxu0
    %v3282 = vadd.f32 0.0, %v3281
    %3283 = vdwg.mxu0
    %s3284 = scalar_lea.vmem %s2, 32
    %v3285 = vld [vmem:[%s3284] sm:$0xff]
    %v3286 = vld [vmem:[%s3284 + $0x8] sm:$0xff]
    %v3287 = vld [vmem:[%s3284 + $0x10] sm:$0xff]
    %v3288 = vld [vmem:[%s3284 + $0x18] sm:$0xff]
    %v3290 = vsel %vm3182, %v3285, 0
    %v3293 = vsel %vm3182, %v3286, 0
    %v3296 = vsel %vm3182, %v3287, 0
    %v3299 = vsel %vm3182, %v3288, 0
    %3301 = vmatprep.subr.mxu0 0.0
    %3302 = vmatpush1.msra.mxu0 0.0
    %3303 = vmatprep.subr.mxu0 0.0
    %3304 = vmatpush1.msra.mxu0 0.0
    %3305 = vmatprep.subr.mxu0 0.0
    %3306 = vmatpush1.msra.mxu0 0.0
    %3307 = vmatprep.subr.mxu0 0.0
    %3308 = vmatpush1.msra.mxu0 0.0
    %3309 = vmatprep.subr.mxu0 0.0
    %3310 = vmatpush1.msra.mxu0 0.0
    %3311 = vmatprep.subr.mxu0 0.0
    %3312 = vmatpush1.msra.mxu0 0.0
    %3313 = vmatprep.subr.mxu0 0.0
    %3314 = vmatpush1.msra.mxu0 0.0
    %3315 = vmatprep.subr.mxu0 0.0
    %3316 = vmatpush1.msra.mxu0 0.0
    %3317 = vmatprep.subr.mxu0 %v3177
    %3318 = vmatpush1.msra.mxu0 %v3176
    %3319 = vmatprep.subr.mxu0 %v3175
    %3320 = vmatpush1.msra.mxu0 %v3174
    %3321 = vmatprep.subr.mxu0 %v3173
    %3322 = vmatpush1.msra.mxu0 %v3172
    %3323 = vmatprep.subr.mxu0 %v3171
    %3324 = vmatpush1.msra.mxu0 %v3170
    %3325 = vmatprep.subr.mxu0 %v3169
    %3326 = vmatpush1.msra.mxu0 %v3168
    %3327 = vmatprep.subr.mxu0 %v3167
    %3328 = vmatpush1.msra.mxu0 %v3166
    %3329 = vmatprep.subr.mxu0 %v3165
    %3330 = vmatpush1.msra.mxu0 %v3164
    %3331 = vmatprep.subr.mxu0 %v3163
    %3332 = vmatpush1.msra.mxu0 %v3162
    %3333 = vmatprep.subr.mxu0 0.0
    %3334 = vmatpush2.msra.mxu0 0.0
    %3335 = vmatprep.subr.mxu0 0.0
    %3336 = vmatpush2.msra.mxu0 0.0
    %3337 = vmatprep.subr.mxu0 0.0
    %3338 = vmatpush2.msra.mxu0 0.0
    %3339 = vmatprep.subr.mxu0 0.0
    %3340 = vmatpush2.msra.mxu0 0.0
    %3341 = vmatprep.subr.mxu0 0.0
    %3342 = vmatpush2.msra.mxu0 0.0
    %3343 = vmatprep.subr.mxu0 0.0
    %3344 = vmatpush2.msra.mxu0 0.0
    %3345 = vmatprep.subr.mxu0 0.0
    %3346 = vmatpush2.msra.mxu0 0.0
    %3347 = vmatprep.subr.mxu0 0.0
    %3348 = vmatpush2.msra.mxu0 0.0
    %3349 = vmatprep.subr.mxu0 0.0
    %3350 = vmatpush2.msra.mxu0 0.0
    %3351 = vmatprep.subr.mxu0 0.0
    %3352 = vmatpush2.msra.mxu0 0.0
    %3353 = vmatprep.subr.mxu0 0.0
    %3354 = vmatpush2.msra.mxu0 0.0
    %3355 = vmatprep.subr.mxu0 0.0
    %3356 = vmatpush2.msra.mxu0 0.0
    %3357 = vmatprep.subr.mxu0 0.0
    %3358 = vmatpush2.msra.mxu0 0.0
    %3359 = vmatprep.subr.mxu0 0.0
    %3360 = vmatpush2.msra.mxu0 0.0
    %3361 = vmatprep.subr.mxu0 0.0
    %3362 = vmatpush2.msra.mxu0 0.0
    %3363 = vmatprep.subr.mxu0 0.0
    %3364 = vmatpush2.msra.mxu0 0.0
    %3365 = vmatprep.mubr.f32.mxu0 0.0
    %3366 = vmatmul.mubr.f32.gmra.mxu0 %v3290
    %v3367 = vpop.f32.mrf.mxu0
    %v3368 = vadd.f32 0.0, %v3367
    %v3369 = vpop.f32.mrf.mxu0
    %v3370 = vadd.f32 0.0, %v3369
    %3371 = vmatprep.mubr.f32.mxu0 0.0
    %3372 = vmatmul.mubr.f32.gmra.mxu0 %v3293
    %v3373 = vpop.f32.mrf.mxu0
    %v3374 = vadd.f32 0.0, %v3373
    %v3375 = vpop.f32.mrf.mxu0
    %v3376 = vadd.f32 0.0, %v3375
    %3377 = vmatprep.mubr.f32.mxu0 0.0
    %3378 = vmatmul.mubr.f32.gmra.mxu0 %v3296
    %v3379 = vpop.f32.mrf.mxu0
    %v3380 = vadd.f32 0.0, %v3379
    %v3381 = vpop.f32.mrf.mxu0
    %v3382 = vadd.f32 0.0, %v3381
    %3383 = vmatprep.mubr.f32.mxu0 0.0
    %3384 = vmatmul.mubr.f32.gmra.mxu0 %v3299
    %v3385 = vpop.f32.mrf.mxu0
    %v3386 = vadd.f32 0.0, %v3385
    %v3387 = vpop.f32.mrf.mxu0
    %v3388 = vadd.f32 0.0, %v3387
    %3389 = vdwg.mxu0
    %v3390 = vmax.f32 %v3262, %v3368
    %v3391 = vmax.f32 %v3264, %v3370
    %v3392 = vmax.f32 %v3268, %v3374
    %v3393 = vmax.f32 %v3270, %v3376
    %v3394 = vmax.f32 %v3274, %v3380
    %v3395 = vmax.f32 %v3276, %v3382
    %v3396 = vmax.f32 %v3280, %v3386
    %v3397 = vmax.f32 %v3282, %v3388
    %v3398 = vld [vmem:[%s3] sm:$0xff]
    %v3399 = vld [vmem:[%s3 + $0x8] sm:$0xff]
    %v3400 = vld [vmem:[%s3 + $0x10] sm:$0xff]
    %v3401 = vld [vmem:[%s3 + $0x18] sm:$0xff]
    %v3402 = vld [vmem:[%s3 + $0x20] sm:$0xff]
    %v3403 = vld [vmem:[%s3 + $0x28] sm:$0xff]
    %v3404 = vld [vmem:[%s3 + $0x30] sm:$0xff]
    %v3405 = vld [vmem:[%s3 + $0x38] sm:$0xff]
    %v3406 = vld [vmem:[%s3 + $0x40] sm:$0xff]
    %v3407 = vld [vmem:[%s3 + $0x48] sm:$0xff]
    %v3408 = vld [vmem:[%s3 + $0x50] sm:$0xff]
    %v3409 = vld [vmem:[%s3 + $0x58] sm:$0xff]
    %v3410 = vld [vmem:[%s3 + $0x60] sm:$0xff]
    %v3411 = vld [vmem:[%s3 + $0x68] sm:$0xff]
    %v3412 = vld [vmem:[%s3 + $0x70] sm:$0xff]
    %v3413 = vld [vmem:[%s3 + $0x78] sm:$0xff]
    %v3414 = vld [vmem:[%s3 + $0x80] sm:$0xff]
    %v3415 = vld [vmem:[%s3 + $0x88] sm:$0xff]
    %v3416 = vld [vmem:[%s3 + $0x90] sm:$0xff]
    %v3417 = vld [vmem:[%s3 + $0x98] sm:$0xf]
    %vm3418 = vcmask 228352
    %v3420 = vsel %vm3418, %v3391, 0
    %v3423 = vsel %vm3418, %v3393, 0
    %v3426 = vsel %vm3418, %v3395, 0
    %v3429 = vsel %vm3418, %v3397, 0
    %vm3431 = vcmask 1043456
    %v3433 = vsel %vm3431, %v3417, 0
    %3435 = vmatprep.subr.mxu0 0.0
    %3436 = vmatpush1.msra.mxu0 %v3413
    %3437 = vmatprep.subr.mxu0 0.0
    %3438 = vmatpush1.msra.mxu0 %v3412
    %3439 = vmatprep.subr.mxu0 0.0
    %3440 = vmatpush1.msra.mxu0 %v3411
    %3441 = vmatprep.subr.mxu0 0.0
    %3442 = vmatpush1.msra.mxu0 %v3410
    %3443 = vmatprep.subr.mxu0 0.0
    %3444 = vmatpush1.msra.mxu0 %v3409
    %3445 = vmatprep.subr.mxu0 0.0
    %3446 = vmatpush1.msra.mxu0 %v3408
    %3447 = vmatprep.subr.mxu0 0.0
    %3448 = vmatpush1.msra.mxu0 %v3407
    %3449 = vmatprep.subr.mxu0 0.0
    %3450 = vmatpush1.msra.mxu0 %v3406
    %3451 = vmatprep.subr.mxu0 0.0
    %3452 = vmatpush1.msra.mxu0 %v3405
    %3453 = vmatprep.subr.mxu0 0.0
    %3454 = vmatpush1.msra.mxu0 %v3404
    %3455 = vmatprep.subr.mxu0 0.0
    %3456 = vmatpush1.msra.mxu0 %v3403
    %3457 = vmatprep.subr.mxu0 0.0
    %3458 = vmatpush1.msra.mxu0 %v3402
    %3459 = vmatprep.subr.mxu0 0.0
    %3460 = vmatpush1.msra.mxu0 %v3401
    %3461 = vmatprep.subr.mxu0 0.0
    %3462 = vmatpush1.msra.mxu0 %v3400
    %3463 = vmatprep.subr.mxu0 0.0
    %3464 = vmatpush1.msra.mxu0 %v3399
    %3465 = vmatprep.subr.mxu0 0.0
    %3466 = vmatpush1.msra.mxu0 %v3398
    %3467 = vmatprep.subr.mxu0 0.0
    %3468 = vmatpush2.msra.mxu0 0.0
    %3469 = vmatprep.subr.mxu0 0.0
    %3470 = vmatpush2.msra.mxu0 0.0
    %3471 = vmatprep.subr.mxu0 0.0
    %3472 = vmatpush2.msra.mxu0 0.0
    %3473 = vmatprep.subr.mxu0 0.0
    %3474 = vmatpush2.msra.mxu0 0.0
    %3475 = vmatprep.subr.mxu0 0.0
    %3476 = vmatpush2.msra.mxu0 0.0
    %3477 = vmatprep.subr.mxu0 0.0
    %3478 = vmatpush2.msra.mxu0 0.0
    %3479 = vmatprep.subr.mxu0 0.0
    %3480 = vmatpush2.msra.mxu0 0.0
    %3481 = vmatprep.subr.mxu0 0.0
    %3482 = vmatpush2.msra.mxu0 0.0
    %3483 = vmatprep.subr.mxu0 0.0
    %3484 = vmatpush2.msra.mxu0 0.0
    %3485 = vmatprep.subr.mxu0 0.0
    %3486 = vmatpush2.msra.mxu0 0.0
    %3487 = vmatprep.subr.mxu0 0.0
    %3488 = vmatpush2.msra.mxu0 0.0
    %3489 = vmatprep.subr.mxu0 0.0
    %3490 = vmatpush2.msra.mxu0 0.0
    %3491 = vmatprep.subr.mxu0 0.0
    %3492 = vmatpush2.msra.mxu0 %v3433
    %3493 = vmatprep.subr.mxu0 0.0
    %3494 = vmatpush2.msra.mxu0 %v3416
    %3495 = vmatprep.subr.mxu0 0.0
    %3496 = vmatpush2.msra.mxu0 %v3415
    %3497 = vmatprep.subr.mxu0 0.0
    %3498 = vmatpush2.msra.mxu0 %v3414
    %3499 = vmatprep.mubr.f32.mxu0 %v3420
    %3500 = vmatmul.mubr.f32.gmra.mxu0 %v3390
    %v3501 = vpop.f32.mrf.mxu0
    %v3502 = vadd.f32 0.0, %v3501
    %v3503 = vpop.f32.mrf.mxu0
    %3504 = vmatprep.mubr.f32.mxu0 %v3423
    %3505 = vmatmul.mubr.f32.gmra.mxu0 %v3392
    %v3506 = vpop.f32.mrf.mxu0
    %v3507 = vadd.f32 0.0, %v3506
    %v3508 = vpop.f32.mrf.mxu0
    %3509 = vmatprep.mubr.f32.mxu0 %v3426
    %3510 = vmatmul.mubr.f32.gmra.mxu0 %v3394
    %v3511 = vpop.f32.mrf.mxu0
    %v3512 = vadd.f32 0.0, %v3511
    %v3513 = vpop.f32.mrf.mxu0
    %3514 = vmatprep.mubr.f32.mxu0 %v3429
    %3515 = vmatmul.mubr.f32.gmra.mxu0 %v3396
    %v3516 = vpop.f32.mrf.mxu0
    %v3517 = vadd.f32 0.0, %v3516
    %v3518 = vpop.f32.mrf.mxu0
    %3519 = vdwg.mxu0
    %s3520 = scalar_lea.vmem %s3, 160
    %v3521 = vld [vmem:[%s3520] sm:$0xff]
    %v3522 = vld [vmem:[%s3520 + $0x8] sm:$0xff]
    %v3523 = vld [vmem:[%s3520 + $0x10] sm:$0xff]
    %v3524 = vld [vmem:[%s3520 + $0x18] sm:$0xff]
    %v3525 = vld [vmem:[%s3520 + $0x20] sm:$0xff]
    %v3526 = vld [vmem:[%s3520 + $0x28] sm:$0xff]
    %v3527 = vld [vmem:[%s3520 + $0x30] sm:$0xff]
    %v3528 = vld [vmem:[%s3520 + $0x38] sm:$0xff]
    %v3529 = vld [vmem:[%s3520 + $0x40] sm:$0xff]
    %v3530 = vld [vmem:[%s3520 + $0x48] sm:$0xff]
    %v3531 = vld [vmem:[%s3520 + $0x50] sm:$0xff]
    %v3532 = vld [vmem:[%s3520 + $0x58] sm:$0xff]
    %v3533 = vld [vmem:[%s3520 + $0x60] sm:$0xff]
    %v3534 = vld [vmem:[%s3520 + $0x68] sm:$0xff]
    %v3535 = vld [vmem:[%s3520 + $0x70] sm:$0xff]
    %v3536 = vld [vmem:[%s3520 + $0x78] sm:$0xff]
    %v3537 = vld [vmem:[%s3520 + $0x80] sm:$0xff]
    %v3538 = vld [vmem:[%s3520 + $0x88] sm:$0xff]
    %v3539 = vld [vmem:[%s3520 + $0x90] sm:$0xff]
    %v3540 = vld [vmem:[%s3520 + $0x98] sm:$0xf]
    %v3542 = vsel %vm3431, %v3540, 0
    %3544 = vmatprep.subr.mxu0 0.0
    %3545 = vmatpush1.msra.mxu0 %v3536
    %3546 = vmatprep.subr.mxu0 0.0
    %3547 = vmatpush1.msra.mxu0 %v3535
    %3548 = vmatprep.subr.mxu0 0.0
    %3549 = vmatpush1.msra.mxu0 %v3534
    %3550 = vmatprep.subr.mxu0 0.0
    %3551 = vmatpush1.msra.mxu0 %v3533
    %3552 = vmatprep.subr.mxu0 0.0
    %3553 = vmatpush1.msra.mxu0 %v3532
    %3554 = vmatprep.subr.mxu0 0.0
    %3555 = vmatpush1.msra.mxu0 %v3531
    %3556 = vmatprep.subr.mxu0 0.0
    %3557 = vmatpush1.msra.mxu0 %v3530
    %3558 = vmatprep.subr.mxu0 0.0
    %3559 = vmatpush1.msra.mxu0 %v3529
    %3560 = vmatprep.subr.mxu0 0.0
    %3561 = vmatpush1.msra.mxu0 %v3528
    %3562 = vmatprep.subr.mxu0 0.0
    %3563 = vmatpush1.msra.mxu0 %v3527
    %3564 = vmatprep.subr.mxu0 0.0
    %3565 = vmatpush1.msra.mxu0 %v3526
    %3566 = vmatprep.subr.mxu0 0.0
    %3567 = vmatpush1.msra.mxu0 %v3525
    %3568 = vmatprep.subr.mxu0 0.0
    %3569 = vmatpush1.msra.mxu0 %v3524
    %3570 = vmatprep.subr.mxu0 0.0
    %3571 = vmatpush1.msra.mxu0 %v3523
    %3572 = vmatprep.subr.mxu0 0.0
    %3573 = vmatpush1.msra.mxu0 %v3522
    %3574 = vmatprep.subr.mxu0 0.0
    %3575 = vmatpush1.msra.mxu0 %v3521
    %3576 = vmatprep.subr.mxu0 0.0
    %3577 = vmatpush2.msra.mxu0 0.0
    %3578 = vmatprep.subr.mxu0 0.0
    %3579 = vmatpush2.msra.mxu0 0.0
    %3580 = vmatprep.subr.mxu0 0.0
    %3581 = vmatpush2.msra.mxu0 0.0
    %3582 = vmatprep.subr.mxu0 0.0
    %3583 = vmatpush2.msra.mxu0 0.0
    %3584 = vmatprep.subr.mxu0 0.0
    %3585 = vmatpush2.msra.mxu0 0.0
    %3586 = vmatprep.subr.mxu0 0.0
    %3587 = vmatpush2.msra.mxu0 0.0
    %3588 = vmatprep.subr.mxu0 0.0
    %3589 = vmatpush2.msra.mxu0 0.0
    %3590 = vmatprep.subr.mxu0 0.0
    %3591 = vmatpush2.msra.mxu0 0.0
    %3592 = vmatprep.subr.mxu0 0.0
    %3593 = vmatpush2.msra.mxu0 0.0
    %3594 = vmatprep.subr.mxu0 0.0
    %3595 = vmatpush2.msra.mxu0 0.0
    %3596 = vmatprep.subr.mxu0 0.0
    %3597 = vmatpush2.msra.mxu0 0.0
    %3598 = vmatprep.subr.mxu0 0.0
    %3599 = vmatpush2.msra.mxu0 0.0
    %3600 = vmatprep.subr.mxu0 0.0
    %3601 = vmatpush2.msra.mxu0 %v3542
    %3602 = vmatprep.subr.mxu0 0.0
    %3603 = vmatpush2.msra.mxu0 %v3539
    %3604 = vmatprep.subr.mxu0 0.0
    %3605 = vmatpush2.msra.mxu0 %v3538
    %3606 = vmatprep.subr.mxu0 0.0
    %3607 = vmatpush2.msra.mxu0 %v3537
    %3608 = vmatprep.mubr.f32.mxu0 %v3420
    %3609 = vmatmul.mubr.f32.gmra.mxu0 %v3390
    %v3610 = vpop.f32.mrf.mxu0
    %v3611 = vadd.f32 0.0, %v3610
    %v3612 = vpop.f32.mrf.mxu0
    %3613 = vmatprep.mubr.f32.mxu0 %v3423
    %3614 = vmatmul.mubr.f32.gmra.mxu0 %v3392
    %v3615 = vpop.f32.mrf.mxu0
    %v3616 = vadd.f32 0.0, %v3615
    %v3617 = vpop.f32.mrf.mxu0
    %3618 = vmatprep.mubr.f32.mxu0 %v3426
    %3619 = vmatmul.mubr.f32.gmra.mxu0 %v3394
    %v3620 = vpop.f32.mrf.mxu0
    %v3621 = vadd.f32 0.0, %v3620
    %v3622 = vpop.f32.mrf.mxu0
    %3623 = vmatprep.mubr.f32.mxu0 %v3429
    %3624 = vmatmul.mubr.f32.gmra.mxu0 %v3396
    %v3625 = vpop.f32.mrf.mxu0
    %v3626 = vadd.f32 0.0, %v3625
    %v3627 = vpop.f32.mrf.mxu0
    %3628 = vdwg.mxu0
    %v3629 = vmax.f32 %v3502, %v3611
    %v3630 = vmax.f32 %v3507, %v3616
    %v3631 = vmax.f32 %v3512, %v3621
    %v3632 = vmax.f32 %v3517, %v3626
    %vm3633 = vcmask 630784
    %3634 = vst.msk [vmem:[#allocation3] sm:$0x1] %vm3633, %v3629
    %v3637 = vunpack.c.l.s4 1983009808
    %v3638 = vunpack.c.0.s8 %v3637
    %v3639 = vlaneseq
    %v3640 = vshrl.u32 %v3639, 7
    %v3641 = vsub.s32 %v3638, %v3640
    %v3642 = vrot.slane %v3629, %v3641
    %v3643 = vrot.slane %v3642, 7
    %v3644 = vrot.slane %v3643, 2
    %3645 = vrot.lane.b32.xlu0 %v3644, 78
    %v3646 = vpop.permute.xlu0 %3645
    %v3647 = vrot.slane %v3646, 6
    %vm3648 = vcmask 637952
    %v3649 = vsel %vm3648, %v3647, %v3646
    %vm3651 = vcmask 1041008
    %vm3652 = vcmask 223234
    %vm3653 = vmor %vm3652, %vm3651
    %3654 = vst.msk [vmem:[#allocation3] sm:$0x5] %vm3653, %v3649
    %v3655 = vcombine.high %v3642, %v3642
    %3656 = vrot.lane.b32.xlu0 %v3655, 28
    %v3657 = vpop.permute.xlu0 %3656
    %vm3659 = vcmask 860384
    %3660 = vst.msk [vmem:[#allocation3 + $0x2] sm:$0x1] %vm3659, %v3657
    %v3661 = vrot.slane %v3655, 7
    %v3662 = vrot.slane %v3661, 2
    %3663 = vrot.lane.b32.xlu0 %v3662, 106
    %v3664 = vpop.permute.xlu0 %3663
    %v3665 = vrot.slane %v3664, 6
    %vm3666 = vcmask 867328
    %v3667 = vsel %vm3666, %v3665, %v3664
    %vm3669 = vcmask 1041232
    %vm3670 = vcmask 452610
    %vm3671 = vmor %vm3670, %vm3669
    %3672 = vst.msk [vmem:[#allocation3 + $0x2] sm:$0x5] %vm3671, %v3667
    %v3673 = vcombine.high %v3629, %v3629
    %v3675 = vunpack.c.l.s4 1983009808
    %v3676 = vunpack.c.0.s8 %v3675
    %v3677 = vlaneseq
    %v3678 = vshrl.u32 %v3677, 7
    %v3679 = vsub.s32 %v3676, %v3678
    %v3680 = vrot.slane %v3673, %v3679
    %3681 = vrot.lane.b32.xlu0 %v3680, 56
    %v3682 = vpop.permute.xlu0 %3681
    %v3683 = vrot.slane %v3682, 6
    %vm3684 = vcmask 457728
    %v3685 = vsel %vm3684, %v3683, %v3682
    %vm3687 = vcmask 1040832
    %vm3688 = vcmask 43010
    %vm3689 = vmor %vm3688, %vm3687
    %3690 = vst.msk [vmem:[#allocation3 + $0x4] sm:$0x5] %vm3689, %v3685
    %v3691 = vrot.slane %v3680, 7
    %v3692 = vrot.slane %v3691, 2
    %3693 = vrot.lane.b32.xlu0 %v3692, 6
    %v3694 = vpop.permute.xlu0 %3693
    %vm3696 = vcmask 679984
    %3697 = vst.msk [vmem:[#allocation3 + $0x6] sm:$0x1] %vm3696, %v3694
    %v3698 = vcombine.high %v3680, %v3680
    %3699 = vrot.lane.b32.xlu0 %v3698, 84
    %v3700 = vpop.permute.xlu0 %3699
    %v3701 = vrot.slane %v3700, 6
    %vm3702 = vcmask 687104
    %v3703 = vsel %vm3702, %v3701, %v3700
    %vm3705 = vcmask 1041056
    %vm3706 = vcmask 272386
    %vm3707 = vmor %vm3706, %vm3705
    %3708 = vst.msk [vmem:[#allocation3 + $0x6] sm:$0x5] %vm3707, %v3703
    %v3709 = vrot.slane %v3698, 7
    %v3710 = vrot.slane %v3709, 2
    %3711 = vrot.lane.b32.xlu0 %v3710, 34
    %v3712 = vpop.permute.xlu0 %3711
    %vm3714 = vcmask 909584
    %3715 = vst.msk [vmem:[#allocation3 + $0x8] sm:$0x1] %vm3714, %v3712
    %v3718 = vunpack.c.l.s4 1983009808
    %v3719 = vunpack.c.0.s8 %v3718
    %v3720 = vlaneseq
    %v3721 = vshrl.u32 %v3720, 7
    %v3722 = vsub.s32 %v3719, %v3721
    %v3723 = vrot.slane %v3630, %v3722
    %3724 = vrot.lane.b32.xlu0 %v3723, 112
    %v3725 = vpop.permute.xlu0 %3724
    %v3726 = vrot.slane %v3725, 6
    %vm3727 = vcmask 916480
    %v3728 = vsel %vm3727, %v3726, %v3725
    %vm3730 = vcmask 1041280
    %vm3731 = vcmask 501762
    %vm3732 = vmor %vm3731, %vm3730
    %3733 = vst.msk [vmem:[#allocation3 + $0x8] sm:$0x5] %vm3732, %v3728
    %v3734 = vrot.slane %v3723, 7
    %v3735 = vrot.slane %v3734, 2
    %3736 = vrot.lane.b32.xlu0 %v3735, 62
    %v3737 = vpop.permute.xlu0 %3736
    %v3738 = vrot.slane %v3737, 6
    %vm3739 = vcmask 506880
    %v3740 = vsel %vm3739, %v3738, %v3737
    %vm3742 = vcmask 1040880
    %vm3743 = vcmask 92162
    %vm3744 = vmor %vm3743, %vm3742
    %3745 = vst.msk [vmem:[#allocation3 + $0xa] sm:$0x5] %vm3744, %v3740
    %v3746 = vcombine.high %v3723, %v3723
    %3747 = vrot.lane.b32.xlu0 %v3746, 12
    %v3748 = vpop.permute.xlu0 %3747
    %vm3750 = vcmask 729184
    %3751 = vst.msk [vmem:[#allocation3 + $0xc] sm:$0x1] %vm3750, %v3748
    %v3752 = vrot.slane %v3746, 7
    %v3753 = vrot.slane %v3752, 2
    %3754 = vrot.lane.b32.xlu0 %v3753, 90
    %v3755 = vpop.permute.xlu0 %3754
    %v3756 = vrot.slane %v3755, 6
    %vm3757 = vcmask 736256
    %v3758 = vsel %vm3757, %v3756, %v3755
    %vm3760 = vcmask 1041104
    %vm3761 = vcmask 321538
    %vm3762 = vmor %vm3761, %vm3760
    %3763 = vst.msk [vmem:[#allocation3 + $0xc] sm:$0x5] %vm3762, %v3758
    %v3764 = vcombine.high %v3630, %v3630
    %v3766 = vunpack.c.l.s4 1983009808
    %v3767 = vunpack.c.0.s8 %v3766
    %v3768 = vlaneseq
    %v3769 = vshrl.u32 %v3768, 7
    %v3770 = vsub.s32 %v3767, %v3769
    %v3771 = vrot.slane %v3764, %v3770
    %3772 = vrot.lane.b32.xlu0 %v3771, 40
    %v3773 = vpop.permute.xlu0 %3772
    %vm3775 = vcmask 958784
    %3776 = vst.msk [vmem:[#allocation3 + $0xe] sm:$0x1] %vm3775, %v3773
    %3777 = vst.msk [vmem:[#allocation3 + $0x1] sm:$0x1] %vm3633, %v3631
    %v3780 = vunpack.c.l.s4 1983009808
    %v3781 = vunpack.c.0.s8 %v3780
    %v3782 = vlaneseq
    %v3783 = vshrl.u32 %v3782, 7
    %v3784 = vsub.s32 %v3781, %v3783
    %v3785 = vrot.slane %v3631, %v3784
    %v3786 = vrot.slane %v3785, 7
    %v3787 = vrot.slane %v3786, 2
    %3788 = vrot.lane.b32.xlu0 %v3787, 78
    %v3789 = vpop.permute.xlu0 %3788
    %v3790 = vrot.slane %v3789, 6
    %v3791 = vsel %vm3648, %v3790, %v3789
    %3793 = vst.msk [vmem:[#allocation3 + $0x1] sm:$0x5] %vm3653, %v3791
    %v3794 = vcombine.high %v3785, %v3785
    %3795 = vrot.lane.b32.xlu0 %v3794, 28
    %v3796 = vpop.permute.xlu0 %3795
    %3798 = vst.msk [vmem:[#allocation3 + $0x3] sm:$0x1] %vm3659, %v3796
    %v3799 = vrot.slane %v3794, 7
    %v3800 = vrot.slane %v3799, 2
    %3801 = vrot.lane.b32.xlu0 %v3800, 106
    %v3802 = vpop.permute.xlu0 %3801
    %v3803 = vrot.slane %v3802, 6
    %v3804 = vsel %vm3666, %v3803, %v3802
    %3806 = vst.msk [vmem:[#allocation3 + $0x3] sm:$0x5] %vm3671, %v3804
    %v3807 = vcombine.high %v3631, %v3631
    %v3809 = vunpack.c.l.s4 1983009808
    %v3810 = vunpack.c.0.s8 %v3809
    %v3811 = vlaneseq
    %v3812 = vshrl.u32 %v3811, 7
    %v3813 = vsub.s32 %v3810, %v3812
    %v3814 = vrot.slane %v3807, %v3813
    %3815 = vrot.lane.b32.xlu0 %v3814, 56
    %v3816 = vpop.permute.xlu0 %3815
    %v3817 = vrot.slane %v3816, 6
    %v3818 = vsel %vm3684, %v3817, %v3816
    %3820 = vst.msk [vmem:[#allocation3 + $0x5] sm:$0x5] %vm3689, %v3818
    %v3821 = vrot.slane %v3814, 7
    %v3822 = vrot.slane %v3821, 2
    %3823 = vrot.lane.b32.xlu0 %v3822, 6
    %v3824 = vpop.permute.xlu0 %3823
    %3826 = vst.msk [vmem:[#allocation3 + $0x7] sm:$0x1] %vm3696, %v3824
    %v3827 = vcombine.high %v3814, %v3814
    %3828 = vrot.lane.b32.xlu0 %v3827, 84
    %v3829 = vpop.permute.xlu0 %3828
    %v3830 = vrot.slane %v3829, 6
    %v3831 = vsel %vm3702, %v3830, %v3829
    %3833 = vst.msk [vmem:[#allocation3 + $0x7] sm:$0x5] %vm3707, %v3831
    %v3834 = vrot.slane %v3827, 7
    %v3835 = vrot.slane %v3834, 2
    %3836 = vrot.lane.b32.xlu0 %v3835, 34
    %v3837 = vpop.permute.xlu0 %3836
    %3839 = vst.msk [vmem:[#allocation3 + $0x9] sm:$0x1] %vm3714, %v3837
    %v3842 = vunpack.c.l.s4 1983009808
    %v3843 = vunpack.c.0.s8 %v3842
    %v3844 = vlaneseq
    %v3845 = vshrl.u32 %v3844, 7
    %v3846 = vsub.s32 %v3843, %v3845
    %v3847 = vrot.slane %v3632, %v3846
    %3848 = vrot.lane.b32.xlu0 %v3847, 112
    %v3849 = vpop.permute.xlu0 %3848
    %v3850 = vrot.slane %v3849, 6
    %v3851 = vsel %vm3727, %v3850, %v3849
    %3853 = vst.msk [vmem:[#allocation3 + $0x9] sm:$0x5] %vm3732, %v3851
    %v3854 = vrot.slane %v3847, 7
    %v3855 = vrot.slane %v3854, 2
    %3856 = vrot.lane.b32.xlu0 %v3855, 62
    %v3857 = vpop.permute.xlu0 %3856
    %v3858 = vrot.slane %v3857, 6
    %v3859 = vsel %vm3739, %v3858, %v3857
    %3861 = vst.msk [vmem:[#allocation3 + $0xb] sm:$0x5] %vm3744, %v3859
    %v3862 = vcombine.high %v3847, %v3847
    %3863 = vrot.lane.b32.xlu0 %v3862, 12
    %v3864 = vpop.permute.xlu0 %3863
    %3866 = vst.msk [vmem:[#allocation3 + $0xd] sm:$0x1] %vm3750, %v3864
    %v3867 = vrot.slane %v3862, 7
    %v3868 = vrot.slane %v3867, 2
    %3869 = vrot.lane.b32.xlu0 %v3868, 90
    %v3870 = vpop.permute.xlu0 %3869
    %v3871 = vrot.slane %v3870, 6
    %v3872 = vsel %vm3757, %v3871, %v3870
    %3874 = vst.msk [vmem:[#allocation3 + $0xd] sm:$0x5] %vm3762, %v3872
    %v3875 = vcombine.high %v3632, %v3632
    %v3877 = vunpack.c.l.s4 1983009808
    %v3878 = vunpack.c.0.s8 %v3877
    %v3879 = vlaneseq
    %v3880 = vshrl.u32 %v3879, 7
    %v3881 = vsub.s32 %v3878, %v3880
    %v3882 = vrot.slane %v3875, %v3881
    %3883 = vrot.lane.b32.xlu0 %v3882, 40
    %v3884 = vpop.permute.xlu0 %3883
    %3886 = vst.msk [vmem:[#allocation3 + $0xf] sm:$0x1] %vm3775, %v3884
    %v3887 = vld [vmem:[#allocation3] sm:$0xff]
    %v3888 = vld [vmem:[#allocation3 + $0x8] sm:$0xff]
    %v3889 = vld [vmem:[%s4] sm:$0xff]
    %v3890 = vld [vmem:[%s4 + $0x8] sm:$0xff]
    %v3891 = vld [vmem:[%s4 + $0x10] sm:$0xff]
    %v3892 = vld [vmem:[%s4 + $0x18] sm:$0xff]
    %v3893 = vld [vmem:[%s4 + $0x20] sm:$0xff]
    %v3894 = vld [vmem:[%s4 + $0x28] sm:$0xff]
    %v3895 = vld [vmem:[%s4 + $0x30] sm:$0xff]
    %v3896 = vld [vmem:[%s4 + $0x38] sm:$0xff]
    %v3897 = vld [vmem:[%s4 + $0x40] sm:$0xff]
    %v3898 = vld [vmem:[%s4 + $0x48] sm:$0xff]
    %v3899 = vld [vmem:[%s4 + $0x50] sm:$0xff]
    %v3900 = vld [vmem:[%s4 + $0x58] sm:$0xff]
    %v3901 = vld [vmem:[%s4 + $0x60] sm:$0xff]
    %v3902 = vld [vmem:[%s4 + $0x68] sm:$0xff]
    %v3903 = vld [vmem:[%s4 + $0x70] sm:$0xff]
    %v3904 = vld [vmem:[%s4 + $0x78] sm:$0xff]
    %v3905 = vld [vmem:[%s4 + $0x80] sm:$0xff]
    %v3906 = vld [vmem:[%s4 + $0x88] sm:$0xff]
    %v3907 = vld [vmem:[%s4 + $0x90] sm:$0xff]
    %v3908 = vld [vmem:[%s4 + $0x98] sm:$0xff]
    %v3909 = vld [vmem:[%s4 + $0xa0] sm:$0xff]
    %v3910 = vld [vmem:[%s4 + $0xa8] sm:$0xff]
    %v3911 = vld [vmem:[%s4 + $0xb0] sm:$0xff]
    %v3912 = vld [vmem:[%s4 + $0xb8] sm:$0xff]
    %v3913 = vld [vmem:[%s4 + $0xc0] sm:$0xff]
    %v3914 = vld [vmem:[%s4 + $0xc8] sm:$0xff]
    %v3915 = vld [vmem:[%s4 + $0xd0] sm:$0xff]
    %v3916 = vld [vmem:[%s4 + $0xd8] sm:$0xff]
    %v3917 = vld [vmem:[%s4 + $0xe0] sm:$0xff]
    %v3918 = vld [vmem:[%s4 + $0xe8] sm:$0xff]
    %v3919 = vld [vmem:[%s4 + $0xf0] sm:$0xff]
    %v3920 = vld [vmem:[%s4 + $0xf8] sm:$0xff]
    %v3921 = vld [vmem:[%s4 + $0x100] sm:$0xff]
    %v3922 = vld [vmem:[%s4 + $0x108] sm:$0xff]
    %v3923 = vld [vmem:[%s4 + $0x110] sm:$0xff]
    %v3924 = vld [vmem:[%s4 + $0x118] sm:$0xff]
    %v3925 = vld [vmem:[%s4 + $0x120] sm:$0xff]
    %v3926 = vld [vmem:[%s4 + $0x128] sm:$0xff]
    %v3927 = vld [vmem:[%s4 + $0x130] sm:$0xff]
    %v3928 = vld [vmem:[%s4 + $0x138] sm:$0xff]
    %v3929 = vld [vmem:[%s4 + $0x140] sm:$0xff]
    %v3930 = vld [vmem:[%s4 + $0x148] sm:$0xff]
    %v3931 = vld [vmem:[%s4 + $0x150] sm:$0xff]
    %v3932 = vld [vmem:[%s4 + $0x158] sm:$0xff]
    %v3933 = vld [vmem:[%s4 + $0x160] sm:$0xff]
    %v3934 = vld [vmem:[%s4 + $0x168] sm:$0xff]
    %v3935 = vld [vmem:[%s4 + $0x170] sm:$0xff]
    %v3936 = vld [vmem:[%s4 + $0x178] sm:$0xff]
    %v3937 = vld [vmem:[%s4 + $0x180] sm:$0xff]
    %v3938 = vld [vmem:[%s4 + $0x188] sm:$0xff]
    %v3939 = vld [vmem:[%s4 + $0x190] sm:$0xff]
    %v3940 = vld [vmem:[%s4 + $0x198] sm:$0xff]
    %v3941 = vld [vmem:[%s4 + $0x1a0] sm:$0xff]
    %v3942 = vld [vmem:[%s4 + $0x1a8] sm:$0xff]
    %v3943 = vld [vmem:[%s4 + $0x1b0] sm:$0xff]
    %v3944 = vld [vmem:[%s4 + $0x1b8] sm:$0xff]
    %v3945 = vld [vmem:[%s4 + $0x1c0] sm:$0xff]
    %v3946 = vld [vmem:[%s4 + $0x1c8] sm:$0xff]
    %v3947 = vld [vmem:[%s4 + $0x1d0] sm:$0xff]
    %v3948 = vld [vmem:[%s4 + $0x1d8] sm:$0xff]
    %v3949 = vld [vmem:[%s4 + $0x1e0] sm:$0xff]
    %v3950 = vld [vmem:[%s4 + $0x1e8] sm:$0xff]
    %v3951 = vld [vmem:[%s4 + $0x1f0] sm:$0xff]
    %v3952 = vld [vmem:[%s4 + $0x1f8] sm:$0xff]
    %v3953 = vld [vmem:[%s4 + $0x200] sm:$0xff]
    %v3954 = vld [vmem:[%s4 + $0x208] sm:$0xff]
    %v3955 = vld [vmem:[%s4 + $0x210] sm:$0xff]
    %v3956 = vld [vmem:[%s4 + $0x218] sm:$0xff]
    %v3957 = vld [vmem:[%s4 + $0x220] sm:$0xff]
    %v3958 = vld [vmem:[%s4 + $0x228] sm:$0xff]
    %v3959 = vld [vmem:[%s4 + $0x230] sm:$0xff]
    %v3960 = vld [vmem:[%s4 + $0x238] sm:$0xff]
    %v3961 = vld [vmem:[%s4 + $0x240] sm:$0xff]
    %v3962 = vld [vmem:[%s4 + $0x248] sm:$0xff]
    %v3963 = vld [vmem:[%s4 + $0x250] sm:$0xff]
    %v3964 = vld [vmem:[%s4 + $0x258] sm:$0xff]
    %v3965 = vld [vmem:[%s4 + $0x260] sm:$0xff]
    %v3966 = vld [vmem:[%s4 + $0x268] sm:$0xff]
    %v3967 = vld [vmem:[%s4 + $0x270] sm:$0xff]
    %v3968 = vld [vmem:[%s4 + $0x278] sm:$0xff]
    %v3969 = vld [vmem:[%s4 + $0x280] sm:$0xff]
    %v3970 = vld [vmem:[%s4 + $0x288] sm:$0xff]
    %v3971 = vld [vmem:[%s4 + $0x290] sm:$0xff]
    %v3972 = vld [vmem:[%s4 + $0x298] sm:$0xff]
    %v3973 = vld [vmem:[%s4 + $0x2a0] sm:$0xff]
    %v3974 = vld [vmem:[%s4 + $0x2a8] sm:$0xff]
    %v3975 = vld [vmem:[%s4 + $0x2b0] sm:$0xff]
    %v3976 = vld [vmem:[%s4 + $0x2b8] sm:$0xff]
    %v3977 = vld [vmem:[%s4 + $0x2c0] sm:$0xff]
    %v3978 = vld [vmem:[%s4 + $0x2c8] sm:$0xff]
    %v3979 = vld [vmem:[%s4 + $0x2d0] sm:$0xff]
    %v3980 = vld [vmem:[%s4 + $0x2d8] sm:$0xff]
    %v3981 = vld [vmem:[%s4 + $0x2e0] sm:$0xff]
    %v3982 = vld [vmem:[%s4 + $0x2e8] sm:$0xff]
    %v3983 = vld [vmem:[%s4 + $0x2f0] sm:$0xff]
    %v3984 = vld [vmem:[%s4 + $0x2f8] sm:$0xff]
    %v3985 = vld [vmem:[%s4 + $0x300] sm:$0xff]
    %v3986 = vld [vmem:[%s4 + $0x308] sm:$0xff]
    %v3987 = vld [vmem:[%s4 + $0x310] sm:$0xff]
    %v3988 = vld [vmem:[%s4 + $0x318] sm:$0xff]
    %v3989 = vld [vmem:[%s4 + $0x320] sm:$0xff]
    %v3990 = vld [vmem:[%s4 + $0x328] sm:$0xff]
    %v3991 = vld [vmem:[%s4 + $0x330] sm:$0xff]
    %v3992 = vld [vmem:[%s4 + $0x338] sm:$0xff]
    %v3993 = vld [vmem:[%s4 + $0x340] sm:$0xff]
    %v3994 = vld [vmem:[%s4 + $0x348] sm:$0xff]
    %v3995 = vld [vmem:[%s4 + $0x350] sm:$0xff]
    %v3996 = vld [vmem:[%s4 + $0x358] sm:$0xff]
    %v3997 = vld [vmem:[%s4 + $0x360] sm:$0xff]
    %v3998 = vld [vmem:[%s4 + $0x368] sm:$0xff]
    %v3999 = vld [vmem:[%s4 + $0x370] sm:$0xff]
    %v4000 = vld [vmem:[%s4 + $0x378] sm:$0xff]
    %v4001 = vld [vmem:[%s4 + $0x380] sm:$0xff]
    %v4002 = vld [vmem:[%s4 + $0x388] sm:$0xff]
    %v4003 = vld [vmem:[%s4 + $0x390] sm:$0xff]
    %v4004 = vld [vmem:[%s4 + $0x398] sm:$0xff]
    %v4005 = vld [vmem:[%s4 + $0x3a0] sm:$0xff]
    %v4006 = vld [vmem:[%s4 + $0x3a8] sm:$0xff]
    %v4007 = vld [vmem:[%s4 + $0x3b0] sm:$0xff]
    %v4008 = vld [vmem:[%s4 + $0x3b8] sm:$0xff]
    %v4009 = vld [vmem:[%s4 + $0x3c0] sm:$0xff]
    %v4010 = vld [vmem:[%s4 + $0x3c8] sm:$0xff]
    %v4011 = vld [vmem:[%s4 + $0x3d0] sm:$0xff]
    %v4012 = vld [vmem:[%s4 + $0x3d8] sm:$0xff]
    %v4013 = vld [vmem:[%s4 + $0x3e0] sm:$0xff]
    %v4014 = vld [vmem:[%s4 + $0x3e8] sm:$0xff]
    %v4015 = vld [vmem:[%s4 + $0x3f0] sm:$0x3f]
    %v4016 = vld [vmem:[%s5] sm:$0x1]
    %v4018 = vlaneseq
    %v4019 = vshrl.u32 %v4018, 7
    %v4020 = vsub.s32 0, %v4019
    %v4021 = vrot.slane %v4016, %v4020
    %v4025 = vcombine.high %v3887, %v3887
    %v4027 = vunpack.c.l.s4 1983009808
    %v4028 = vunpack.c.0.s8 %v4027
    %v4029 = vlaneseq
    %v4030 = vshrl.u32 %v4029, 7
    %v4031 = vsub.s32 %v4028, %v4030
    %v4032 = vrot.slane %v3887, %v4031
    %v4034 = vunpack.c.l.s4 1983009808
    %v4035 = vunpack.c.0.s8 %v4034
    %v4036 = vlaneseq
    %v4037 = vshrl.u32 %v4036, 7
    %v4038 = vsub.s32 %v4035, %v4037
    %v4039 = vrot.slane %v4025, %v4038
    %v4040 = vcombine.high %v4032, %v4032
    %v4041 = vcombine.high %v4039, %v4039
    %v4042 = vcombine.high %v3888, %v3888
    %v4044 = vunpack.c.l.s4 1983009808
    %v4045 = vunpack.c.0.s8 %v4044
    %v4046 = vlaneseq
    %v4047 = vshrl.u32 %v4046, 7
    %v4048 = vsub.s32 %v4045, %v4047
    %v4049 = vrot.slane %v3888, %v4048
    %v4051 = vunpack.c.l.s4 1983009808
    %v4052 = vunpack.c.0.s8 %v4051
    %v4053 = vlaneseq
    %v4054 = vshrl.u32 %v4053, 7
    %v4055 = vsub.s32 %v4052, %v4054
    %v4056 = vrot.slane %v4042, %v4055
    %v4057 = vcombine.high %v4049, %v4049
    %v4058 = vcombine.high %v4056, %v4056
    %vm4066 = vcmask 965632
    %v4067 = vsel %vm4066, %v4058, 0
    %v4070 = vsel %vm1785, %v4015, 0
    %4072 = vmatprep.subr.mxu0 0.0
    %4073 = vmatpush1.msra.mxu0 %v3904
    %4074 = vmatprep.subr.mxu0 0.0
    %4075 = vmatpush1.msra.mxu0 %v3903
    %4076 = vmatprep.subr.mxu0 0.0
    %4077 = vmatpush1.msra.mxu0 %v3902
    %4078 = vmatprep.subr.mxu0 0.0
    %4079 = vmatpush1.msra.mxu0 %v3901
    %4080 = vmatprep.subr.mxu0 0.0
    %4081 = vmatpush1.msra.mxu0 %v3900
    %4082 = vmatprep.subr.mxu0 0.0
    %4083 = vmatpush1.msra.mxu0 %v3899
    %4084 = vmatprep.subr.mxu0 0.0
    %4085 = vmatpush1.msra.mxu0 %v3898
    %4086 = vmatprep.subr.mxu0 0.0
    %4087 = vmatpush1.msra.mxu0 %v3897
    %4088 = vmatprep.subr.mxu0 0.0
    %4089 = vmatpush1.msra.mxu0 %v3896
    %4090 = vmatprep.subr.mxu0 0.0
    %4091 = vmatpush1.msra.mxu0 %v3895
    %4092 = vmatprep.subr.mxu0 0.0
    %4093 = vmatpush1.msra.mxu0 %v3894
    %4094 = vmatprep.subr.mxu0 0.0
    %4095 = vmatpush1.msra.mxu0 %v3893
    %4096 = vmatprep.subr.mxu0 0.0
    %4097 = vmatpush1.msra.mxu0 %v3892
    %4098 = vmatprep.subr.mxu0 0.0
    %4099 = vmatpush1.msra.mxu0 %v3891
    %4100 = vmatprep.subr.mxu0 0.0
    %4101 = vmatpush1.msra.mxu0 %v3890
    %4102 = vmatprep.subr.mxu0 0.0
    %4103 = vmatpush1.msra.mxu0 %v3889
    %4104 = vmatprep.subr.mxu0 0.0
    %4105 = vmatpush2.msra.mxu0 %v3920
    %4106 = vmatprep.subr.mxu0 0.0
    %4107 = vmatpush2.msra.mxu0 %v3919
    %4108 = vmatprep.subr.mxu0 0.0
    %4109 = vmatpush2.msra.mxu0 %v3918
    %4110 = vmatprep.subr.mxu0 0.0
    %4111 = vmatpush2.msra.mxu0 %v3917
    %4112 = vmatprep.subr.mxu0 0.0
    %4113 = vmatpush2.msra.mxu0 %v3916
    %4114 = vmatprep.subr.mxu0 0.0
    %4115 = vmatpush2.msra.mxu0 %v3915
    %4116 = vmatprep.subr.mxu0 0.0
    %4117 = vmatpush2.msra.mxu0 %v3914
    %4118 = vmatprep.subr.mxu0 0.0
    %4119 = vmatpush2.msra.mxu0 %v3913
    %4120 = vmatprep.subr.mxu0 0.0
    %4121 = vmatpush2.msra.mxu0 %v3912
    %4122 = vmatprep.subr.mxu0 0.0
    %4123 = vmatpush2.msra.mxu0 %v3911
    %4124 = vmatprep.subr.mxu0 0.0
    %4125 = vmatpush2.msra.mxu0 %v3910
    %4126 = vmatprep.subr.mxu0 0.0
    %4127 = vmatpush2.msra.mxu0 %v3909
    %4128 = vmatprep.subr.mxu0 0.0
    %4129 = vmatpush2.msra.mxu0 %v3908
    %4130 = vmatprep.subr.mxu0 0.0
    %4131 = vmatpush2.msra.mxu0 %v3907
    %4132 = vmatprep.subr.mxu0 0.0
    %4133 = vmatpush2.msra.mxu0 %v3906
    %4134 = vmatprep.subr.mxu0 0.0
    %4135 = vmatpush2.msra.mxu0 %v3905
    %4136 = vmatprep.mubr.f32.mxu0 %v4040
    %4137 = vmatmul.mubr.f32.gmra.mxu0 %v4032
    %v4138 = vpop.f32.mrf.mxu0
    %v4139 = vadd.f32 %v4021, %v4138
    %v4140 = vpop.f32.mrf.mxu0
    %4141 = vdwg.mxu0
    %4142 = vmatprep.subr.mxu0 0.0
    %4143 = vmatpush1.msra.mxu0 %v3936
    %4144 = vmatprep.subr.mxu0 0.0
    %4145 = vmatpush1.msra.mxu0 %v3935
    %4146 = vmatprep.subr.mxu0 0.0
    %4147 = vmatpush1.msra.mxu0 %v3934
    %4148 = vmatprep.subr.mxu0 0.0
    %4149 = vmatpush1.msra.mxu0 %v3933
    %4150 = vmatprep.subr.mxu0 0.0
    %4151 = vmatpush1.msra.mxu0 %v3932
    %4152 = vmatprep.subr.mxu0 0.0
    %4153 = vmatpush1.msra.mxu0 %v3931
    %4154 = vmatprep.subr.mxu0 0.0
    %4155 = vmatpush1.msra.mxu0 %v3930
    %4156 = vmatprep.subr.mxu0 0.0
    %4157 = vmatpush1.msra.mxu0 %v3929
    %4158 = vmatprep.subr.mxu0 0.0
    %4159 = vmatpush1.msra.mxu0 %v3928
    %4160 = vmatprep.subr.mxu0 0.0
    %4161 = vmatpush1.msra.mxu0 %v3927
    %4162 = vmatprep.subr.mxu0 0.0
    %4163 = vmatpush1.msra.mxu0 %v3926
    %4164 = vmatprep.subr.mxu0 0.0
    %4165 = vmatpush1.msra.mxu0 %v3925
    %4166 = vmatprep.subr.mxu0 0.0
    %4167 = vmatpush1.msra.mxu0 %v3924
    %4168 = vmatprep.subr.mxu0 0.0
    %4169 = vmatpush1.msra.mxu0 %v3923
    %4170 = vmatprep.subr.mxu0 0.0
    %4171 = vmatpush1.msra.mxu0 %v3922
    %4172 = vmatprep.subr.mxu0 0.0
    %4173 = vmatpush1.msra.mxu0 %v3921
    %4174 = vmatprep.subr.mxu0 0.0
    %4175 = vmatpush2.msra.mxu0 %v3952
    %4176 = vmatprep.subr.mxu0 0.0
    %4177 = vmatpush2.msra.mxu0 %v3951
    %4178 = vmatprep.subr.mxu0 0.0
    %4179 = vmatpush2.msra.mxu0 %v3950
    %4180 = vmatprep.subr.mxu0 0.0
    %4181 = vmatpush2.msra.mxu0 %v3949
    %4182 = vmatprep.subr.mxu0 0.0
    %4183 = vmatpush2.msra.mxu0 %v3948
    %4184 = vmatprep.subr.mxu0 0.0
    %4185 = vmatpush2.msra.mxu0 %v3947
    %4186 = vmatprep.subr.mxu0 0.0
    %4187 = vmatpush2.msra.mxu0 %v3946
    %4188 = vmatprep.subr.mxu0 0.0
    %4189 = vmatpush2.msra.mxu0 %v3945
    %4190 = vmatprep.subr.mxu0 0.0
    %4191 = vmatpush2.msra.mxu0 %v3944
    %4192 = vmatprep.subr.mxu0 0.0
    %4193 = vmatpush2.msra.mxu0 %v3943
    %4194 = vmatprep.subr.mxu0 0.0
    %4195 = vmatpush2.msra.mxu0 %v3942
    %4196 = vmatprep.subr.mxu0 0.0
    %4197 = vmatpush2.msra.mxu0 %v3941
    %4198 = vmatprep.subr.mxu0 0.0
    %4199 = vmatpush2.msra.mxu0 %v3940
    %4200 = vmatprep.subr.mxu0 0.0
    %4201 = vmatpush2.msra.mxu0 %v3939
    %4202 = vmatprep.subr.mxu0 0.0
    %4203 = vmatpush2.msra.mxu0 %v3938
    %4204 = vmatprep.subr.mxu0 0.0
    %4205 = vmatpush2.msra.mxu0 %v3937
    %4206 = vmatprep.mubr.f32.mxu0 %v4041
    %4207 = vmatmul.mubr.f32.gmra.mxu0 %v4039
    %v4208 = vpop.f32.mrf.mxu0
    %v4209 = vadd.f32 %v4139, %v4208
    %v4210 = vpop.f32.mrf.mxu0
    %4211 = vdwg.mxu0
    %4212 = vmatprep.subr.mxu0 0.0
    %4213 = vmatpush1.msra.mxu0 %v3968
    %4214 = vmatprep.subr.mxu0 0.0
    %4215 = vmatpush1.msra.mxu0 %v3967
    %4216 = vmatprep.subr.mxu0 0.0
    %4217 = vmatpush1.msra.mxu0 %v3966
    %4218 = vmatprep.subr.mxu0 0.0
    %4219 = vmatpush1.msra.mxu0 %v3965
    %4220 = vmatprep.subr.mxu0 0.0
    %4221 = vmatpush1.msra.mxu0 %v3964
    %4222 = vmatprep.subr.mxu0 0.0
    %4223 = vmatpush1.msra.mxu0 %v3963
    %4224 = vmatprep.subr.mxu0 0.0
    %4225 = vmatpush1.msra.mxu0 %v3962
    %4226 = vmatprep.subr.mxu0 0.0
    %4227 = vmatpush1.msra.mxu0 %v3961
    %4228 = vmatprep.subr.mxu0 0.0
    %4229 = vmatpush1.msra.mxu0 %v3960
    %4230 = vmatprep.subr.mxu0 0.0
    %4231 = vmatpush1.msra.mxu0 %v3959
    %4232 = vmatprep.subr.mxu0 0.0
    %4233 = vmatpush1.msra.mxu0 %v3958
    %4234 = vmatprep.subr.mxu0 0.0
    %4235 = vmatpush1.msra.mxu0 %v3957
    %4236 = vmatprep.subr.mxu0 0.0
    %4237 = vmatpush1.msra.mxu0 %v3956
    %4238 = vmatprep.subr.mxu0 0.0
    %4239 = vmatpush1.msra.mxu0 %v3955
    %4240 = vmatprep.subr.mxu0 0.0
    %4241 = vmatpush1.msra.mxu0 %v3954
    %4242 = vmatprep.subr.mxu0 0.0
    %4243 = vmatpush1.msra.mxu0 %v3953
    %4244 = vmatprep.subr.mxu0 0.0
    %4245 = vmatpush2.msra.mxu0 %v3984
    %4246 = vmatprep.subr.mxu0 0.0
    %4247 = vmatpush2.msra.mxu0 %v3983
    %4248 = vmatprep.subr.mxu0 0.0
    %4249 = vmatpush2.msra.mxu0 %v3982
    %4250 = vmatprep.subr.mxu0 0.0
    %4251 = vmatpush2.msra.mxu0 %v3981
    %4252 = vmatprep.subr.mxu0 0.0
    %4253 = vmatpush2.msra.mxu0 %v3980
    %4254 = vmatprep.subr.mxu0 0.0
    %4255 = vmatpush2.msra.mxu0 %v3979
    %4256 = vmatprep.subr.mxu0 0.0
    %4257 = vmatpush2.msra.mxu0 %v3978
    %4258 = vmatprep.subr.mxu0 0.0
    %4259 = vmatpush2.msra.mxu0 %v3977
    %4260 = vmatprep.subr.mxu0 0.0
    %4261 = vmatpush2.msra.mxu0 %v3976
    %4262 = vmatprep.subr.mxu0 0.0
    %4263 = vmatpush2.msra.mxu0 %v3975
    %4264 = vmatprep.subr.mxu0 0.0
    %4265 = vmatpush2.msra.mxu0 %v3974
    %4266 = vmatprep.subr.mxu0 0.0
    %4267 = vmatpush2.msra.mxu0 %v3973
    %4268 = vmatprep.subr.mxu0 0.0
    %4269 = vmatpush2.msra.mxu0 %v3972
    %4270 = vmatprep.subr.mxu0 0.0
    %4271 = vmatpush2.msra.mxu0 %v3971
    %4272 = vmatprep.subr.mxu0 0.0
    %4273 = vmatpush2.msra.mxu0 %v3970
    %4274 = vmatprep.subr.mxu0 0.0
    %4275 = vmatpush2.msra.mxu0 %v3969
    %4276 = vmatprep.mubr.f32.mxu0 %v4057
    %4277 = vmatmul.mubr.f32.gmra.mxu0 %v4049
    %v4278 = vpop.f32.mrf.mxu0
    %v4279 = vadd.f32 %v4209, %v4278
    %v4280 = vpop.f32.mrf.mxu0
    %4281 = vdwg.mxu0
    %4282 = vmatprep.subr.mxu0 0.0
    %4283 = vmatpush1.msra.mxu0 %v4000
    %4284 = vmatprep.subr.mxu0 0.0
    %4285 = vmatpush1.msra.mxu0 %v3999
    %4286 = vmatprep.subr.mxu0 0.0
    %4287 = vmatpush1.msra.mxu0 %v3998
    %4288 = vmatprep.subr.mxu0 0.0
    %4289 = vmatpush1.msra.mxu0 %v3997
    %4290 = vmatprep.subr.mxu0 0.0
    %4291 = vmatpush1.msra.mxu0 %v3996
    %4292 = vmatprep.subr.mxu0 0.0
    %4293 = vmatpush1.msra.mxu0 %v3995
    %4294 = vmatprep.subr.mxu0 0.0
    %4295 = vmatpush1.msra.mxu0 %v3994
    %4296 = vmatprep.subr.mxu0 0.0
    %4297 = vmatpush1.msra.mxu0 %v3993
    %4298 = vmatprep.subr.mxu0 0.0
    %4299 = vmatpush1.msra.mxu0 %v3992
    %4300 = vmatprep.subr.mxu0 0.0
    %4301 = vmatpush1.msra.mxu0 %v3991
    %4302 = vmatprep.subr.mxu0 0.0
    %4303 = vmatpush1.msra.mxu0 %v3990
    %4304 = vmatprep.subr.mxu0 0.0
    %4305 = vmatpush1.msra.mxu0 %v3989
    %4306 = vmatprep.subr.mxu0 0.0
    %4307 = vmatpush1.msra.mxu0 %v3988
    %4308 = vmatprep.subr.mxu0 0.0
    %4309 = vmatpush1.msra.mxu0 %v3987
    %4310 = vmatprep.subr.mxu0 0.0
    %4311 = vmatpush1.msra.mxu0 %v3986
    %4312 = vmatprep.subr.mxu0 0.0
    %4313 = vmatpush1.msra.mxu0 %v3985
    %4314 = vmatprep.subr.mxu0 0.0
    %4315 = vmatpush2.msra.mxu0 0.0
    %4316 = vmatprep.subr.mxu0 0.0
    %4317 = vmatpush2.msra.mxu0 %v4070
    %4318 = vmatprep.subr.mxu0 0.0
    %4319 = vmatpush2.msra.mxu0 %v4014
    %4320 = vmatprep.subr.mxu0 0.0
    %4321 = vmatpush2.msra.mxu0 %v4013
    %4322 = vmatprep.subr.mxu0 0.0
    %4323 = vmatpush2.msra.mxu0 %v4012
    %4324 = vmatprep.subr.mxu0 0.0
    %4325 = vmatpush2.msra.mxu0 %v4011
    %4326 = vmatprep.subr.mxu0 0.0
    %4327 = vmatpush2.msra.mxu0 %v4010
    %4328 = vmatprep.subr.mxu0 0.0
    %4329 = vmatpush2.msra.mxu0 %v4009
    %4330 = vmatprep.subr.mxu0 0.0
    %4331 = vmatpush2.msra.mxu0 %v4008
    %4332 = vmatprep.subr.mxu0 0.0
    %4333 = vmatpush2.msra.mxu0 %v4007
    %4334 = vmatprep.subr.mxu0 0.0
    %4335 = vmatpush2.msra.mxu0 %v4006
    %4336 = vmatprep.subr.mxu0 0.0
    %4337 = vmatpush2.msra.mxu0 %v4005
    %4338 = vmatprep.subr.mxu0 0.0
    %4339 = vmatpush2.msra.mxu0 %v4004
    %4340 = vmatprep.subr.mxu0 0.0
    %4341 = vmatpush2.msra.mxu0 %v4003
    %4342 = vmatprep.subr.mxu0 0.0
    %4343 = vmatpush2.msra.mxu0 %v4002
    %4344 = vmatprep.subr.mxu0 0.0
    %4345 = vmatpush2.msra.mxu0 %v4001
    %4346 = vmatprep.mubr.f32.mxu0 %v4067
    %4347 = vmatmul.mubr.f32.gmra.mxu0 %v4056
    %v4348 = vpop.f32.mrf.mxu0
    %v4349 = vadd.f32 %v4279, %v4348
    %v4350 = vpop.f32.mrf.mxu0
    %4351 = vdwg.mxu0
    %vm4352 = vcmask 74752
    %4353 = vst.msk [vmem:[#allocation7] sm:$0x3] %vm4352, %v4349
    // Predicated region
    $region30: #{cnn_forward.1} parent=1 // pred_check
      _
    $region31: #{cnn_forward.1} parent=1 // pred_check_branch
      %4355 = sbr.rel (0) target = $region33
    $region32: #{cnn_forward.1} parent=1 // pred_region
      %s4357 = ssub.s32 32, 32
      %4358 = vsyncadd [#allocation5], %s4357
      %s4360 = sshll.u32 [#allocation7], 4
      %s4361 = int_to_ptr.vmem [resolvable:$true] %s4360
      %4363 = dma.vmem_to_hbm [thread:$0]  %s4361, 32, %s6, [#allocation5]
    $region33: #{cnn_forward.1} parent=1 // pred_fallthru
      _
    // Predicated region
    $region34: #{cnn_forward.1} parent=1 // pred_check
      _
    $region35: #{cnn_forward.1} parent=1 // pred_check_branch
      %4365 = sbr.rel (0) target = $region37
    $region36: #{cnn_forward.1} parent=1 // pred_region
      %4366 = dma.done [#allocation5], 32
    $region37: #{cnn_forward.1} parent=1 // pred_fallthru
      _
    %4367 = vsyncpa [#allocation5], 1
    %4368 = vsyncpa [#allocation6], 1

</llo_original>
